<compile_context>
chip_gen: v7x
topology: tpu7x:2x2x1
jax: 0.10.0
libtpu: 0.0.40
codegen_flags: <defaults>
</compile_context>

<pallas_src>
import functools

import jax
import jax.numpy as jnp
from jax.experimental import pallas as pl
from jax.experimental.pallas import tpu as pltpu

# ----------------------------- model config ---------------------------------
HIDDEN = 32            # config.hidden_size
N_HEADS = 2
HEAD_DIM = HIDDEN // N_HEADS
FFN = 4 * HIDDEN
N_LAYERS = 2
VOCAB = 64
MAX_SEQ = 16
N_LABELS = 2           # BaseTransformer.N_LABELS
LN_EPS = 1e-12
DROPOUT_RATE = 0.1     # nn.Dropout in eval mode == identity

SMEM_SPEC = pl.BlockSpec(memory_space=pltpu.MemorySpace.SMEM)
VMEM_SPEC = pl.BlockSpec(memory_space=pltpu.MemorySpace.VMEM)


# --------------------------- fused forward kernel ----------------------------
def fused_forward_kernel(
        idx1_ref, idx2_ref,                                  # SMEM (B,) int32
        x_ref, mask_ref, labels_ref,                         # VMEM
        wqkv_ref, bqkv_ref, wo_ref, bo_ref, ln1g_ref, ln1b_ref,
        w1_ref, b1_ref, w2_ref, b2_ref, ln2g_ref, ln2b_ref,  # stacked (L, ...)
        cw1_ref, cb1_ref, cw2_ref, cb2_ref,                  # classifier head
        logits_ref, loss_ref,                                # outputs
        x_scratch):                                          # VMEM (B*S, H)
    B, _, S = mask_ref.shape
    H = HIDDEN
    L = wqkv_ref.shape[0]
    scale = 1.0 / (HEAD_DIM ** 0.5)

    def layer_norm(v, g, b):
        mu = jnp.mean(v, axis=-1, keepdims=True)
        var = jnp.mean((v - mu) ** 2, axis=-1, keepdims=True)
        return (v - mu) * jax.lax.rsqrt(var + LN_EPS) * g + b

    x = x_ref[...]                      # (B*S, H) -- VMEM resident activations
    mask = mask_ref[...]                # (B, 1, S) additive mask (0 / -1e9)

    # Encoder layers, statically unrolled (N_LAYERS=2); all weights stay in
    # VMEM for the whole forward.
    for l in range(L):
        # Fused QKV projection: one (B*S, H) @ (H, 3H) matmul.
        qkv = jnp.dot(x, wqkv_ref[l],
                      preferred_element_type=jnp.float32) + bqkv_ref[l]
        q3 = qkv[:, 0 * H:1 * H].reshape(B, S, H)
        k3 = qkv[:, 1 * H:2 * H].reshape(B, S, H)
        v3 = qkv[:, 2 * H:3 * H].reshape(B, S, H)

        # Attention: batched over B via 3-D einsums; static loop over heads.
        ctx_heads = []
        for hi in range(N_HEADS):
            sl = slice(hi * HEAD_DIM, (hi + 1) * HEAD_DIM)
            qh, kh, vh = q3[..., sl], k3[..., sl], v3[..., sl]
            s = jnp.einsum('bqd,bkd->bqk', qh, kh,
                           preferred_element_type=jnp.float32) * scale + mask
            s = s - jnp.max(s, axis=-1, keepdims=True)
            p = jnp.exp(s)
            p = p * pl.reciprocal(jnp.sum(p, axis=-1, keepdims=True),
                                  approx=True)
            ctx_heads.append(jnp.einsum('bqk,bkd->bqd', p, vh,
                                        preferred_element_type=jnp.float32))
        ctx = jnp.concatenate(ctx_heads, axis=-1).reshape(B * S, H)

        attn = jnp.dot(ctx, wo_ref[l],
                       preferred_element_type=jnp.float32) + bo_ref[l]
        h1 = layer_norm(x + attn, ln1g_ref[l], ln1b_ref[l])

        ff = jnp.dot(h1, w1_ref[l],
                     preferred_element_type=jnp.float32) + b1_ref[l]
        ff = jax.nn.gelu(ff)
        ff = jnp.dot(ff, w2_ref[l],
                     preferred_element_type=jnp.float32) + b2_ref[l]
        x = layer_norm(h1 + ff, ln2g_ref[l], ln2b_ref[l])

    # Final hidden states to VMEM scratch so pair rows can be read with
    # dynamic sublane slices (indexes_1 / indexes_2 gather).
    x_scratch[...] = x

    rows = []
    for b in range(B):                                   # B=2, static unroll
        r1 = b * S + idx1_ref[b]
        r2 = b * S + idx2_ref[b]
        e1 = x_scratch[pl.ds(r1, 1), :]                  # (1, H)
        e2 = x_scratch[pl.ds(r2, 1), :]                  # (1, H)
        rows.append(jnp.concatenate([e1, e2], axis=-1))  # (1, 2H)
    h = jnp.concatenate(rows, axis=0)                    # (B, 2H)

    # Classifier head: Linear -> ReLU -> (Dropout == identity) -> Linear.
    z = jnp.maximum(
        jnp.dot(h, cw1_ref[...],
                preferred_element_type=jnp.float32) + cb1_ref[...], 0.0)
    logits = jnp.dot(z, cw2_ref[...],
                     preferred_element_type=jnp.float32) + cb2_ref[...]  # (B,2)
    logits_ref[...] = logits

    # CrossEntropyLoss(logits.float(), labels), mean reduction.
    m = jnp.max(logits, axis=-1, keepdims=True)
    lse = m + jnp.log(jnp.sum(jnp.exp(logits - m), axis=-1, keepdims=True))
    logp = logits - lse                                           # (B, L)
    onehot = (jax.lax.broadcasted_iota(jnp.int32, logits.shape, 1)
              == labels_ref[...]).astype(jnp.float32)
    nll = -jnp.sum(onehot * logp, axis=-1, keepdims=True)         # (B, 1)
    loss_ref[...] = jnp.mean(nll, axis=0, keepdims=True)          # (1, 1)


# ------------------------------ parameter init -------------------------------
def init_params(key):
    def normal(k, shape, scale=0.02):
        return (scale * jax.random.normal(k, shape)).astype(jnp.float32)

    keys = jax.random.split(key, 8)
    enc = {
        "wqkv": normal(keys[0], (N_LAYERS, HIDDEN, 3 * HIDDEN)),
        "bqkv": jnp.zeros((N_LAYERS, 1, 3 * HIDDEN), jnp.float32),
        "wo": normal(keys[1], (N_LAYERS, HIDDEN, HIDDEN)),
        "bo": jnp.zeros((N_LAYERS, 1, HIDDEN), jnp.float32),
        "ln1_g": jnp.ones((N_LAYERS, 1, HIDDEN), jnp.float32),
        "ln1_b": jnp.zeros((N_LAYERS, 1, HIDDEN), jnp.float32),
        "w1": normal(keys[2], (N_LAYERS, HIDDEN, FFN)),
        "b1": jnp.zeros((N_LAYERS, 1, FFN), jnp.float32),
        "w2": normal(keys[3], (N_LAYERS, FFN, HIDDEN)),
        "b2": jnp.zeros((N_LAYERS, 1, HIDDEN), jnp.float32),
        "ln2_g": jnp.ones((N_LAYERS, 1, HIDDEN), jnp.float32),
        "ln2_b": jnp.zeros((N_LAYERS, 1, HIDDEN), jnp.float32),
    }
    return {
        "word_emb": normal(keys[4], (VOCAB, HIDDEN)),
        "pos_emb": normal(keys[5], (MAX_SEQ, HIDDEN)),
        "enc": enc,
        "cls": {
            "w1": normal(keys[6], (2 * HIDDEN, HIDDEN)),
            "b1": jnp.zeros((1, HIDDEN), jnp.float32),
            "w2": normal(keys[7], (HIDDEN, N_LABELS)),
            "b2": jnp.zeros((1, N_LABELS), jnp.float32),
        },
    }


# -------------------------------- forward ------------------------------------
def base_transformer_forward(params, tokens, attention_mask,
                             labels=None, indexes_1=None, indexes_2=None):
    B, S = tokens.shape
    # Embedding lookup (glue): word + position embeddings, pre-flattened to
    # (B*S, H) so the kernel's linear layers are single batched matmuls.
    x = params["word_emb"][tokens] + params["pos_emb"][:S][None, :, :]
    x_flat = x.reshape(B * S, HIDDEN).astype(jnp.float32)
    # Additive attention mask, (B, 1, S): 0 where attended, -1e9 where padded.
    add_mask = (1.0 - attention_mask.astype(jnp.float32))[:, None, :] * (-1e9)

    if labels is None:
        labels_arr = jnp.zeros((B, 1), jnp.int32)
    else:
        labels_arr = labels.astype(jnp.int32).reshape(B, 1)

    enc, cls = params["enc"], params["cls"]
    args = (indexes_1.astype(jnp.int32), indexes_2.astype(jnp.int32),
            x_flat, add_mask, labels_arr,
            enc["wqkv"], enc["bqkv"], enc["wo"], enc["bo"],
            enc["ln1_g"], enc["ln1_b"],
            enc["w1"], enc["b1"], enc["w2"], enc["b2"],
            enc["ln2_g"], enc["ln2_b"],
            cls["w1"], cls["b1"], cls["w2"], cls["b2"])

    logits, loss = pl.pallas_call(
        fused_forward_kernel,
        out_shape=(jax.ShapeDtypeStruct((B, N_LABELS), jnp.float32),
                   jax.ShapeDtypeStruct((1, 1), jnp.float32)),
        in_specs=[SMEM_SPEC, SMEM_SPEC] + [VMEM_SPEC] * (len(args) - 2),
        out_specs=(VMEM_SPEC, VMEM_SPEC),
        scratch_shapes=[pltpu.VMEM((B * S, HIDDEN), jnp.float32)],
    )(*args)

    if labels is not None:
        return loss, logits
    return (logits,)


# --------------------------------- main --------------------------------------
if __name__ == "__main__":
    key = jax.random.PRNGKey(0)
    pkey, tkey = jax.random.split(key)
    params = init_params(pkey)

    B, S = 2, 8
    tokens = jax.random.randint(tkey, (B, S), 0, VOCAB, dtype=jnp.int32)
    attention_mask = jnp.array([[1, 1, 1, 1, 1, 1, 1, 1],
                                [1, 1, 1, 1, 1, 1, 0, 0]], dtype=jnp.int32)
    labels = jnp.array([0, 1], dtype=jnp.int32)
    indexes_1 = jnp.array([1, 2], dtype=jnp.int32)
    indexes_2 = jnp.array([3, 5], dtype=jnp.int32)

    fwd = jax.jit(functools.partial(base_transformer_forward, params))
    loss, logits = fwd(tokens, attention_mask, labels, indexes_1, indexes_2)
    jax.block_until_ready((loss, logits))

    assert logits.shape == (B, N_LABELS)
    assert loss.shape == (1, 1)
    print("KERNEL_OK")
</pallas_src>

<mosaic_0001>
module attributes {stable_mosaic.version = 11 : i64} {
  func.func @fused_forward_kernel(%arg0: memref<2xi32, #tpu.memory_space<smem>>, %arg1: memref<2xi32, #tpu.memory_space<smem>>, %arg2: memref<16x32xf32, #tpu.memory_space<vmem>>, %arg3: memref<2x1x8xf32, #tpu.memory_space<vmem>>, %arg4: memref<2x1xi32, #tpu.memory_space<vmem>>, %arg5: memref<2x32x96xf32, #tpu.memory_space<vmem>>, %arg6: memref<2x1x96xf32, #tpu.memory_space<vmem>>, %arg7: memref<2x32x32xf32, #tpu.memory_space<vmem>>, %arg8: memref<2x1x32xf32, #tpu.memory_space<vmem>>, %arg9: memref<2x1x32xf32, #tpu.memory_space<vmem>>, %arg10: memref<2x1x32xf32, #tpu.memory_space<vmem>>, %arg11: memref<2x32x128xf32, #tpu.memory_space<vmem>>, %arg12: memref<2x1x128xf32, #tpu.memory_space<vmem>>, %arg13: memref<2x128x32xf32, #tpu.memory_space<vmem>>, %arg14: memref<2x1x32xf32, #tpu.memory_space<vmem>>, %arg15: memref<2x1x32xf32, #tpu.memory_space<vmem>>, %arg16: memref<2x1x32xf32, #tpu.memory_space<vmem>>, %arg17: memref<64x32xf32, #tpu.memory_space<vmem>>, %arg18: memref<1x32xf32, #tpu.memory_space<vmem>>, %arg19: memref<32x2xf32, #tpu.memory_space<vmem>>, %arg20: memref<1x2xf32, #tpu.memory_space<vmem>>, %arg21: memref<2x2xf32, #tpu.memory_space<vmem>>, %arg22: memref<1x1xf32, #tpu.memory_space<vmem>>, %arg23: memref<16x32xf32, #tpu.memory_space<vmem>>) attributes {dimension_semantics = [], scalar_prefetch = 0 : i64, scratch_operands = 1 : i64, tpu.core_type = #tpu.core_type<tc>} {
    %c0 = arith.constant 0 : index
    %c0_0 = arith.constant 0 : index
    %0 = vector.load %arg2[%c0, %c0_0] : memref<16x32xf32, #tpu.memory_space<vmem>>, vector<16x32xf32>
    %c0_1 = arith.constant 0 : index
    %c0_2 = arith.constant 0 : index
    %c0_3 = arith.constant 0 : index
    %1 = vector.load %arg3[%c0_1, %c0_2, %c0_3] : memref<2x1x8xf32, #tpu.memory_space<vmem>>, vector<2x1x8xf32>
    %c0_4 = arith.constant 0 : index
    %c0_5 = arith.constant 0 : index
    %c0_6 = arith.constant 0 : index
    %2 = vector.load %arg5[%c0_4, %c0_5, %c0_6] : memref<2x32x96xf32, #tpu.memory_space<vmem>>, vector<1x32x96xf32>
    %3 = vector.shape_cast %2 : vector<1x32x96xf32> to vector<32x96xf32>
    %cst = arith.constant dense<0.000000e+00> : vector<16x96xf32>
    %4 = tpu.matmul %0, %3, %cst {dimension_numbers = #tpu.dot_dimension_numbers<[1], [0], [0], [1], [0, 0, 1, 1], [], []>} : vector<16x32xf32>, vector<32x96xf32>, vector<16x96xf32> -> vector<16x96xf32>
    %c0_7 = arith.constant 0 : index
    %c0_8 = arith.constant 0 : index
    %c0_9 = arith.constant 0 : index
    %5 = vector.load %arg6[%c0_7, %c0_8, %c0_9] : memref<2x1x96xf32, #tpu.memory_space<vmem>>, vector<1x1x96xf32>
    %6 = vector.shape_cast %5 : vector<1x1x96xf32> to vector<1x96xf32>
    %7 = vector.broadcast %6 : vector<1x96xf32> to vector<16x96xf32>
    %8 = arith.addf %4, %7 : vector<16x96xf32>
    %9 = vector.extract_strided_slice %8 {offsets = [0, 0], sizes = [16, 32], strides = [1, 1]} : vector<16x96xf32> to vector<16x32xf32>
    %10 = vector.shape_cast %9 : vector<16x32xf32> to vector<2x8x32xf32>
    %11 = vector.extract_strided_slice %8 {offsets = [0, 32], sizes = [16, 32], strides = [1, 1]} : vector<16x96xf32> to vector<16x32xf32>
    %12 = vector.shape_cast %11 : vector<16x32xf32> to vector<2x8x32xf32>
    %13 = vector.extract_strided_slice %8 {offsets = [0, 64], sizes = [16, 32], strides = [1, 1]} : vector<16x96xf32> to vector<16x32xf32>
    %14 = vector.shape_cast %13 : vector<16x32xf32> to vector<2x8x32xf32>
    %15 = vector.extract_strided_slice %10 {offsets = [0, 0, 0], sizes = [2, 8, 16], strides = [1, 1, 1]} : vector<2x8x32xf32> to vector<2x8x16xf32>
    %16 = vector.extract_strided_slice %12 {offsets = [0, 0, 0], sizes = [2, 8, 16], strides = [1, 1, 1]} : vector<2x8x32xf32> to vector<2x8x16xf32>
    %17 = vector.extract_strided_slice %14 {offsets = [0, 0, 0], sizes = [2, 8, 16], strides = [1, 1, 1]} : vector<2x8x32xf32> to vector<2x8x16xf32>
    "tpu.trace_start"() <{level = 10 : i32, message = "bqd,bkd->bqk"}> : () -> ()
    %cst_10 = arith.constant dense<0.000000e+00> : vector<2x8x8xf32>
    %18 = tpu.matmul %15, %16, %cst_10 {dimension_numbers = #tpu.dot_dimension_numbers<[2], [2], [1], [1], [0, 0, 0, 1, 1, 1], [0], [0]>} : vector<2x8x16xf32>, vector<2x8x16xf32>, vector<2x8x8xf32> -> vector<2x8x8xf32>
    "tpu.trace_stop"() : () -> ()
    %cst_11 = arith.constant 2.500000e-01 : f32
    %19 = vector.broadcast %cst_11 : f32 to vector<2x8x8xf32>
    %20 = arith.mulf %18, %19 : vector<2x8x8xf32>
    %21 = vector.broadcast %1 : vector<2x1x8xf32> to vector<2x8x8xf32>
    %22 = arith.addf %20, %21 : vector<2x8x8xf32>
    %cst_12 = arith.constant dense<0xFF800000> : vector<2x8xf32>
    %23 = vector.multi_reduction <maximumf>, %22, %cst_12 [2] : vector<2x8x8xf32> to vector<2x8xf32>
    %24 = vector.shape_cast %23 : vector<2x8xf32> to vector<2x8x1xf32>
    %25 = vector.broadcast %24 : vector<2x8x1xf32> to vector<2x8x8xf32>
    %26 = arith.subf %22, %25 : vector<2x8x8xf32>
    %27 = math.exp %26 : vector<2x8x8xf32>
    %cst_13 = arith.constant dense<0.000000e+00> : vector<2x8xf32>
    %28 = vector.multi_reduction <add>, %27, %cst_13 [2] : vector<2x8x8xf32> to vector<2x8xf32>
    %29 = vector.shape_cast %28 : vector<2x8xf32> to vector<2x8x1xf32>
    %30 = tpu.reciprocal %29 {approx = true} : vector<2x8x1xf32> -> vector<2x8x1xf32>
    %31 = vector.broadcast %30 : vector<2x8x1xf32> to vector<2x8x8xf32>
    %32 = arith.mulf %27, %31 : vector<2x8x8xf32>
    "tpu.trace_start"() <{level = 10 : i32, message = "bqk,bkd->bqd"}> : () -> ()
    %cst_14 = arith.constant dense<0.000000e+00> : vector<2x8x16xf32>
    %33 = tpu.matmul %32, %17, %cst_14 {dimension_numbers = #tpu.dot_dimension_numbers<[2], [1], [1], [2], [0, 0, 0, 1, 1, 2], [0], [0]>} : vector<2x8x8xf32>, vector<2x8x16xf32>, vector<2x8x16xf32> -> vector<2x8x16xf32>
    "tpu.trace_stop"() : () -> ()
    %34 = vector.extract_strided_slice %10 {offsets = [0, 0, 16], sizes = [2, 8, 16], strides = [1, 1, 1]} : vector<2x8x32xf32> to vector<2x8x16xf32>
    %35 = vector.extract_strided_slice %12 {offsets = [0, 0, 16], sizes = [2, 8, 16], strides = [1, 1, 1]} : vector<2x8x32xf32> to vector<2x8x16xf32>
    %36 = vector.extract_strided_slice %14 {offsets = [0, 0, 16], sizes = [2, 8, 16], strides = [1, 1, 1]} : vector<2x8x32xf32> to vector<2x8x16xf32>
    "tpu.trace_start"() <{level = 10 : i32, message = "bqd,bkd->bqk"}> : () -> ()
    %cst_15 = arith.constant dense<0.000000e+00> : vector<2x8x8xf32>
    %37 = tpu.matmul %34, %35, %cst_15 {dimension_numbers = #tpu.dot_dimension_numbers<[2], [2], [1], [1], [0, 0, 0, 1, 1, 1], [0], [0]>} : vector<2x8x16xf32>, vector<2x8x16xf32>, vector<2x8x8xf32> -> vector<2x8x8xf32>
    "tpu.trace_stop"() : () -> ()
    %cst_16 = arith.constant 2.500000e-01 : f32
    %38 = vector.broadcast %cst_16 : f32 to vector<2x8x8xf32>
    %39 = arith.mulf %37, %38 : vector<2x8x8xf32>
    %40 = vector.broadcast %1 : vector<2x1x8xf32> to vector<2x8x8xf32>
    %41 = arith.addf %39, %40 : vector<2x8x8xf32>
    %cst_17 = arith.constant dense<0xFF800000> : vector<2x8xf32>
    %42 = vector.multi_reduction <maximumf>, %41, %cst_17 [2] : vector<2x8x8xf32> to vector<2x8xf32>
    %43 = vector.shape_cast %42 : vector<2x8xf32> to vector<2x8x1xf32>
    %44 = vector.broadcast %43 : vector<2x8x1xf32> to vector<2x8x8xf32>
    %45 = arith.subf %41, %44 : vector<2x8x8xf32>
    %46 = math.exp %45 : vector<2x8x8xf32>
    %cst_18 = arith.constant dense<0.000000e+00> : vector<2x8xf32>
    %47 = vector.multi_reduction <add>, %46, %cst_18 [2] : vector<2x8x8xf32> to vector<2x8xf32>
    %48 = vector.shape_cast %47 : vector<2x8xf32> to vector<2x8x1xf32>
    %49 = tpu.reciprocal %48 {approx = true} : vector<2x8x1xf32> -> vector<2x8x1xf32>
    %50 = vector.broadcast %49 : vector<2x8x1xf32> to vector<2x8x8xf32>
    %51 = arith.mulf %46, %50 : vector<2x8x8xf32>
    "tpu.trace_start"() <{level = 10 : i32, message = "bqk,bkd->bqd"}> : () -> ()
    %cst_19 = arith.constant dense<0.000000e+00> : vector<2x8x16xf32>
    %52 = tpu.matmul %51, %36, %cst_19 {dimension_numbers = #tpu.dot_dimension_numbers<[2], [1], [1], [2], [0, 0, 0, 1, 1, 2], [0], [0]>} : vector<2x8x8xf32>, vector<2x8x16xf32>, vector<2x8x16xf32> -> vector<2x8x16xf32>
    "tpu.trace_stop"() : () -> ()
    %53 = tpu.concatenate %33, %52 in 2 : vector<2x8x16xf32>, vector<2x8x16xf32> -> vector<2x8x32xf32>
    %54 = vector.shape_cast %53 : vector<2x8x32xf32> to vector<16x32xf32>
    %c0_20 = arith.constant 0 : index
    %c0_21 = arith.constant 0 : index
    %c0_22 = arith.constant 0 : index
    %55 = vector.load %arg7[%c0_20, %c0_21, %c0_22] : memref<2x32x32xf32, #tpu.memory_space<vmem>>, vector<1x32x32xf32>
    %56 = vector.shape_cast %55 : vector<1x32x32xf32> to vector<32x32xf32>
    %cst_23 = arith.constant dense<0.000000e+00> : vector<16x32xf32>
    %57 = tpu.matmul %54, %56, %cst_23 {dimension_numbers = #tpu.dot_dimension_numbers<[1], [0], [0], [1], [0, 0, 1, 1], [], []>} : vector<16x32xf32>, vector<32x32xf32>, vector<16x32xf32> -> vector<16x32xf32>
    %c0_24 = arith.constant 0 : index
    %c0_25 = arith.constant 0 : index
    %c0_26 = arith.constant 0 : index
    %58 = vector.load %arg8[%c0_24, %c0_25, %c0_26] : memref<2x1x32xf32, #tpu.memory_space<vmem>>, vector<1x1x32xf32>
    %59 = vector.shape_cast %58 : vector<1x1x32xf32> to vector<1x32xf32>
    %60 = vector.broadcast %59 : vector<1x32xf32> to vector<16x32xf32>
    %61 = arith.addf %57, %60 : vector<16x32xf32>
    %62 = arith.addf %0, %61 : vector<16x32xf32>
    %c0_27 = arith.constant 0 : index
    %c0_28 = arith.constant 0 : index
    %c0_29 = arith.constant 0 : index
    %63 = vector.load %arg9[%c0_27, %c0_28, %c0_29] : memref<2x1x32xf32, #tpu.memory_space<vmem>>, vector<1x1x32xf32>
    %64 = vector.shape_cast %63 : vector<1x1x32xf32> to vector<1x32xf32>
    %c0_30 = arith.constant 0 : index
    %c0_31 = arith.constant 0 : index
    %c0_32 = arith.constant 0 : index
    %65 = vector.load %arg10[%c0_30, %c0_31, %c0_32] : memref<2x1x32xf32, #tpu.memory_space<vmem>>, vector<1x1x32xf32>
    %66 = vector.shape_cast %65 : vector<1x1x32xf32> to vector<1x32xf32>
    %cst_33 = arith.constant dense<0.000000e+00> : vector<16xf32>
    %67 = vector.multi_reduction <add>, %62, %cst_33 [1] : vector<16x32xf32> to vector<16xf32>
    %68 = vector.shape_cast %67 : vector<16xf32> to vector<16x1xf32>
    %cst_34 = arith.constant 3.200000e+01 : f32
    %69 = vector.broadcast %cst_34 : f32 to vector<16x1xf32>
    %70 = arith.divf %68, %69 : vector<16x1xf32>
    %71 = vector.broadcast %70 : vector<16x1xf32> to vector<16x32xf32>
    %72 = arith.subf %62, %71 : vector<16x32xf32>
    %73 = arith.mulf %72, %72 : vector<16x32xf32>
    %cst_35 = arith.constant dense<0.000000e+00> : vector<16xf32>
    %74 = vector.multi_reduction <add>, %73, %cst_35 [1] : vector<16x32xf32> to vector<16xf32>
    %75 = vector.shape_cast %74 : vector<16xf32> to vector<16x1xf32>
    %cst_36 = arith.constant 3.200000e+01 : f32
    %76 = vector.broadcast %cst_36 : f32 to vector<16x1xf32>
    %77 = arith.divf %75, %76 : vector<16x1xf32>
    %78 = vector.broadcast %70 : vector<16x1xf32> to vector<16x32xf32>
    %79 = arith.subf %62, %78 : vector<16x32xf32>
    %cst_37 = arith.constant 9.99999996E-13 : f32
    %80 = vector.broadcast %cst_37 : f32 to vector<16x1xf32>
    %81 = arith.addf %77, %80 : vector<16x1xf32>
    %82 = math.rsqrt %81 : vector<16x1xf32>
    %83 = vector.broadcast %82 : vector<16x1xf32> to vector<16x32xf32>
    %84 = arith.mulf %79, %83 : vector<16x32xf32>
    %85 = vector.broadcast %64 : vector<1x32xf32> to vector<16x32xf32>
    %86 = arith.mulf %84, %85 : vector<16x32xf32>
    %87 = vector.broadcast %66 : vector<1x32xf32> to vector<16x32xf32>
    %88 = arith.addf %86, %87 : vector<16x32xf32>
    %c0_38 = arith.constant 0 : index
    %c0_39 = arith.constant 0 : index
    %c0_40 = arith.constant 0 : index
    %89 = vector.load %arg11[%c0_38, %c0_39, %c0_40] : memref<2x32x128xf32, #tpu.memory_space<vmem>>, vector<1x32x128xf32>
    %90 = vector.shape_cast %89 : vector<1x32x128xf32> to vector<32x128xf32>
    %cst_41 = arith.constant dense<0.000000e+00> : vector<16x128xf32>
    %91 = tpu.matmul %88, %90, %cst_41 {dimension_numbers = #tpu.dot_dimension_numbers<[1], [0], [0], [1], [0, 0, 1, 1], [], []>} : vector<16x32xf32>, vector<32x128xf32>, vector<16x128xf32> -> vector<16x128xf32>
    %c0_42 = arith.constant 0 : index
    %c0_43 = arith.constant 0 : index
    %c0_44 = arith.constant 0 : index
    %92 = vector.load %arg12[%c0_42, %c0_43, %c0_44] : memref<2x1x128xf32, #tpu.memory_space<vmem>>, vector<1x1x128xf32>
    %93 = vector.shape_cast %92 : vector<1x1x128xf32> to vector<1x128xf32>
    %94 = vector.broadcast %93 : vector<1x128xf32> to vector<16x128xf32>
    %95 = arith.addf %91, %94 : vector<16x128xf32>
    %96 = arith.mulf %95, %95 : vector<16x128xf32>
    %97 = arith.mulf %95, %96 : vector<16x128xf32>
    %cst_45 = arith.constant 4.471500e-02 : f32
    %98 = vector.broadcast %cst_45 : f32 to vector<16x128xf32>
    %99 = arith.mulf %98, %97 : vector<16x128xf32>
    %100 = arith.addf %95, %99 : vector<16x128xf32>
    %cst_46 = arith.constant 0.797884583 : f32
    %101 = vector.broadcast %cst_46 : f32 to vector<16x128xf32>
    %102 = arith.mulf %101, %100 : vector<16x128xf32>
    %103 = math.tanh %102 : vector<16x128xf32>
    %cst_47 = arith.constant 1.000000e+00 : f32
    %104 = vector.broadcast %cst_47 : f32 to vector<16x128xf32>
    %105 = arith.addf %104, %103 : vector<16x128xf32>
    %cst_48 = arith.constant 5.000000e-01 : f32
    %106 = vector.broadcast %cst_48 : f32 to vector<16x128xf32>
    %107 = arith.mulf %106, %105 : vector<16x128xf32>
    %108 = arith.mulf %95, %107 : vector<16x128xf32>
    %c0_49 = arith.constant 0 : index
    %c0_50 = arith.constant 0 : index
    %c0_51 = arith.constant 0 : index
    %109 = vector.load %arg13[%c0_49, %c0_50, %c0_51] : memref<2x128x32xf32, #tpu.memory_space<vmem>>, vector<1x128x32xf32>
    %110 = vector.shape_cast %109 : vector<1x128x32xf32> to vector<128x32xf32>
    %cst_52 = arith.constant dense<0.000000e+00> : vector<16x32xf32>
    %111 = tpu.matmul %108, %110, %cst_52 {dimension_numbers = #tpu.dot_dimension_numbers<[1], [0], [0], [1], [0, 0, 1, 1], [], []>} : vector<16x128xf32>, vector<128x32xf32>, vector<16x32xf32> -> vector<16x32xf32>
    %c0_53 = arith.constant 0 : index
    %c0_54 = arith.constant 0 : index
    %c0_55 = arith.constant 0 : index
    %112 = vector.load %arg14[%c0_53, %c0_54, %c0_55] : memref<2x1x32xf32, #tpu.memory_space<vmem>>, vector<1x1x32xf32>
    %113 = vector.shape_cast %112 : vector<1x1x32xf32> to vector<1x32xf32>
    %114 = vector.broadcast %113 : vector<1x32xf32> to vector<16x32xf32>
    %115 = arith.addf %111, %114 : vector<16x32xf32>
    %116 = arith.addf %88, %115 : vector<16x32xf32>
    %c0_56 = arith.constant 0 : index
    %c0_57 = arith.constant 0 : index
    %c0_58 = arith.constant 0 : index
    %117 = vector.load %arg15[%c0_56, %c0_57, %c0_58] : memref<2x1x32xf32, #tpu.memory_space<vmem>>, vector<1x1x32xf32>
    %118 = vector.shape_cast %117 : vector<1x1x32xf32> to vector<1x32xf32>
    %c0_59 = arith.constant 0 : index
    %c0_60 = arith.constant 0 : index
    %c0_61 = arith.constant 0 : index
    %119 = vector.load %arg16[%c0_59, %c0_60, %c0_61] : memref<2x1x32xf32, #tpu.memory_space<vmem>>, vector<1x1x32xf32>
    %120 = vector.shape_cast %119 : vector<1x1x32xf32> to vector<1x32xf32>
    %cst_62 = arith.constant dense<0.000000e+00> : vector<16xf32>
    %121 = vector.multi_reduction <add>, %116, %cst_62 [1] : vector<16x32xf32> to vector<16xf32>
    %122 = vector.shape_cast %121 : vector<16xf32> to vector<16x1xf32>
    %cst_63 = arith.constant 3.200000e+01 : f32
    %123 = vector.broadcast %cst_63 : f32 to vector<16x1xf32>
    %124 = arith.divf %122, %123 : vector<16x1xf32>
    %125 = vector.broadcast %124 : vector<16x1xf32> to vector<16x32xf32>
    %126 = arith.subf %116, %125 : vector<16x32xf32>
    %127 = arith.mulf %126, %126 : vector<16x32xf32>
    %cst_64 = arith.constant dense<0.000000e+00> : vector<16xf32>
    %128 = vector.multi_reduction <add>, %127, %cst_64 [1] : vector<16x32xf32> to vector<16xf32>
    %129 = vector.shape_cast %128 : vector<16xf32> to vector<16x1xf32>
    %cst_65 = arith.constant 3.200000e+01 : f32
    %130 = vector.broadcast %cst_65 : f32 to vector<16x1xf32>
    %131 = arith.divf %129, %130 : vector<16x1xf32>
    %132 = vector.broadcast %124 : vector<16x1xf32> to vector<16x32xf32>
    %133 = arith.subf %116, %132 : vector<16x32xf32>
    %cst_66 = arith.constant 9.99999996E-13 : f32
    %134 = vector.broadcast %cst_66 : f32 to vector<16x1xf32>
    %135 = arith.addf %131, %134 : vector<16x1xf32>
    %136 = math.rsqrt %135 : vector<16x1xf32>
    %137 = vector.broadcast %136 : vector<16x1xf32> to vector<16x32xf32>
    %138 = arith.mulf %133, %137 : vector<16x32xf32>
    %139 = vector.broadcast %118 : vector<1x32xf32> to vector<16x32xf32>
    %140 = arith.mulf %138, %139 : vector<16x32xf32>
    %141 = vector.broadcast %120 : vector<1x32xf32> to vector<16x32xf32>
    %142 = arith.addf %140, %141 : vector<16x32xf32>
    %c1 = arith.constant 1 : index
    %c0_67 = arith.constant 0 : index
    %c0_68 = arith.constant 0 : index
    %143 = vector.load %arg5[%c1, %c0_67, %c0_68] : memref<2x32x96xf32, #tpu.memory_space<vmem>>, vector<1x32x96xf32>
    %144 = vector.shape_cast %143 : vector<1x32x96xf32> to vector<32x96xf32>
    %cst_69 = arith.constant dense<0.000000e+00> : vector<16x96xf32>
    %145 = tpu.matmul %142, %144, %cst_69 {dimension_numbers = #tpu.dot_dimension_numbers<[1], [0], [0], [1], [0, 0, 1, 1], [], []>} : vector<16x32xf32>, vector<32x96xf32>, vector<16x96xf32> -> vector<16x96xf32>
    %c1_70 = arith.constant 1 : index
    %c0_71 = arith.constant 0 : index
    %c0_72 = arith.constant 0 : index
    %146 = vector.load %arg6[%c1_70, %c0_71, %c0_72] : memref<2x1x96xf32, #tpu.memory_space<vmem>>, vector<1x1x96xf32>
    %147 = vector.shape_cast %146 : vector<1x1x96xf32> to vector<1x96xf32>
    %148 = vector.broadcast %147 : vector<1x96xf32> to vector<16x96xf32>
    %149 = arith.addf %145, %148 : vector<16x96xf32>
    %150 = vector.extract_strided_slice %149 {offsets = [0, 0], sizes = [16, 32], strides = [1, 1]} : vector<16x96xf32> to vector<16x32xf32>
    %151 = vector.shape_cast %150 : vector<16x32xf32> to vector<2x8x32xf32>
    %152 = vector.extract_strided_slice %149 {offsets = [0, 32], sizes = [16, 32], strides = [1, 1]} : vector<16x96xf32> to vector<16x32xf32>
    %153 = vector.shape_cast %152 : vector<16x32xf32> to vector<2x8x32xf32>
    %154 = vector.extract_strided_slice %149 {offsets = [0, 64], sizes = [16, 32], strides = [1, 1]} : vector<16x96xf32> to vector<16x32xf32>
    %155 = vector.shape_cast %154 : vector<16x32xf32> to vector<2x8x32xf32>
    %156 = vector.extract_strided_slice %151 {offsets = [0, 0, 0], sizes = [2, 8, 16], strides = [1, 1, 1]} : vector<2x8x32xf32> to vector<2x8x16xf32>
    %157 = vector.extract_strided_slice %153 {offsets = [0, 0, 0], sizes = [2, 8, 16], strides = [1, 1, 1]} : vector<2x8x32xf32> to vector<2x8x16xf32>
    %158 = vector.extract_strided_slice %155 {offsets = [0, 0, 0], sizes = [2, 8, 16], strides = [1, 1, 1]} : vector<2x8x32xf32> to vector<2x8x16xf32>
    "tpu.trace_start"() <{level = 10 : i32, message = "bqd,bkd->bqk"}> : () -> ()
    %cst_73 = arith.constant dense<0.000000e+00> : vector<2x8x8xf32>
    %159 = tpu.matmul %156, %157, %cst_73 {dimension_numbers = #tpu.dot_dimension_numbers<[2], [2], [1], [1], [0, 0, 0, 1, 1, 1], [0], [0]>} : vector<2x8x16xf32>, vector<2x8x16xf32>, vector<2x8x8xf32> -> vector<2x8x8xf32>
    "tpu.trace_stop"() : () -> ()
    %cst_74 = arith.constant 2.500000e-01 : f32
    %160 = vector.broadcast %cst_74 : f32 to vector<2x8x8xf32>
    %161 = arith.mulf %159, %160 : vector<2x8x8xf32>
    %162 = vector.broadcast %1 : vector<2x1x8xf32> to vector<2x8x8xf32>
    %163 = arith.addf %161, %162 : vector<2x8x8xf32>
    %cst_75 = arith.constant dense<0xFF800000> : vector<2x8xf32>
    %164 = vector.multi_reduction <maximumf>, %163, %cst_75 [2] : vector<2x8x8xf32> to vector<2x8xf32>
    %165 = vector.shape_cast %164 : vector<2x8xf32> to vector<2x8x1xf32>
    %166 = vector.broadcast %165 : vector<2x8x1xf32> to vector<2x8x8xf32>
    %167 = arith.subf %163, %166 : vector<2x8x8xf32>
    %168 = math.exp %167 : vector<2x8x8xf32>
    %cst_76 = arith.constant dense<0.000000e+00> : vector<2x8xf32>
    %169 = vector.multi_reduction <add>, %168, %cst_76 [2] : vector<2x8x8xf32> to vector<2x8xf32>
    %170 = vector.shape_cast %169 : vector<2x8xf32> to vector<2x8x1xf32>
    %171 = tpu.reciprocal %170 {approx = true} : vector<2x8x1xf32> -> vector<2x8x1xf32>
    %172 = vector.broadcast %171 : vector<2x8x1xf32> to vector<2x8x8xf32>
    %173 = arith.mulf %168, %172 : vector<2x8x8xf32>
    "tpu.trace_start"() <{level = 10 : i32, message = "bqk,bkd->bqd"}> : () -> ()
    %cst_77 = arith.constant dense<0.000000e+00> : vector<2x8x16xf32>
    %174 = tpu.matmul %173, %158, %cst_77 {dimension_numbers = #tpu.dot_dimension_numbers<[2], [1], [1], [2], [0, 0, 0, 1, 1, 2], [0], [0]>} : vector<2x8x8xf32>, vector<2x8x16xf32>, vector<2x8x16xf32> -> vector<2x8x16xf32>
    "tpu.trace_stop"() : () -> ()
    %175 = vector.extract_strided_slice %151 {offsets = [0, 0, 16], sizes = [2, 8, 16], strides = [1, 1, 1]} : vector<2x8x32xf32> to vector<2x8x16xf32>
    %176 = vector.extract_strided_slice %153 {offsets = [0, 0, 16], sizes = [2, 8, 16], strides = [1, 1, 1]} : vector<2x8x32xf32> to vector<2x8x16xf32>
    %177 = vector.extract_strided_slice %155 {offsets = [0, 0, 16], sizes = [2, 8, 16], strides = [1, 1, 1]} : vector<2x8x32xf32> to vector<2x8x16xf32>
    "tpu.trace_start"() <{level = 10 : i32, message = "bqd,bkd->bqk"}> : () -> ()
    %cst_78 = arith.constant dense<0.000000e+00> : vector<2x8x8xf32>
    %178 = tpu.matmul %175, %176, %cst_78 {dimension_numbers = #tpu.dot_dimension_numbers<[2], [2], [1], [1], [0, 0, 0, 1, 1, 1], [0], [0]>} : vector<2x8x16xf32>, vector<2x8x16xf32>, vector<2x8x8xf32> -> vector<2x8x8xf32>
    "tpu.trace_stop"() : () -> ()
    %cst_79 = arith.constant 2.500000e-01 : f32
    %179 = vector.broadcast %cst_79 : f32 to vector<2x8x8xf32>
    %180 = arith.mulf %178, %179 : vector<2x8x8xf32>
    %181 = vector.broadcast %1 : vector<2x1x8xf32> to vector<2x8x8xf32>
    %182 = arith.addf %180, %181 : vector<2x8x8xf32>
    %cst_80 = arith.constant dense<0xFF800000> : vector<2x8xf32>
    %183 = vector.multi_reduction <maximumf>, %182, %cst_80 [2] : vector<2x8x8xf32> to vector<2x8xf32>
    %184 = vector.shape_cast %183 : vector<2x8xf32> to vector<2x8x1xf32>
    %185 = vector.broadcast %184 : vector<2x8x1xf32> to vector<2x8x8xf32>
    %186 = arith.subf %182, %185 : vector<2x8x8xf32>
    %187 = math.exp %186 : vector<2x8x8xf32>
    %cst_81 = arith.constant dense<0.000000e+00> : vector<2x8xf32>
    %188 = vector.multi_reduction <add>, %187, %cst_81 [2] : vector<2x8x8xf32> to vector<2x8xf32>
    %189 = vector.shape_cast %188 : vector<2x8xf32> to vector<2x8x1xf32>
    %190 = tpu.reciprocal %189 {approx = true} : vector<2x8x1xf32> -> vector<2x8x1xf32>
    %191 = vector.broadcast %190 : vector<2x8x1xf32> to vector<2x8x8xf32>
    %192 = arith.mulf %187, %191 : vector<2x8x8xf32>
    "tpu.trace_start"() <{level = 10 : i32, message = "bqk,bkd->bqd"}> : () -> ()
    %cst_82 = arith.constant dense<0.000000e+00> : vector<2x8x16xf32>
    %193 = tpu.matmul %192, %177, %cst_82 {dimension_numbers = #tpu.dot_dimension_numbers<[2], [1], [1], [2], [0, 0, 0, 1, 1, 2], [0], [0]>} : vector<2x8x8xf32>, vector<2x8x16xf32>, vector<2x8x16xf32> -> vector<2x8x16xf32>
    "tpu.trace_stop"() : () -> ()
    %194 = tpu.concatenate %174, %193 in 2 : vector<2x8x16xf32>, vector<2x8x16xf32> -> vector<2x8x32xf32>
    %195 = vector.shape_cast %194 : vector<2x8x32xf32> to vector<16x32xf32>
    %c1_83 = arith.constant 1 : index
    %c0_84 = arith.constant 0 : index
    %c0_85 = arith.constant 0 : index
    %196 = vector.load %arg7[%c1_83, %c0_84, %c0_85] : memref<2x32x32xf32, #tpu.memory_space<vmem>>, vector<1x32x32xf32>
    %197 = vector.shape_cast %196 : vector<1x32x32xf32> to vector<32x32xf32>
    %cst_86 = arith.constant dense<0.000000e+00> : vector<16x32xf32>
    %198 = tpu.matmul %195, %197, %cst_86 {dimension_numbers = #tpu.dot_dimension_numbers<[1], [0], [0], [1], [0, 0, 1, 1], [], []>} : vector<16x32xf32>, vector<32x32xf32>, vector<16x32xf32> -> vector<16x32xf32>
    %c1_87 = arith.constant 1 : index
    %c0_88 = arith.constant 0 : index
    %c0_89 = arith.constant 0 : index
    %199 = vector.load %arg8[%c1_87, %c0_88, %c0_89] : memref<2x1x32xf32, #tpu.memory_space<vmem>>, vector<1x1x32xf32>
    %200 = vector.shape_cast %199 : vector<1x1x32xf32> to vector<1x32xf32>
    %201 = vector.broadcast %200 : vector<1x32xf32> to vector<16x32xf32>
    %202 = arith.addf %198, %201 : vector<16x32xf32>
    %203 = arith.addf %142, %202 : vector<16x32xf32>
    %c1_90 = arith.constant 1 : index
    %c0_91 = arith.constant 0 : index
    %c0_92 = arith.constant 0 : index
    %204 = vector.load %arg9[%c1_90, %c0_91, %c0_92] : memref<2x1x32xf32, #tpu.memory_space<vmem>>, vector<1x1x32xf32>
    %205 = vector.shape_cast %204 : vector<1x1x32xf32> to vector<1x32xf32>
    %c1_93 = arith.constant 1 : index
    %c0_94 = arith.constant 0 : index
    %c0_95 = arith.constant 0 : index
    %206 = vector.load %arg10[%c1_93, %c0_94, %c0_95] : memref<2x1x32xf32, #tpu.memory_space<vmem>>, vector<1x1x32xf32>
    %207 = vector.shape_cast %206 : vector<1x1x32xf32> to vector<1x32xf32>
    %cst_96 = arith.constant dense<0.000000e+00> : vector<16xf32>
    %208 = vector.multi_reduction <add>, %203, %cst_96 [1] : vector<16x32xf32> to vector<16xf32>
    %209 = vector.shape_cast %208 : vector<16xf32> to vector<16x1xf32>
    %cst_97 = arith.constant 3.200000e+01 : f32
    %210 = vector.broadcast %cst_97 : f32 to vector<16x1xf32>
    %211 = arith.divf %209, %210 : vector<16x1xf32>
    %212 = vector.broadcast %211 : vector<16x1xf32> to vector<16x32xf32>
    %213 = arith.subf %203, %212 : vector<16x32xf32>
    %214 = arith.mulf %213, %213 : vector<16x32xf32>
    %cst_98 = arith.constant dense<0.000000e+00> : vector<16xf32>
    %215 = vector.multi_reduction <add>, %214, %cst_98 [1] : vector<16x32xf32> to vector<16xf32>
    %216 = vector.shape_cast %215 : vector<16xf32> to vector<16x1xf32>
    %cst_99 = arith.constant 3.200000e+01 : f32
    %217 = vector.broadcast %cst_99 : f32 to vector<16x1xf32>
    %218 = arith.divf %216, %217 : vector<16x1xf32>
    %219 = vector.broadcast %211 : vector<16x1xf32> to vector<16x32xf32>
    %220 = arith.subf %203, %219 : vector<16x32xf32>
    %cst_100 = arith.constant 9.99999996E-13 : f32
    %221 = vector.broadcast %cst_100 : f32 to vector<16x1xf32>
    %222 = arith.addf %218, %221 : vector<16x1xf32>
    %223 = math.rsqrt %222 : vector<16x1xf32>
    %224 = vector.broadcast %223 : vector<16x1xf32> to vector<16x32xf32>
    %225 = arith.mulf %220, %224 : vector<16x32xf32>
    %226 = vector.broadcast %205 : vector<1x32xf32> to vector<16x32xf32>
    %227 = arith.mulf %225, %226 : vector<16x32xf32>
    %228 = vector.broadcast %207 : vector<1x32xf32> to vector<16x32xf32>
    %229 = arith.addf %227, %228 : vector<16x32xf32>
    %c1_101 = arith.constant 1 : index
    %c0_102 = arith.constant 0 : index
    %c0_103 = arith.constant 0 : index
    %230 = vector.load %arg11[%c1_101, %c0_102, %c0_103] : memref<2x32x128xf32, #tpu.memory_space<vmem>>, vector<1x32x128xf32>
    %231 = vector.shape_cast %230 : vector<1x32x128xf32> to vector<32x128xf32>
    %cst_104 = arith.constant dense<0.000000e+00> : vector<16x128xf32>
    %232 = tpu.matmul %229, %231, %cst_104 {dimension_numbers = #tpu.dot_dimension_numbers<[1], [0], [0], [1], [0, 0, 1, 1], [], []>} : vector<16x32xf32>, vector<32x128xf32>, vector<16x128xf32> -> vector<16x128xf32>
    %c1_105 = arith.constant 1 : index
    %c0_106 = arith.constant 0 : index
    %c0_107 = arith.constant 0 : index
    %233 = vector.load %arg12[%c1_105, %c0_106, %c0_107] : memref<2x1x128xf32, #tpu.memory_space<vmem>>, vector<1x1x128xf32>
    %234 = vector.shape_cast %233 : vector<1x1x128xf32> to vector<1x128xf32>
    %235 = vector.broadcast %234 : vector<1x128xf32> to vector<16x128xf32>
    %236 = arith.addf %232, %235 : vector<16x128xf32>
    %237 = arith.mulf %236, %236 : vector<16x128xf32>
    %238 = arith.mulf %236, %237 : vector<16x128xf32>
    %cst_108 = arith.constant 4.471500e-02 : f32
    %239 = vector.broadcast %cst_108 : f32 to vector<16x128xf32>
    %240 = arith.mulf %239, %238 : vector<16x128xf32>
    %241 = arith.addf %236, %240 : vector<16x128xf32>
    %cst_109 = arith.constant 0.797884583 : f32
    %242 = vector.broadcast %cst_109 : f32 to vector<16x128xf32>
    %243 = arith.mulf %242, %241 : vector<16x128xf32>
    %244 = math.tanh %243 : vector<16x128xf32>
    %cst_110 = arith.constant 1.000000e+00 : f32
    %245 = vector.broadcast %cst_110 : f32 to vector<16x128xf32>
    %246 = arith.addf %245, %244 : vector<16x128xf32>
    %cst_111 = arith.constant 5.000000e-01 : f32
    %247 = vector.broadcast %cst_111 : f32 to vector<16x128xf32>
    %248 = arith.mulf %247, %246 : vector<16x128xf32>
    %249 = arith.mulf %236, %248 : vector<16x128xf32>
    %c1_112 = arith.constant 1 : index
    %c0_113 = arith.constant 0 : index
    %c0_114 = arith.constant 0 : index
    %250 = vector.load %arg13[%c1_112, %c0_113, %c0_114] : memref<2x128x32xf32, #tpu.memory_space<vmem>>, vector<1x128x32xf32>
    %251 = vector.shape_cast %250 : vector<1x128x32xf32> to vector<128x32xf32>
    %cst_115 = arith.constant dense<0.000000e+00> : vector<16x32xf32>
    %252 = tpu.matmul %249, %251, %cst_115 {dimension_numbers = #tpu.dot_dimension_numbers<[1], [0], [0], [1], [0, 0, 1, 1], [], []>} : vector<16x128xf32>, vector<128x32xf32>, vector<16x32xf32> -> vector<16x32xf32>
    %c1_116 = arith.constant 1 : index
    %c0_117 = arith.constant 0 : index
    %c0_118 = arith.constant 0 : index
    %253 = vector.load %arg14[%c1_116, %c0_117, %c0_118] : memref<2x1x32xf32, #tpu.memory_space<vmem>>, vector<1x1x32xf32>
    %254 = vector.shape_cast %253 : vector<1x1x32xf32> to vector<1x32xf32>
    %255 = vector.broadcast %254 : vector<1x32xf32> to vector<16x32xf32>
    %256 = arith.addf %252, %255 : vector<16x32xf32>
    %257 = arith.addf %229, %256 : vector<16x32xf32>
    %c1_119 = arith.constant 1 : index
    %c0_120 = arith.constant 0 : index
    %c0_121 = arith.constant 0 : index
    %258 = vector.load %arg15[%c1_119, %c0_120, %c0_121] : memref<2x1x32xf32, #tpu.memory_space<vmem>>, vector<1x1x32xf32>
    %259 = vector.shape_cast %258 : vector<1x1x32xf32> to vector<1x32xf32>
    %c1_122 = arith.constant 1 : index
    %c0_123 = arith.constant 0 : index
    %c0_124 = arith.constant 0 : index
    %260 = vector.load %arg16[%c1_122, %c0_123, %c0_124] : memref<2x1x32xf32, #tpu.memory_space<vmem>>, vector<1x1x32xf32>
    %261 = vector.shape_cast %260 : vector<1x1x32xf32> to vector<1x32xf32>
    %cst_125 = arith.constant dense<0.000000e+00> : vector<16xf32>
    %262 = vector.multi_reduction <add>, %257, %cst_125 [1] : vector<16x32xf32> to vector<16xf32>
    %263 = vector.shape_cast %262 : vector<16xf32> to vector<16x1xf32>
    %cst_126 = arith.constant 3.200000e+01 : f32
    %264 = vector.broadcast %cst_126 : f32 to vector<16x1xf32>
    %265 = arith.divf %263, %264 : vector<16x1xf32>
    %266 = vector.broadcast %265 : vector<16x1xf32> to vector<16x32xf32>
    %267 = arith.subf %257, %266 : vector<16x32xf32>
    %268 = arith.mulf %267, %267 : vector<16x32xf32>
    %cst_127 = arith.constant dense<0.000000e+00> : vector<16xf32>
    %269 = vector.multi_reduction <add>, %268, %cst_127 [1] : vector<16x32xf32> to vector<16xf32>
    %270 = vector.shape_cast %269 : vector<16xf32> to vector<16x1xf32>
    %cst_128 = arith.constant 3.200000e+01 : f32
    %271 = vector.broadcast %cst_128 : f32 to vector<16x1xf32>
    %272 = arith.divf %270, %271 : vector<16x1xf32>
    %273 = vector.broadcast %265 : vector<16x1xf32> to vector<16x32xf32>
    %274 = arith.subf %257, %273 : vector<16x32xf32>
    %cst_129 = arith.constant 9.99999996E-13 : f32
    %275 = vector.broadcast %cst_129 : f32 to vector<16x1xf32>
    %276 = arith.addf %272, %275 : vector<16x1xf32>
    %277 = math.rsqrt %276 : vector<16x1xf32>
    %278 = vector.broadcast %277 : vector<16x1xf32> to vector<16x32xf32>
    %279 = arith.mulf %274, %278 : vector<16x32xf32>
    %280 = vector.broadcast %259 : vector<1x32xf32> to vector<16x32xf32>
    %281 = arith.mulf %279, %280 : vector<16x32xf32>
    %282 = vector.broadcast %261 : vector<1x32xf32> to vector<16x32xf32>
    %283 = arith.addf %281, %282 : vector<16x32xf32>
    %c0_130 = arith.constant 0 : index
    %c0_131 = arith.constant 0 : index
    %284 = vector.load %arg23[%c0_130, %c0_131] : memref<16x32xf32, #tpu.memory_space<vmem>>, vector<16x32xf32>
    tpu.vector_store %arg23[%c0_130, %c0_131], %283 {strides = array<i32>} : memref<16x32xf32, #tpu.memory_space<vmem>>, vector<16x32xf32>,
    %c0_132 = arith.constant 0 : index
    %285 = memref.load %arg0[%c0_132] : memref<2xi32, #tpu.memory_space<smem>>
    %c0_i32 = arith.constant 0 : i32
    %286 = arith.addi %c0_i32, %285 : i32
    %c0_133 = arith.constant 0 : index
    %287 = memref.load %arg1[%c0_133] : memref<2xi32, #tpu.memory_space<smem>>
    %c0_i32_134 = arith.constant 0 : i32
    %288 = arith.addi %c0_i32_134, %287 : i32
    %289 = arith.index_cast %286 : i32 to index
    %c0_135 = arith.constant 0 : index
    %290 = vector.load %arg23[%289, %c0_135] : memref<16x32xf32, #tpu.memory_space<vmem>>, vector<1x32xf32>
    %291 = arith.index_cast %288 : i32 to index
    %c0_136 = arith.constant 0 : index
    %292 = vector.load %arg23[%291, %c0_136] : memref<16x32xf32, #tpu.memory_space<vmem>>, vector<1x32xf32>
    %293 = tpu.concatenate %290, %292 in 1 : vector<1x32xf32>, vector<1x32xf32> -> vector<1x64xf32>
    %c1_137 = arith.constant 1 : index
    %294 = memref.load %arg0[%c1_137] : memref<2xi32, #tpu.memory_space<smem>>
    %c8_i32 = arith.constant 8 : i32
    %295 = arith.addi %c8_i32, %294 : i32
    %c1_138 = arith.constant 1 : index
    %296 = memref.load %arg1[%c1_138] : memref<2xi32, #tpu.memory_space<smem>>
    %c8_i32_139 = arith.constant 8 : i32
    %297 = arith.addi %c8_i32_139, %296 : i32
    %298 = arith.index_cast %295 : i32 to index
    %c0_140 = arith.constant 0 : index
    %299 = vector.load %arg23[%298, %c0_140] : memref<16x32xf32, #tpu.memory_space<vmem>>, vector<1x32xf32>
    %300 = arith.index_cast %297 : i32 to index
    %c0_141 = arith.constant 0 : index
    %301 = vector.load %arg23[%300, %c0_141] : memref<16x32xf32, #tpu.memory_space<vmem>>, vector<1x32xf32>
    %302 = tpu.concatenate %299, %301 in 1 : vector<1x32xf32>, vector<1x32xf32> -> vector<1x64xf32>
    %303 = tpu.concatenate %293, %302 in 0 : vector<1x64xf32>, vector<1x64xf32> -> vector<2x64xf32>
    %c0_142 = arith.constant 0 : index
    %c0_143 = arith.constant 0 : index
    %304 = vector.load %arg17[%c0_142, %c0_143] : memref<64x32xf32, #tpu.memory_space<vmem>>, vector<64x32xf32>
    %cst_144 = arith.constant dense<0.000000e+00> : vector<2x32xf32>
    %305 = tpu.matmul %303, %304, %cst_144 {dimension_numbers = #tpu.dot_dimension_numbers<[1], [0], [0], [1], [0, 0, 1, 1], [], []>} : vector<2x64xf32>, vector<64x32xf32>, vector<2x32xf32> -> vector<2x32xf32>
    %c0_145 = arith.constant 0 : index
    %c0_146 = arith.constant 0 : index
    %306 = vector.load %arg18[%c0_145, %c0_146] : memref<1x32xf32, #tpu.memory_space<vmem>>, vector<1x32xf32>
    %307 = vector.broadcast %306 : vector<1x32xf32> to vector<2x32xf32>
    %308 = arith.addf %305, %307 : vector<2x32xf32>
    %cst_147 = arith.constant 0.000000e+00 : f32
    %309 = vector.broadcast %cst_147 : f32 to vector<2x32xf32>
    %310 = arith.maximumf %308, %309 : vector<2x32xf32>
    %c0_148 = arith.constant 0 : index
    %c0_149 = arith.constant 0 : index
    %311 = vector.load %arg19[%c0_148, %c0_149] : memref<32x2xf32, #tpu.memory_space<vmem>>, vector<32x2xf32>
    %cst_150 = arith.constant dense<0.000000e+00> : vector<2x2xf32>
    %312 = tpu.matmul %310, %311, %cst_150 {dimension_numbers = #tpu.dot_dimension_numbers<[1], [0], [0], [1], [0, 0, 1, 1], [], []>} : vector<2x32xf32>, vector<32x2xf32>, vector<2x2xf32> -> vector<2x2xf32>
    %c0_151 = arith.constant 0 : index
    %c0_152 = arith.constant 0 : index
    %313 = vector.load %arg20[%c0_151, %c0_152] : memref<1x2xf32, #tpu.memory_space<vmem>>, vector<1x2xf32>
    %314 = vector.broadcast %313 : vector<1x2xf32> to vector<2x2xf32>
    %315 = arith.addf %312, %314 : vector<2x2xf32>
    %c0_153 = arith.constant 0 : index
    %c0_154 = arith.constant 0 : index
    %316 = vector.load %arg21[%c0_153, %c0_154] : memref<2x2xf32, #tpu.memory_space<vmem>>, vector<2x2xf32>
    tpu.vector_store %arg21[%c0_153, %c0_154], %315 {strides = array<i32>} : memref<2x2xf32, #tpu.memory_space<vmem>>, vector<2x2xf32>,
    %cst_155 = arith.constant dense<0xFF800000> : vector<2xf32>
    %317 = vector.multi_reduction <maximumf>, %315, %cst_155 [1] : vector<2x2xf32> to vector<2xf32>
    %318 = vector.shape_cast %317 : vector<2xf32> to vector<2x1xf32>
    %319 = vector.broadcast %318 : vector<2x1xf32> to vector<2x2xf32>
    %320 = arith.subf %315, %319 : vector<2x2xf32>
    %321 = math.exp %320 : vector<2x2xf32>
    %cst_156 = arith.constant dense<0.000000e+00> : vector<2xf32>
    %322 = vector.multi_reduction <add>, %321, %cst_156 [1] : vector<2x2xf32> to vector<2xf32>
    %323 = vector.shape_cast %322 : vector<2xf32> to vector<2x1xf32>
    %324 = math.log %323 : vector<2x1xf32>
    %325 = arith.addf %318, %324 : vector<2x1xf32>
    %326 = vector.broadcast %325 : vector<2x1xf32> to vector<2x2xf32>
    %327 = arith.subf %315, %326 : vector<2x2xf32>
    %328 = tpu.iota {dimensions = array<i32: 1>} : vector<2x2xi32>
    %c0_157 = arith.constant 0 : index
    %c0_158 = arith.constant 0 : index
    %329 = vector.load %arg4[%c0_157, %c0_158] : memref<2x1xi32, #tpu.memory_space<vmem>>, vector<2x1xi32>
    %330 = vector.broadcast %329 : vector<2x1xi32> to vector<2x2xi32>
    %331 = arith.cmpi eq, %328, %330 : vector<2x2xi32>
    %332 = arith.extui %331 : vector<2x2xi1> to vector<2x2xi32>
    %333 = arith.sitofp %332 : vector<2x2xi32> to vector<2x2xf32>
    %334 = arith.mulf %333, %327 : vector<2x2xf32>
    %cst_159 = arith.constant dense<0.000000e+00> : vector<2xf32>
    %335 = vector.multi_reduction <add>, %334, %cst_159 [1] : vector<2x2xf32> to vector<2xf32>
    %336 = vector.shape_cast %335 : vector<2xf32> to vector<2x1xf32>
    %cst_160 = arith.constant 0.000000e+00 : f32
    %337 = vector.broadcast %cst_160 : f32 to vector<2x1xf32>
    %338 = arith.subf %337, %336 : vector<2x1xf32>
    %cst_161 = arith.constant dense<0.000000e+00> : vector<1xf32>
    %339 = vector.multi_reduction <add>, %338, %cst_161 [0] : vector<2x1xf32> to vector<1xf32>
    %340 = vector.shape_cast %339 : vector<1xf32> to vector<1x1xf32>
    %cst_162 = arith.constant 2.000000e+00 : f32
    %341 = vector.broadcast %cst_162 : f32 to vector<1x1xf32>
    %342 = arith.divf %340, %341 : vector<1x1xf32>
    %c0_163 = arith.constant 0 : index
    %c0_164 = arith.constant 0 : index
    %343 = vector.load %arg22[%c0_163, %c0_164] : memref<1x1xf32, #tpu.memory_space<vmem>>, vector<1x1xf32>
    tpu.vector_store %arg22[%c0_163, %c0_164], %342 {strides = array<i32>} : memref<1x1xf32, #tpu.memory_space<vmem>>, vector<1x1xf32>,
    return
  }
}

</mosaic_0001>

<llo_original>
// kernel: base_transformer_forward.1
$region0: #{base_transformer_forward.1}
  #allocation0 [shape = 'u32[]', space=smem, size = 0x4, offset = 0x4, fixed_abs, tag = 'smem constant byte address 0x4 - core index']
  #allocation1 [shape = 'u32[144,128]{1,0:T(1,128)}', space=vmem, size = 0x12000, scoped, tag = 'internal scratch']
  #allocation2 [shape = 'f32[16,32]{1,0:T(8,128)}', space=vmem, size = 0x2000, scoped, tag = 'scratch operand']
  %s0 = inlined_call_operand.vmem [shape: s32[2], index: 0, kind: input, shape index: {}]
  %s1 = inlined_call_operand.vmem [shape: s32[2], index: 1, kind: input, shape index: {}]
  %s2 = inlined_call_operand.vmem [shape: f32[16,32], index: 2, kind: input, shape index: {}]
  %s3 = inlined_call_operand.vmem [shape: f32[2,1,8], index: 3, kind: input, shape index: {}]
  %s4 = inlined_call_operand.vmem [shape: s32[2,1], index: 4, kind: input, shape index: {}]
  %s5 = inlined_call_operand.hbm [shape: f32[2,32,96], index: 5, kind: input, shape index: {}]
  %s6 = inlined_call_operand.vmem [shape: f32[2,1,96], index: 6, kind: input, shape index: {}]
  %s7 = inlined_call_operand.hbm [shape: f32[2,32,32], index: 7, kind: input, shape index: {}]
  %s8 = inlined_call_operand.vmem [shape: f32[2,1,32], index: 8, kind: input, shape index: {}, may-alias: {8,10,14,16}]
  %s9 = inlined_call_operand.vmem [shape: f32[2,1,32], index: 9, kind: input, shape index: {}, may-alias: {9,15}]
  %s10 = inlined_call_operand.vmem [shape: f32[2,1,32], index: 10, kind: input, shape index: {}, may-alias: {8,10,14,16}]
  %s11 = inlined_call_operand.hbm [shape: f32[2,32,128], index: 11, kind: input, shape index: {}]
  %s12 = inlined_call_operand.vmem [shape: f32[2,1,128], index: 12, kind: input, shape index: {}]
  %s13 = inlined_call_operand.vmem [shape: f32[2,128,32], index: 13, kind: input, shape index: {}]
  %s14 = inlined_call_operand.vmem [shape: f32[2,1,32], index: 14, kind: input, shape index: {}, may-alias: {8,10,14,16}]
  %s15 = inlined_call_operand.vmem [shape: f32[2,1,32], index: 15, kind: input, shape index: {}, may-alias: {9,15}]
  %s16 = inlined_call_operand.vmem [shape: f32[2,1,32], index: 16, kind: input, shape index: {}, may-alias: {8,10,14,16}]
  %s17 = inlined_call_operand.hbm [shape: f32[64,32], index: 17, kind: input, shape index: {}]
  %s18 = inlined_call_operand.vmem [shape: f32[1,32], index: 18, kind: input, shape index: {}]
  %s19 = inlined_call_operand.hbm [shape: f32[32,2], index: 19, kind: input, shape index: {}]
  %s20 = inlined_call_operand.vmem [shape: f32[1,2], index: 20, kind: input, shape index: {}]
  %s21 = inlined_call_operand.hbm [shape: f32[2,2], index: 21, kind: output, shape index: {0}]
  %s22 = inlined_call_operand.hbm [shape: f32[1,1], index: 22, kind: output, shape index: {1}]
  %23 = xla_tuple %s21, %s22
  %s24 = sld [smem:[#allocation0]]
  $region130: #{base_transformer_forward.1} parent=0
    _
  %s26 = ssub.s32 1, %s24
  %s27 = scalar_select 0, %s26, %s24
  $region1: #{base_transformer_forward.1} parent=0
    #allocation3 [shape = 'u8[512]{0}', space=smem, size = 0x200, scoped, tag = 'input window, operand 0, single buffered']
    #allocation4 [shape = 's32[1]{0}', space=sflag, size = 0x4, scoped, tag = 'scoped memory for base_transformer_forward.1']
    #allocation5 [shape = 's32[1]{0}', space=sflag, size = 0x4, scoped, tag = 'scoped memory for base_transformer_forward.1']
    #allocation6 [shape = 's32[1]{0}', space=sflag, size = 0x4, scoped, tag = 'scoped memory for base_transformer_forward.1']
    #allocation7 [shape = 'u8[512]{0}', space=smem, size = 0x200, scoped, tag = 'input window, operand 1, single buffered']
    #allocation8 [shape = 's32[1]{0}', space=sflag, size = 0x4, scoped, tag = 'scoped memory for base_transformer_forward.1']
    #allocation9 [shape = 'u8[32768]{0}', space=vmem, size = 0x8000, scoped, tag = 'input window, operand 5, single buffered']
    #allocation10 [shape = 'u8[32768]{0}', space=vmem, size = 0x8000, scoped, tag = 'input window, operand 7, single buffered']
    #allocation11 [shape = 's32[1]{0}', space=sflag, size = 0x4, scoped, tag = 'scoped memory for base_transformer_forward.1']
    #allocation12 [shape = 'u8[32768]{0}', space=vmem, size = 0x8000, scoped, tag = 'input window, operand 11, single buffered']
    #allocation13 [shape = 'u8[32768]{0}', space=vmem, size = 0x8000, scoped, tag = 'input window, operand 17, single buffered']
    #allocation14 [shape = 's32[1]{0}', space=sflag, size = 0x4, scoped, tag = 'scoped memory for base_transformer_forward.1']
    #allocation15 [shape = 'u8[16384]{0}', space=vmem, size = 0x4000, scoped, tag = 'input window, operand 19, single buffered']
    #allocation16 [shape = 'u8[1024]{0}', space=vmem, size = 0x400, scoped, tag = 'output window, operand 0, single buffered']
    #allocation17 [shape = 'u8[512]{0}', space=vmem, size = 0x400, scoped, tag = 'output window, operand 1, single buffered']
    #allocation18 [shape = 's32[1]{0}', space=sflag, size = 0x4, scoped, tag = 'scoped memory for base_transformer_forward.1']
    %28 = vsyncpa [#allocation6], 0
    %29 = vsyncpa [#allocation8], 0
    %30 = vsyncpa [#allocation4], 0
    %31 = vsyncpa [#allocation11], 0
    %32 = vsyncpa [#allocation14], 0
    %33 = vsyncpa [#allocation5], 0
    %34 = vsyncpa [#allocation18], 0
    // Predicated region
    $region2: #{base_transformer_forward.1} parent=1 // pred_check
      _
    $region3: #{base_transformer_forward.1} parent=1 // pred_check_branch
      %36 = sbr.rel (0) target = $region5
    $region4: #{base_transformer_forward.1} parent=1 // pred_region
      %s38 = ssub.s32 16, 16
      %39 = vsyncadd [#allocation6], %s38
      %s41 = sshll.u32 %s0, 4
      %s42 = int_to_ptr.vmem [resolvable:$true] %s41
      %44 = dma.vmem_to_smem %s42, 16, [#allocation3], [#allocation6]
    $region5: #{base_transformer_forward.1} parent=1 // pred_fallthru
      _
    // Predicated region
    $region6: #{base_transformer_forward.1} parent=1 // pred_check
      _
    $region7: #{base_transformer_forward.1} parent=1 // pred_check_branch
      %46 = sbr.rel (0) target = $region9
    $region8: #{base_transformer_forward.1} parent=1 // pred_region
      %s48 = ssub.s32 16, 16
      %49 = vsyncadd [#allocation8], %s48
      %s51 = sshll.u32 %s1, 4
      %s52 = int_to_ptr.vmem [resolvable:$true] %s51
      %54 = dma.vmem_to_smem %s52, 16, [#allocation7], [#allocation8]
    $region9: #{base_transformer_forward.1} parent=1 // pred_fallthru
      _
    // Predicated region
    $region10: #{base_transformer_forward.1} parent=1 // pred_check
      _
    $region11: #{base_transformer_forward.1} parent=1 // pred_check_branch
      %56 = sbr.rel (0) target = $region13
    $region12: #{base_transformer_forward.1} parent=1 // pred_region
      _
    $region13: #{base_transformer_forward.1} parent=1 // pred_fallthru
      _
    // Predicated region
    $region14: #{base_transformer_forward.1} parent=1 // pred_check
      _
    $region15: #{base_transformer_forward.1} parent=1 // pred_check_branch
      %58 = sbr.rel (0) target = $region17
    $region16: #{base_transformer_forward.1} parent=1 // pred_region
      _
    $region17: #{base_transformer_forward.1} parent=1 // pred_fallthru
      _
    // Predicated region
    $region18: #{base_transformer_forward.1} parent=1 // pred_check
      _
    $region19: #{base_transformer_forward.1} parent=1 // pred_check_branch
      %60 = sbr.rel (0) target = $region21
    $region20: #{base_transformer_forward.1} parent=1 // pred_region
      _
    $region21: #{base_transformer_forward.1} parent=1 // pred_fallthru
      _
    // Predicated region
    $region22: #{base_transformer_forward.1} parent=1 // pred_check
      _
    $region23: #{base_transformer_forward.1} parent=1 // pred_check_branch
      %62 = sbr.rel (0) target = $region25
    $region24: #{base_transformer_forward.1} parent=1 // pred_region
      %s64 = ssub.s32 1024, 1024
      %65 = vsyncadd [#allocation4], %s64
      %s66 = sshll.u32 [#allocation9], 4
      %s67 = int_to_ptr.vmem [resolvable:$true] %s66
      %72 = dma.hbm_to_vmem [thread:$0]  %s5, 1024, %s67, [#allocation4], 128, 128, 8
    $region25: #{base_transformer_forward.1} parent=1 // pred_fallthru
      _
    // Predicated region
    $region26: #{base_transformer_forward.1} parent=1 // pred_check
      _
    $region27: #{base_transformer_forward.1} parent=1 // pred_check_branch
      %74 = sbr.rel (0) target = $region29
    $region28: #{base_transformer_forward.1} parent=1 // pred_region
      _
    $region29: #{base_transformer_forward.1} parent=1 // pred_fallthru
      _
    // Predicated region
    $region30: #{base_transformer_forward.1} parent=1 // pred_check
      _
    $region31: #{base_transformer_forward.1} parent=1 // pred_check_branch
      %76 = sbr.rel (0) target = $region33
    $region32: #{base_transformer_forward.1} parent=1 // pred_region
      %s78 = ssub.s32 1024, 1024
      %79 = vsyncadd [#allocation11], %s78
      %s80 = sshll.u32 [#allocation10], 4
      %s81 = int_to_ptr.vmem [resolvable:$true] %s80
      %86 = dma.hbm_to_vmem [thread:$0]  %s7, 1024, %s81, [#allocation11], 128, 128, 8
    $region33: #{base_transformer_forward.1} parent=1 // pred_fallthru
      _
    // Predicated region
    $region34: #{base_transformer_forward.1} parent=1 // pred_check
      _
    $region35: #{base_transformer_forward.1} parent=1 // pred_check_branch
      %88 = sbr.rel (0) target = $region37
    $region36: #{base_transformer_forward.1} parent=1 // pred_region
      _
    $region37: #{base_transformer_forward.1} parent=1 // pred_fallthru
      _
    // Predicated region
    $region38: #{base_transformer_forward.1} parent=1 // pred_check
      _
    $region39: #{base_transformer_forward.1} parent=1 // pred_check_branch
      %90 = sbr.rel (0) target = $region41
    $region40: #{base_transformer_forward.1} parent=1 // pred_region
      _
    $region41: #{base_transformer_forward.1} parent=1 // pred_fallthru
      _
    // Predicated region
    $region42: #{base_transformer_forward.1} parent=1 // pred_check
      _
    $region43: #{base_transformer_forward.1} parent=1 // pred_check_branch
      %92 = sbr.rel (0) target = $region45
    $region44: #{base_transformer_forward.1} parent=1 // pred_region
      _
    $region45: #{base_transformer_forward.1} parent=1 // pred_fallthru
      _
    // Predicated region
    $region46: #{base_transformer_forward.1} parent=1 // pred_check
      _
    $region47: #{base_transformer_forward.1} parent=1 // pred_check_branch
      %94 = sbr.rel (0) target = $region49
    $region48: #{base_transformer_forward.1} parent=1 // pred_region
      %s96 = ssub.s32 1024, 1024
      %97 = vsyncadd [#allocation11], %s96
      %s98 = sshll.u32 [#allocation12], 4
      %s99 = int_to_ptr.vmem [resolvable:$true] %s98
      %104 = dma.hbm_to_vmem [thread:$0]  %s11, 1024, %s99, [#allocation11], 128, 128, 8
    $region49: #{base_transformer_forward.1} parent=1 // pred_fallthru
      _
    // Predicated region
    $region50: #{base_transformer_forward.1} parent=1 // pred_check
      _
    $region51: #{base_transformer_forward.1} parent=1 // pred_check_branch
      %106 = sbr.rel (0) target = $region53
    $region52: #{base_transformer_forward.1} parent=1 // pred_region
      _
    $region53: #{base_transformer_forward.1} parent=1 // pred_fallthru
      _
    // Predicated region
    $region54: #{base_transformer_forward.1} parent=1 // pred_check
      _
    $region55: #{base_transformer_forward.1} parent=1 // pred_check_branch
      %108 = sbr.rel (0) target = $region57
    $region56: #{base_transformer_forward.1} parent=1 // pred_region
      _
    $region57: #{base_transformer_forward.1} parent=1 // pred_fallthru
      _
    // Predicated region
    $region58: #{base_transformer_forward.1} parent=1 // pred_check
      _
    $region59: #{base_transformer_forward.1} parent=1 // pred_check_branch
      %110 = sbr.rel (0) target = $region61
    $region60: #{base_transformer_forward.1} parent=1 // pred_region
      _
    $region61: #{base_transformer_forward.1} parent=1 // pred_fallthru
      _
    // Predicated region
    $region62: #{base_transformer_forward.1} parent=1 // pred_check
      _
    $region63: #{base_transformer_forward.1} parent=1 // pred_check_branch
      %112 = sbr.rel (0) target = $region65
    $region64: #{base_transformer_forward.1} parent=1 // pred_region
      _
    $region65: #{base_transformer_forward.1} parent=1 // pred_fallthru
      _
    // Predicated region
    $region66: #{base_transformer_forward.1} parent=1 // pred_check
      _
    $region67: #{base_transformer_forward.1} parent=1 // pred_check_branch
      %114 = sbr.rel (0) target = $region69
    $region68: #{base_transformer_forward.1} parent=1 // pred_region
      _
    $region69: #{base_transformer_forward.1} parent=1 // pred_fallthru
      _
    // Predicated region
    $region70: #{base_transformer_forward.1} parent=1 // pred_check
      _
    $region71: #{base_transformer_forward.1} parent=1 // pred_check_branch
      %116 = sbr.rel (0) target = $region73
    $region72: #{base_transformer_forward.1} parent=1 // pred_region
      %s118 = ssub.s32 1024, 1024
      %119 = vsyncadd [#allocation14], %s118
      %s120 = sshll.u32 [#allocation13], 4
      %s121 = int_to_ptr.vmem [resolvable:$true] %s120
      %126 = dma.hbm_to_vmem [thread:$0]  %s17, 1024, %s121, [#allocation14], 128, 128, 8
    $region73: #{base_transformer_forward.1} parent=1 // pred_fallthru
      _
    // Predicated region
    $region74: #{base_transformer_forward.1} parent=1 // pred_check
      _
    $region75: #{base_transformer_forward.1} parent=1 // pred_check_branch
      %128 = sbr.rel (0) target = $region77
    $region76: #{base_transformer_forward.1} parent=1 // pred_region
      _
    $region77: #{base_transformer_forward.1} parent=1 // pred_fallthru
      _
    // Predicated region
    $region78: #{base_transformer_forward.1} parent=1 // pred_check
      _
    $region79: #{base_transformer_forward.1} parent=1 // pred_check_branch
      %130 = sbr.rel (0) target = $region81
    $region80: #{base_transformer_forward.1} parent=1 // pred_region
      %s132 = ssub.s32 512, 512
      %133 = vsyncadd [#allocation14], %s132
      %s134 = sshll.u32 [#allocation15], 4
      %s135 = int_to_ptr.vmem [resolvable:$true] %s134
      %140 = dma.hbm_to_vmem [thread:$0]  %s19, 512, %s135, [#allocation14], 128, 128, 8
    $region81: #{base_transformer_forward.1} parent=1 // pred_fallthru
      _
    // Predicated region
    $region82: #{base_transformer_forward.1} parent=1 // pred_check
      _
    $region83: #{base_transformer_forward.1} parent=1 // pred_check_branch
      %142 = sbr.rel (0) target = $region85
    $region84: #{base_transformer_forward.1} parent=1 // pred_region
      _
    $region85: #{base_transformer_forward.1} parent=1 // pred_fallthru
      _
    // Predicated region
    $region86: #{base_transformer_forward.1} parent=1 // pred_check
      _
    $region87: #{base_transformer_forward.1} parent=1 // pred_check_branch
      %144 = sbr.rel (0) target = $region89
    $region88: #{base_transformer_forward.1} parent=1 // pred_region
      %145 = dma.done [#allocation6], 16
    $region89: #{base_transformer_forward.1} parent=1 // pred_fallthru
      _
    // Predicated region
    $region90: #{base_transformer_forward.1} parent=1 // pred_check
      _
    $region91: #{base_transformer_forward.1} parent=1 // pred_check_branch
      %147 = sbr.rel (0) target = $region93
    $region92: #{base_transformer_forward.1} parent=1 // pred_region
      %148 = dma.done [#allocation8], 16
    $region93: #{base_transformer_forward.1} parent=1 // pred_fallthru
      _
    // Predicated region
    $region94: #{base_transformer_forward.1} parent=1 // pred_check
      _
    $region95: #{base_transformer_forward.1} parent=1 // pred_check_branch
      %150 = sbr.rel (0) target = $region97
    $region96: #{base_transformer_forward.1} parent=1 // pred_region
      %151 = dma.done [#allocation4], 1024
    $region97: #{base_transformer_forward.1} parent=1 // pred_fallthru
      _
    // Predicated region
    $region98: #{base_transformer_forward.1} parent=1 // pred_check
      _
    $region99: #{base_transformer_forward.1} parent=1 // pred_check_branch
      %153 = sbr.rel (0) target = $region101
    $region100: #{base_transformer_forward.1} parent=1 // pred_region
      %154 = dma.done [#allocation11], 1024
    $region101: #{base_transformer_forward.1} parent=1 // pred_fallthru
      _
    // Predicated region
    $region102: #{base_transformer_forward.1} parent=1 // pred_check
      _
    $region103: #{base_transformer_forward.1} parent=1 // pred_check_branch
      %156 = sbr.rel (0) target = $region105
    $region104: #{base_transformer_forward.1} parent=1 // pred_region
      %157 = dma.done [#allocation11], 1024
    $region105: #{base_transformer_forward.1} parent=1 // pred_fallthru
      _
    // Predicated region
    $region106: #{base_transformer_forward.1} parent=1 // pred_check
      _
    $region107: #{base_transformer_forward.1} parent=1 // pred_check_branch
      %159 = sbr.rel (0) target = $region109
    $region108: #{base_transformer_forward.1} parent=1 // pred_region
      %160 = dma.done [#allocation14], 1024
    $region109: #{base_transformer_forward.1} parent=1 // pred_fallthru
      _
    // Predicated region
    $region110: #{base_transformer_forward.1} parent=1 // pred_check
      _
    $region111: #{base_transformer_forward.1} parent=1 // pred_check_branch
      %162 = sbr.rel (0) target = $region113
    $region112: #{base_transformer_forward.1} parent=1 // pred_region
      %163 = dma.done [#allocation14], 512
    $region113: #{base_transformer_forward.1} parent=1 // pred_fallthru
      _
    %164 = sfence
    %v165 = vld [vmem:[%s2] sm:$0xff]
    %v166 = vld [vmem:[%s2 + $0x8] sm:$0xff]
    %v167 = vld [vmem:[%s3] sm:$0x1]
    %v168 = vld [vmem:[%s3 + $0x1] sm:$0x1]
    %v169 = vld [vmem:[#allocation9] sm:$0xff]
    %v170 = vld [vmem:[#allocation9 + $0x8] sm:$0xff]
    %v171 = vld [vmem:[#allocation9 + $0x10] sm:$0xff]
    %v172 = vld [vmem:[#allocation9 + $0x18] sm:$0xff]
    %v173 = vld [vmem:[%s6] sm:$0x1]
    %v175 = vlaneseq
    %v176 = vshrl.u32 %v175, 7
    %v177 = vsub.s32 0, %v176
    %v178 = vrot.slane %v173, %v177
    %vm180 = vcmask 261120
    %v182 = vsel %vm180, %v165, 0
    %v185 = vsel %vm180, %v166, 0
    %187 = vmatprep.subr.mxu0 0.0
    %188 = vmatpush1.msra.mxu0 %v169
    %189 = vmatprep.subr.mxu0 0.0
    %190 = vmatpush1.msra.mxu0 %v170
    %191 = vmatprep.subr.mxu0 0.0
    %192 = vmatpush1.msra.mxu0 %v171
    %193 = vmatprep.subr.mxu0 0.0
    %194 = vmatpush1.msra.mxu0 %v172
    %195 = vmatprep.subr.mxu0 0.0
    %196 = vmatpush1.msra.mxu0 0.0
    %197 = vmatprep.subr.mxu0 0.0
    %198 = vmatpush1.msra.mxu0 0.0
    %199 = vmatprep.subr.mxu0 0.0
    %200 = vmatpush1.msra.mxu0 0.0
    %201 = vmatprep.subr.mxu0 0.0
    %202 = vmatpush1.msra.mxu0 0.0
    %203 = vmatprep.subr.mxu0 0.0
    %204 = vmatpush1.msra.mxu0 0.0
    %205 = vmatprep.subr.mxu0 0.0
    %206 = vmatpush1.msra.mxu0 0.0
    %207 = vmatprep.subr.mxu0 0.0
    %208 = vmatpush1.msra.mxu0 0.0
    %209 = vmatprep.subr.mxu0 0.0
    %210 = vmatpush1.msra.mxu0 0.0
    %211 = vmatprep.subr.mxu0 0.0
    %212 = vmatpush1.msra.mxu0 0.0
    %213 = vmatprep.subr.mxu0 0.0
    %214 = vmatpush1.msra.mxu0 0.0
    %215 = vmatprep.subr.mxu0 0.0
    %216 = vmatpush1.msra.mxu0 0.0
    %217 = vmatprep.subr.mxu0 0.0
    %218 = vmatpush1.msra.mxu0 0.0
    %219 = vmatprep.subr.mxu0 0.0
    %220 = vmatpush1.msra.mxu0 0.0
    %221 = vmatprep.subr.mxu0 0.0
    %222 = vmatpush1.msra.mxu0 0.0
    %223 = vmatprep.subr.mxu0 0.0
    %224 = vmatpush1.msra.mxu0 0.0
    %225 = vmatprep.subr.mxu0 0.0
    %226 = vmatpush1.msra.mxu0 0.0
    %227 = vmatprep.subr.mxu0 0.0
    %228 = vmatpush1.msra.mxu0 0.0
    %229 = vmatprep.subr.mxu0 0.0
    %230 = vmatpush1.msra.mxu0 0.0
    %231 = vmatprep.subr.mxu0 0.0
    %232 = vmatpush1.msra.mxu0 0.0
    %233 = vmatprep.subr.mxu0 0.0
    %234 = vmatpush1.msra.mxu0 0.0
    %235 = vmatprep.subr.mxu0 0.0
    %236 = vmatpush1.msra.mxu0 0.0
    %237 = vmatprep.subr.mxu0 0.0
    %238 = vmatpush1.msra.mxu0 0.0
    %239 = vmatprep.subr.mxu0 0.0
    %240 = vmatpush1.msra.mxu0 0.0
    %241 = vmatprep.subr.mxu0 0.0
    %242 = vmatpush1.msra.mxu0 0.0
    %243 = vmatprep.subr.mxu0 0.0
    %244 = vmatpush1.msra.mxu0 0.0
    %245 = vmatprep.subr.mxu0 0.0
    %246 = vmatpush1.msra.mxu0 0.0
    %247 = vmatprep.subr.mxu0 0.0
    %248 = vmatpush1.msra.mxu0 0.0
    %249 = vmatprep.subr.mxu0 0.0
    %250 = vmatpush1.msra.mxu0 0.0
    %251 = vmatprep.mubr.f32.mxu0 0.0
    %252 = vmatmul.mubr.f32.gmra.mrb[0].mxu0 %v182
    %v253 = vpop.f32.mrb[0].mxu0
    %v254 = vadd.f32 %v178, %v253
    %v255 = vpop.f32.mrb[0].mxu0
    %256 = vmatprep.mubr.f32.mxu0 0.0
    %257 = vmatmul.mubr.f32.gmra.mrb[0].mxu0 %v185
    %v258 = vpop.f32.mrb[0].mxu0
    %v259 = vadd.f32 %v178, %v258
    %v260 = vpop.f32.mrb[0].mxu0
    %261 = vdwg.mxu0
    %263 = vrot.lane.b32.xlu0 %v254, 96
    %v264 = vpop.permute.xlu0 %263
    %vm265 = vcmask 130048
    %v266 = vsel %vm265, %v254, 0
    %v268 = vsel %vm265, %v264, 0
    %270 = vmatprep.subr.mxu0 0.0
    %271 = vmatpush1.xpose.msra.mxu0 %v268
    %272 = vmatprep.subr.mxu0 0.0
    %273 = vmatpush1.xpose.msra.mxu0 0.0
    %274 = vmatprep.subr.mxu0 0.0
    %275 = vmatpush1.xpose.msra.mxu0 0.0
    %276 = vmatprep.subr.mxu0 0.0
    %277 = vmatpush1.xpose.msra.mxu0 0.0
    %278 = vmatprep.subr.mxu0 0.0
    %279 = vmatpush1.xpose.msra.mxu0 0.0
    %280 = vmatprep.subr.mxu0 0.0
    %281 = vmatpush1.xpose.msra.mxu0 0.0
    %282 = vmatprep.subr.mxu0 0.0
    %283 = vmatpush1.xpose.msra.mxu0 0.0
    %284 = vmatprep.subr.mxu0 0.0
    %285 = vmatpush1.xpose.msra.mxu0 0.0
    %286 = vmatprep.subr.mxu0 0.0
    %287 = vmatpush1.xpose.msra.mxu0 0.0
    %288 = vmatprep.subr.mxu0 0.0
    %289 = vmatpush1.xpose.msra.mxu0 0.0
    %290 = vmatprep.subr.mxu0 0.0
    %291 = vmatpush1.xpose.msra.mxu0 0.0
    %292 = vmatprep.subr.mxu0 0.0
    %293 = vmatpush1.xpose.msra.mxu0 0.0
    %294 = vmatprep.subr.mxu0 0.0
    %295 = vmatpush1.xpose.msra.mxu0 0.0
    %296 = vmatprep.subr.mxu0 0.0
    %297 = vmatpush1.xpose.msra.mxu0 0.0
    %298 = vmatprep.subr.mxu0 0.0
    %299 = vmatpush1.xpose.msra.mxu0 0.0
    %300 = vmatprep.subr.mxu0 0.0
    %301 = vmatpush1.xpose.msra.mxu0 0.0
    %302 = vmatprep.subr.mxu0 0.0
    %303 = vmatpush1.xpose.msra.mxu0 0.0
    %304 = vmatprep.subr.mxu0 0.0
    %305 = vmatpush1.xpose.msra.mxu0 0.0
    %306 = vmatprep.subr.mxu0 0.0
    %307 = vmatpush1.xpose.msra.mxu0 0.0
    %308 = vmatprep.subr.mxu0 0.0
    %309 = vmatpush1.xpose.msra.mxu0 0.0
    %310 = vmatprep.subr.mxu0 0.0
    %311 = vmatpush1.xpose.msra.mxu0 0.0
    %312 = vmatprep.subr.mxu0 0.0
    %313 = vmatpush1.xpose.msra.mxu0 0.0
    %314 = vmatprep.subr.mxu0 0.0
    %315 = vmatpush1.xpose.msra.mxu0 0.0
    %316 = vmatprep.subr.mxu0 0.0
    %317 = vmatpush1.xpose.msra.mxu0 0.0
    %318 = vmatprep.subr.mxu0 0.0
    %319 = vmatpush1.xpose.msra.mxu0 0.0
    %320 = vmatprep.subr.mxu0 0.0
    %321 = vmatpush1.xpose.msra.mxu0 0.0
    %322 = vmatprep.subr.mxu0 0.0
    %323 = vmatpush1.xpose.msra.mxu0 0.0
    %324 = vmatprep.subr.mxu0 0.0
    %325 = vmatpush1.xpose.msra.mxu0 0.0
    %326 = vmatprep.subr.mxu0 0.0
    %327 = vmatpush1.xpose.msra.mxu0 0.0
    %328 = vmatprep.subr.mxu0 0.0
    %329 = vmatpush1.xpose.msra.mxu0 0.0
    %330 = vmatprep.subr.mxu0 0.0
    %331 = vmatpush1.xpose.msra.mxu0 0.0
    %332 = vmatprep.subr.mxu0 0.0
    %333 = vmatpush1.xpose.msra.mxu0 0.0
    %334 = vmatprep.mubr.f32.mxu0 0.0
    %335 = vmatmul.mubr.f32.gmra.mrb[0].mxu0 %v266
    %v336 = vpop.f32.mrb[0].mxu0
    %v337 = vadd.f32 0.0, %v336
    %v338 = vpop.f32.mrb[0].mxu0
    %339 = vdwg.mxu0
    %341 = vrot.lane.b32.xlu0 %v259, 96
    %v342 = vpop.permute.xlu0 %341
    %v343 = vsel %vm265, %v259, 0
    %v345 = vsel %vm265, %v342, 0
    %347 = vmatprep.subr.mxu0 0.0
    %348 = vmatpush1.xpose.msra.mxu0 %v345
    %349 = vmatprep.subr.mxu0 0.0
    %350 = vmatpush1.xpose.msra.mxu0 0.0
    %351 = vmatprep.subr.mxu0 0.0
    %352 = vmatpush1.xpose.msra.mxu0 0.0
    %353 = vmatprep.subr.mxu0 0.0
    %354 = vmatpush1.xpose.msra.mxu0 0.0
    %355 = vmatprep.subr.mxu0 0.0
    %356 = vmatpush1.xpose.msra.mxu0 0.0
    %357 = vmatprep.subr.mxu0 0.0
    %358 = vmatpush1.xpose.msra.mxu0 0.0
    %359 = vmatprep.subr.mxu0 0.0
    %360 = vmatpush1.xpose.msra.mxu0 0.0
    %361 = vmatprep.subr.mxu0 0.0
    %362 = vmatpush1.xpose.msra.mxu0 0.0
    %363 = vmatprep.subr.mxu0 0.0
    %364 = vmatpush1.xpose.msra.mxu0 0.0
    %365 = vmatprep.subr.mxu0 0.0
    %366 = vmatpush1.xpose.msra.mxu0 0.0
    %367 = vmatprep.subr.mxu0 0.0
    %368 = vmatpush1.xpose.msra.mxu0 0.0
    %369 = vmatprep.subr.mxu0 0.0
    %370 = vmatpush1.xpose.msra.mxu0 0.0
    %371 = vmatprep.subr.mxu0 0.0
    %372 = vmatpush1.xpose.msra.mxu0 0.0
    %373 = vmatprep.subr.mxu0 0.0
    %374 = vmatpush1.xpose.msra.mxu0 0.0
    %375 = vmatprep.subr.mxu0 0.0
    %376 = vmatpush1.xpose.msra.mxu0 0.0
    %377 = vmatprep.subr.mxu0 0.0
    %378 = vmatpush1.xpose.msra.mxu0 0.0
    %379 = vmatprep.subr.mxu0 0.0
    %380 = vmatpush1.xpose.msra.mxu0 0.0
    %381 = vmatprep.subr.mxu0 0.0
    %382 = vmatpush1.xpose.msra.mxu0 0.0
    %383 = vmatprep.subr.mxu0 0.0
    %384 = vmatpush1.xpose.msra.mxu0 0.0
    %385 = vmatprep.subr.mxu0 0.0
    %386 = vmatpush1.xpose.msra.mxu0 0.0
    %387 = vmatprep.subr.mxu0 0.0
    %388 = vmatpush1.xpose.msra.mxu0 0.0
    %389 = vmatprep.subr.mxu0 0.0
    %390 = vmatpush1.xpose.msra.mxu0 0.0
    %391 = vmatprep.subr.mxu0 0.0
    %392 = vmatpush1.xpose.msra.mxu0 0.0
    %393 = vmatprep.subr.mxu0 0.0
    %394 = vmatpush1.xpose.msra.mxu0 0.0
    %395 = vmatprep.subr.mxu0 0.0
    %396 = vmatpush1.xpose.msra.mxu0 0.0
    %397 = vmatprep.subr.mxu0 0.0
    %398 = vmatpush1.xpose.msra.mxu0 0.0
    %399 = vmatprep.subr.mxu0 0.0
    %400 = vmatpush1.xpose.msra.mxu0 0.0
    %401 = vmatprep.subr.mxu0 0.0
    %402 = vmatpush1.xpose.msra.mxu0 0.0
    %403 = vmatprep.subr.mxu0 0.0
    %404 = vmatpush1.xpose.msra.mxu0 0.0
    %405 = vmatprep.subr.mxu0 0.0
    %406 = vmatpush1.xpose.msra.mxu0 0.0
    %407 = vmatprep.subr.mxu0 0.0
    %408 = vmatpush1.xpose.msra.mxu0 0.0
    %409 = vmatprep.subr.mxu0 0.0
    %410 = vmatpush1.xpose.msra.mxu0 0.0
    %411 = vmatprep.mubr.f32.mxu0 0.0
    %412 = vmatmul.mubr.f32.gmra.mrb[0].mxu0 %v343
    %v413 = vpop.f32.mrb[0].mxu0
    %v414 = vadd.f32 0.0, %v413
    %v415 = vpop.f32.mrb[0].mxu0
    %416 = vdwg.mxu0
    %v417 = vmul.f32 %v337, 0.25
    %v418 = vmul.f32 %v414, 0.25
    %v421 = vlaneseq
    %v422 = vshrl.u32 %v421, 7
    %v423 = vsub.s32 0, %v422
    %v424 = vrot.slane %v167, %v423
    %v425 = vlaneseq
    %v426 = vshrl.u32 %v425, 7
    %v427 = vsub.s32 0, %v426
    %v428 = vrot.slane %v168, %v427
    %v431 = vadd.f32 %v417, %v424
    %v432 = vadd.f32 %v418, %v428
    %vm433 = vcmask 64512
    %v434 = vsel %vm433, %v431, -inf
    %435 = vmax.xlane.f32.xlu0 %v434
    %v436 = vpop.xlane.xlu0 %435
    %v437 = vsel %vm433, %v432, -inf
    %438 = vmax.xlane.f32.xlu0 %v437
    %v439 = vpop.xlane.xlu0 %438
    %v440 = vsub.f32 %v431, %v436
    %v441 = vsub.f32 %v432, %v439
    %v442 = vmul.f32 %v440, 1.442695
    %v443 = vpow.pop %v442
    %v444 = vmul.f32 %v441, 1.442695
    %v445 = vpow.pop %v444
    %v446 = vsel %vm433, %v443, 0.0
    %447 = vadd.xlane.f32.xlu0 %v446
    %v448 = vpop.xlane.xlu0 %447
    %v449 = vsel %vm433, %v445, 0.0
    %450 = vadd.xlane.f32.xlu0 %v449
    %v451 = vpop.xlane.xlu0 %450
    %v452 = vrcp.pop %v448
    %v453 = vrcp.pop %v451
    %v454 = vmul.f32 %v443, %v452
    %v455 = vmul.f32 %v445, %v453
    %456 = vrot.lane.b32.xlu0 %v254, 64
    %v457 = vpop.permute.xlu0 %456
    %v460 = vsel %vm433, %v454, 0
    %462 = vmatprep.subr.mxu0 0.0
    %463 = vmatpush1.msra.mxu0 %v457
    %464 = vmatprep.subr.mxu0 0.0
    %465 = vmatpush1.msra.mxu0 0.0
    %466 = vmatprep.subr.mxu0 0.0
    %467 = vmatpush1.msra.mxu0 0.0
    %468 = vmatprep.subr.mxu0 0.0
    %469 = vmatpush1.msra.mxu0 0.0
    %470 = vmatprep.subr.mxu0 0.0
    %471 = vmatpush1.msra.mxu0 0.0
    %472 = vmatprep.subr.mxu0 0.0
    %473 = vmatpush1.msra.mxu0 0.0
    %474 = vmatprep.subr.mxu0 0.0
    %475 = vmatpush1.msra.mxu0 0.0
    %476 = vmatprep.subr.mxu0 0.0
    %477 = vmatpush1.msra.mxu0 0.0
    %478 = vmatprep.subr.mxu0 0.0
    %479 = vmatpush1.msra.mxu0 0.0
    %480 = vmatprep.subr.mxu0 0.0
    %481 = vmatpush1.msra.mxu0 0.0
    %482 = vmatprep.subr.mxu0 0.0
    %483 = vmatpush1.msra.mxu0 0.0
    %484 = vmatprep.subr.mxu0 0.0
    %485 = vmatpush1.msra.mxu0 0.0
    %486 = vmatprep.subr.mxu0 0.0
    %487 = vmatpush1.msra.mxu0 0.0
    %488 = vmatprep.subr.mxu0 0.0
    %489 = vmatpush1.msra.mxu0 0.0
    %490 = vmatprep.subr.mxu0 0.0
    %491 = vmatpush1.msra.mxu0 0.0
    %492 = vmatprep.subr.mxu0 0.0
    %493 = vmatpush1.msra.mxu0 0.0
    %494 = vmatprep.subr.mxu0 0.0
    %495 = vmatpush1.msra.mxu0 0.0
    %496 = vmatprep.subr.mxu0 0.0
    %497 = vmatpush1.msra.mxu0 0.0
    %498 = vmatprep.subr.mxu0 0.0
    %499 = vmatpush1.msra.mxu0 0.0
    %500 = vmatprep.subr.mxu0 0.0
    %501 = vmatpush1.msra.mxu0 0.0
    %502 = vmatprep.subr.mxu0 0.0
    %503 = vmatpush1.msra.mxu0 0.0
    %504 = vmatprep.subr.mxu0 0.0
    %505 = vmatpush1.msra.mxu0 0.0
    %506 = vmatprep.subr.mxu0 0.0
    %507 = vmatpush1.msra.mxu0 0.0
    %508 = vmatprep.subr.mxu0 0.0
    %509 = vmatpush1.msra.mxu0 0.0
    %510 = vmatprep.subr.mxu0 0.0
    %511 = vmatpush1.msra.mxu0 0.0
    %512 = vmatprep.subr.mxu0 0.0
    %513 = vmatpush1.msra.mxu0 0.0
    %514 = vmatprep.subr.mxu0 0.0
    %515 = vmatpush1.msra.mxu0 0.0
    %516 = vmatprep.subr.mxu0 0.0
    %517 = vmatpush1.msra.mxu0 0.0
    %518 = vmatprep.subr.mxu0 0.0
    %519 = vmatpush1.msra.mxu0 0.0
    %520 = vmatprep.subr.mxu0 0.0
    %521 = vmatpush1.msra.mxu0 0.0
    %522 = vmatprep.subr.mxu0 0.0
    %523 = vmatpush1.msra.mxu0 0.0
    %524 = vmatprep.subr.mxu0 0.0
    %525 = vmatpush1.msra.mxu0 0.0
    %526 = vmatprep.mubr.f32.mxu0 0.0
    %527 = vmatmul.mubr.f32.gmra.mrb[0].mxu0 %v460
    %v528 = vpop.f32.mrb[0].mxu0
    %v529 = vadd.f32 0.0, %v528
    %v530 = vpop.f32.mrb[0].mxu0
    %531 = vdwg.mxu0
    %532 = vrot.lane.b32.xlu0 %v259, 64
    %v533 = vpop.permute.xlu0 %532
    %v536 = vsel %vm433, %v455, 0
    %538 = vmatprep.subr.mxu0 0.0
    %539 = vmatpush1.msra.mxu0 %v533
    %540 = vmatprep.subr.mxu0 0.0
    %541 = vmatpush1.msra.mxu0 0.0
    %542 = vmatprep.subr.mxu0 0.0
    %543 = vmatpush1.msra.mxu0 0.0
    %544 = vmatprep.subr.mxu0 0.0
    %545 = vmatpush1.msra.mxu0 0.0
    %546 = vmatprep.subr.mxu0 0.0
    %547 = vmatpush1.msra.mxu0 0.0
    %548 = vmatprep.subr.mxu0 0.0
    %549 = vmatpush1.msra.mxu0 0.0
    %550 = vmatprep.subr.mxu0 0.0
    %551 = vmatpush1.msra.mxu0 0.0
    %552 = vmatprep.subr.mxu0 0.0
    %553 = vmatpush1.msra.mxu0 0.0
    %554 = vmatprep.subr.mxu0 0.0
    %555 = vmatpush1.msra.mxu0 0.0
    %556 = vmatprep.subr.mxu0 0.0
    %557 = vmatpush1.msra.mxu0 0.0
    %558 = vmatprep.subr.mxu0 0.0
    %559 = vmatpush1.msra.mxu0 0.0
    %560 = vmatprep.subr.mxu0 0.0
    %561 = vmatpush1.msra.mxu0 0.0
    %562 = vmatprep.subr.mxu0 0.0
    %563 = vmatpush1.msra.mxu0 0.0
    %564 = vmatprep.subr.mxu0 0.0
    %565 = vmatpush1.msra.mxu0 0.0
    %566 = vmatprep.subr.mxu0 0.0
    %567 = vmatpush1.msra.mxu0 0.0
    %568 = vmatprep.subr.mxu0 0.0
    %569 = vmatpush1.msra.mxu0 0.0
    %570 = vmatprep.subr.mxu0 0.0
    %571 = vmatpush1.msra.mxu0 0.0
    %572 = vmatprep.subr.mxu0 0.0
    %573 = vmatpush1.msra.mxu0 0.0
    %574 = vmatprep.subr.mxu0 0.0
    %575 = vmatpush1.msra.mxu0 0.0
    %576 = vmatprep.subr.mxu0 0.0
    %577 = vmatpush1.msra.mxu0 0.0
    %578 = vmatprep.subr.mxu0 0.0
    %579 = vmatpush1.msra.mxu0 0.0
    %580 = vmatprep.subr.mxu0 0.0
    %581 = vmatpush1.msra.mxu0 0.0
    %582 = vmatprep.subr.mxu0 0.0
    %583 = vmatpush1.msra.mxu0 0.0
    %584 = vmatprep.subr.mxu0 0.0
    %585 = vmatpush1.msra.mxu0 0.0
    %586 = vmatprep.subr.mxu0 0.0
    %587 = vmatpush1.msra.mxu0 0.0
    %588 = vmatprep.subr.mxu0 0.0
    %589 = vmatpush1.msra.mxu0 0.0
    %590 = vmatprep.subr.mxu0 0.0
    %591 = vmatpush1.msra.mxu0 0.0
    %592 = vmatprep.subr.mxu0 0.0
    %593 = vmatpush1.msra.mxu0 0.0
    %594 = vmatprep.subr.mxu0 0.0
    %595 = vmatpush1.msra.mxu0 0.0
    %596 = vmatprep.subr.mxu0 0.0
    %597 = vmatpush1.msra.mxu0 0.0
    %598 = vmatprep.subr.mxu0 0.0
    %599 = vmatpush1.msra.mxu0 0.0
    %600 = vmatprep.subr.mxu0 0.0
    %601 = vmatpush1.msra.mxu0 0.0
    %602 = vmatprep.mubr.f32.mxu0 0.0
    %603 = vmatmul.mubr.f32.gmra.mrb[0].mxu0 %v536
    %v604 = vpop.f32.mrb[0].mxu0
    %v605 = vadd.f32 0.0, %v604
    %v606 = vpop.f32.mrb[0].mxu0
    %607 = vdwg.mxu0
    %608 = vrot.lane.b32.xlu0 %v254, 112
    %v609 = vpop.permute.xlu0 %608
    %610 = vrot.lane.b32.xlu0 %v254, 80
    %v611 = vpop.permute.xlu0 %610
    %v612 = vsel %vm265, %v609, 0
    %v614 = vsel %vm265, %v611, 0
    %616 = vmatprep.subr.mxu0 0.0
    %617 = vmatpush1.xpose.msra.mxu0 %v614
    %618 = vmatprep.subr.mxu0 0.0
    %619 = vmatpush1.xpose.msra.mxu0 0.0
    %620 = vmatprep.subr.mxu0 0.0
    %621 = vmatpush1.xpose.msra.mxu0 0.0
    %622 = vmatprep.subr.mxu0 0.0
    %623 = vmatpush1.xpose.msra.mxu0 0.0
    %624 = vmatprep.subr.mxu0 0.0
    %625 = vmatpush1.xpose.msra.mxu0 0.0
    %626 = vmatprep.subr.mxu0 0.0
    %627 = vmatpush1.xpose.msra.mxu0 0.0
    %628 = vmatprep.subr.mxu0 0.0
    %629 = vmatpush1.xpose.msra.mxu0 0.0
    %630 = vmatprep.subr.mxu0 0.0
    %631 = vmatpush1.xpose.msra.mxu0 0.0
    %632 = vmatprep.subr.mxu0 0.0
    %633 = vmatpush1.xpose.msra.mxu0 0.0
    %634 = vmatprep.subr.mxu0 0.0
    %635 = vmatpush1.xpose.msra.mxu0 0.0
    %636 = vmatprep.subr.mxu0 0.0
    %637 = vmatpush1.xpose.msra.mxu0 0.0
    %638 = vmatprep.subr.mxu0 0.0
    %639 = vmatpush1.xpose.msra.mxu0 0.0
    %640 = vmatprep.subr.mxu0 0.0
    %641 = vmatpush1.xpose.msra.mxu0 0.0
    %642 = vmatprep.subr.mxu0 0.0
    %643 = vmatpush1.xpose.msra.mxu0 0.0
    %644 = vmatprep.subr.mxu0 0.0
    %645 = vmatpush1.xpose.msra.mxu0 0.0
    %646 = vmatprep.subr.mxu0 0.0
    %647 = vmatpush1.xpose.msra.mxu0 0.0
    %648 = vmatprep.subr.mxu0 0.0
    %649 = vmatpush1.xpose.msra.mxu0 0.0
    %650 = vmatprep.subr.mxu0 0.0
    %651 = vmatpush1.xpose.msra.mxu0 0.0
    %652 = vmatprep.subr.mxu0 0.0
    %653 = vmatpush1.xpose.msra.mxu0 0.0
    %654 = vmatprep.subr.mxu0 0.0
    %655 = vmatpush1.xpose.msra.mxu0 0.0
    %656 = vmatprep.subr.mxu0 0.0
    %657 = vmatpush1.xpose.msra.mxu0 0.0
    %658 = vmatprep.subr.mxu0 0.0
    %659 = vmatpush1.xpose.msra.mxu0 0.0
    %660 = vmatprep.subr.mxu0 0.0
    %661 = vmatpush1.xpose.msra.mxu0 0.0
    %662 = vmatprep.subr.mxu0 0.0
    %663 = vmatpush1.xpose.msra.mxu0 0.0
    %664 = vmatprep.subr.mxu0 0.0
    %665 = vmatpush1.xpose.msra.mxu0 0.0
    %666 = vmatprep.subr.mxu0 0.0
    %667 = vmatpush1.xpose.msra.mxu0 0.0
    %668 = vmatprep.subr.mxu0 0.0
    %669 = vmatpush1.xpose.msra.mxu0 0.0
    %670 = vmatprep.subr.mxu0 0.0
    %671 = vmatpush1.xpose.msra.mxu0 0.0
    %672 = vmatprep.subr.mxu0 0.0
    %673 = vmatpush1.xpose.msra.mxu0 0.0
    %674 = vmatprep.subr.mxu0 0.0
    %675 = vmatpush1.xpose.msra.mxu0 0.0
    %676 = vmatprep.subr.mxu0 0.0
    %677 = vmatpush1.xpose.msra.mxu0 0.0
    %678 = vmatprep.subr.mxu0 0.0
    %679 = vmatpush1.xpose.msra.mxu0 0.0
    %680 = vmatprep.mubr.f32.mxu0 0.0
    %681 = vmatmul.mubr.f32.gmra.mrb[0].mxu0 %v612
    %v682 = vpop.f32.mrb[0].mxu0
    %v683 = vadd.f32 0.0, %v682
    %v684 = vpop.f32.mrb[0].mxu0
    %685 = vdwg.mxu0
    %686 = vrot.lane.b32.xlu0 %v259, 112
    %v687 = vpop.permute.xlu0 %686
    %688 = vrot.lane.b32.xlu0 %v259, 80
    %v689 = vpop.permute.xlu0 %688
    %v690 = vsel %vm265, %v687, 0
    %v692 = vsel %vm265, %v689, 0
    %694 = vmatprep.subr.mxu0 0.0
    %695 = vmatpush1.xpose.msra.mxu0 %v692
    %696 = vmatprep.subr.mxu0 0.0
    %697 = vmatpush1.xpose.msra.mxu0 0.0
    %698 = vmatprep.subr.mxu0 0.0
    %699 = vmatpush1.xpose.msra.mxu0 0.0
    %700 = vmatprep.subr.mxu0 0.0
    %701 = vmatpush1.xpose.msra.mxu0 0.0
    %702 = vmatprep.subr.mxu0 0.0
    %703 = vmatpush1.xpose.msra.mxu0 0.0
    %704 = vmatprep.subr.mxu0 0.0
    %705 = vmatpush1.xpose.msra.mxu0 0.0
    %706 = vmatprep.subr.mxu0 0.0
    %707 = vmatpush1.xpose.msra.mxu0 0.0
    %708 = vmatprep.subr.mxu0 0.0
    %709 = vmatpush1.xpose.msra.mxu0 0.0
    %710 = vmatprep.subr.mxu0 0.0
    %711 = vmatpush1.xpose.msra.mxu0 0.0
    %712 = vmatprep.subr.mxu0 0.0
    %713 = vmatpush1.xpose.msra.mxu0 0.0
    %714 = vmatprep.subr.mxu0 0.0
    %715 = vmatpush1.xpose.msra.mxu0 0.0
    %716 = vmatprep.subr.mxu0 0.0
    %717 = vmatpush1.xpose.msra.mxu0 0.0
    %718 = vmatprep.subr.mxu0 0.0
    %719 = vmatpush1.xpose.msra.mxu0 0.0
    %720 = vmatprep.subr.mxu0 0.0
    %721 = vmatpush1.xpose.msra.mxu0 0.0
    %722 = vmatprep.subr.mxu0 0.0
    %723 = vmatpush1.xpose.msra.mxu0 0.0
    %724 = vmatprep.subr.mxu0 0.0
    %725 = vmatpush1.xpose.msra.mxu0 0.0
    %726 = vmatprep.subr.mxu0 0.0
    %727 = vmatpush1.xpose.msra.mxu0 0.0
    %728 = vmatprep.subr.mxu0 0.0
    %729 = vmatpush1.xpose.msra.mxu0 0.0
    %730 = vmatprep.subr.mxu0 0.0
    %731 = vmatpush1.xpose.msra.mxu0 0.0
    %732 = vmatprep.subr.mxu0 0.0
    %733 = vmatpush1.xpose.msra.mxu0 0.0
    %734 = vmatprep.subr.mxu0 0.0
    %735 = vmatpush1.xpose.msra.mxu0 0.0
    %736 = vmatprep.subr.mxu0 0.0
    %737 = vmatpush1.xpose.msra.mxu0 0.0
    %738 = vmatprep.subr.mxu0 0.0
    %739 = vmatpush1.xpose.msra.mxu0 0.0
    %740 = vmatprep.subr.mxu0 0.0
    %741 = vmatpush1.xpose.msra.mxu0 0.0
    %742 = vmatprep.subr.mxu0 0.0
    %743 = vmatpush1.xpose.msra.mxu0 0.0
    %744 = vmatprep.subr.mxu0 0.0
    %745 = vmatpush1.xpose.msra.mxu0 0.0
    %746 = vmatprep.subr.mxu0 0.0
    %747 = vmatpush1.xpose.msra.mxu0 0.0
    %748 = vmatprep.subr.mxu0 0.0
    %749 = vmatpush1.xpose.msra.mxu0 0.0
    %750 = vmatprep.subr.mxu0 0.0
    %751 = vmatpush1.xpose.msra.mxu0 0.0
    %752 = vmatprep.subr.mxu0 0.0
    %753 = vmatpush1.xpose.msra.mxu0 0.0
    %754 = vmatprep.subr.mxu0 0.0
    %755 = vmatpush1.xpose.msra.mxu0 0.0
    %756 = vmatprep.subr.mxu0 0.0
    %757 = vmatpush1.xpose.msra.mxu0 0.0
    %758 = vmatprep.mubr.f32.mxu0 0.0
    %759 = vmatmul.mubr.f32.gmra.mrb[0].mxu0 %v690
    %v760 = vpop.f32.mrb[0].mxu0
    %v761 = vadd.f32 0.0, %v760
    %v762 = vpop.f32.mrb[0].mxu0
    %763 = vdwg.mxu0
    %v764 = vmul.f32 %v683, 0.25
    %v765 = vmul.f32 %v761, 0.25
    %v766 = vadd.f32 %v764, %v424
    %v767 = vadd.f32 %v765, %v428
    %v768 = vsel %vm433, %v766, -inf
    %769 = vmax.xlane.f32.xlu0 %v768
    %v770 = vpop.xlane.xlu0 %769
    %v771 = vsel %vm433, %v767, -inf
    %772 = vmax.xlane.f32.xlu0 %v771
    %v773 = vpop.xlane.xlu0 %772
    %v774 = vsub.f32 %v766, %v770
    %v775 = vsub.f32 %v767, %v773
    %v776 = vmul.f32 %v774, 1.442695
    %v777 = vpow.pop %v776
    %v778 = vmul.f32 %v775, 1.442695
    %v779 = vpow.pop %v778
    %v780 = vsel %vm433, %v777, 0.0
    %781 = vadd.xlane.f32.xlu0 %v780
    %v782 = vpop.xlane.xlu0 %781
    %v783 = vsel %vm433, %v779, 0.0
    %784 = vadd.xlane.f32.xlu0 %v783
    %v785 = vpop.xlane.xlu0 %784
    %v786 = vrcp.pop %v782
    %v787 = vrcp.pop %v785
    %v788 = vmul.f32 %v777, %v786
    %v789 = vmul.f32 %v779, %v787
    %790 = vrot.lane.b32.xlu0 %v254, 48
    %v791 = vpop.permute.xlu0 %790
    %v794 = vsel %vm433, %v788, 0
    %796 = vmatprep.subr.mxu0 0.0
    %797 = vmatpush1.msra.mxu0 %v791
    %798 = vmatprep.subr.mxu0 0.0
    %799 = vmatpush1.msra.mxu0 0.0
    %800 = vmatprep.subr.mxu0 0.0
    %801 = vmatpush1.msra.mxu0 0.0
    %802 = vmatprep.subr.mxu0 0.0
    %803 = vmatpush1.msra.mxu0 0.0
    %804 = vmatprep.subr.mxu0 0.0
    %805 = vmatpush1.msra.mxu0 0.0
    %806 = vmatprep.subr.mxu0 0.0
    %807 = vmatpush1.msra.mxu0 0.0
    %808 = vmatprep.subr.mxu0 0.0
    %809 = vmatpush1.msra.mxu0 0.0
    %810 = vmatprep.subr.mxu0 0.0
    %811 = vmatpush1.msra.mxu0 0.0
    %812 = vmatprep.subr.mxu0 0.0
    %813 = vmatpush1.msra.mxu0 0.0
    %814 = vmatprep.subr.mxu0 0.0
    %815 = vmatpush1.msra.mxu0 0.0
    %816 = vmatprep.subr.mxu0 0.0
    %817 = vmatpush1.msra.mxu0 0.0
    %818 = vmatprep.subr.mxu0 0.0
    %819 = vmatpush1.msra.mxu0 0.0
    %820 = vmatprep.subr.mxu0 0.0
    %821 = vmatpush1.msra.mxu0 0.0
    %822 = vmatprep.subr.mxu0 0.0
    %823 = vmatpush1.msra.mxu0 0.0
    %824 = vmatprep.subr.mxu0 0.0
    %825 = vmatpush1.msra.mxu0 0.0
    %826 = vmatprep.subr.mxu0 0.0
    %827 = vmatpush1.msra.mxu0 0.0
    %828 = vmatprep.subr.mxu0 0.0
    %829 = vmatpush1.msra.mxu0 0.0
    %830 = vmatprep.subr.mxu0 0.0
    %831 = vmatpush1.msra.mxu0 0.0
    %832 = vmatprep.subr.mxu0 0.0
    %833 = vmatpush1.msra.mxu0 0.0
    %834 = vmatprep.subr.mxu0 0.0
    %835 = vmatpush1.msra.mxu0 0.0
    %836 = vmatprep.subr.mxu0 0.0
    %837 = vmatpush1.msra.mxu0 0.0
    %838 = vmatprep.subr.mxu0 0.0
    %839 = vmatpush1.msra.mxu0 0.0
    %840 = vmatprep.subr.mxu0 0.0
    %841 = vmatpush1.msra.mxu0 0.0
    %842 = vmatprep.subr.mxu0 0.0
    %843 = vmatpush1.msra.mxu0 0.0
    %844 = vmatprep.subr.mxu0 0.0
    %845 = vmatpush1.msra.mxu0 0.0
    %846 = vmatprep.subr.mxu0 0.0
    %847 = vmatpush1.msra.mxu0 0.0
    %848 = vmatprep.subr.mxu0 0.0
    %849 = vmatpush1.msra.mxu0 0.0
    %850 = vmatprep.subr.mxu0 0.0
    %851 = vmatpush1.msra.mxu0 0.0
    %852 = vmatprep.subr.mxu0 0.0
    %853 = vmatpush1.msra.mxu0 0.0
    %854 = vmatprep.subr.mxu0 0.0
    %855 = vmatpush1.msra.mxu0 0.0
    %856 = vmatprep.subr.mxu0 0.0
    %857 = vmatpush1.msra.mxu0 0.0
    %858 = vmatprep.subr.mxu0 0.0
    %859 = vmatpush1.msra.mxu0 0.0
    %860 = vmatprep.mubr.f32.mxu0 0.0
    %861 = vmatmul.mubr.f32.gmra.mrb[0].mxu0 %v794
    %v862 = vpop.f32.mrb[0].mxu0
    %v863 = vadd.f32 0.0, %v862
    %v864 = vpop.f32.mrb[0].mxu0
    %865 = vdwg.mxu0
    %866 = vrot.lane.b32.xlu0 %v259, 48
    %v867 = vpop.permute.xlu0 %866
    %v870 = vsel %vm433, %v789, 0
    %872 = vmatprep.subr.mxu0 0.0
    %873 = vmatpush1.msra.mxu0 %v867
    %874 = vmatprep.subr.mxu0 0.0
    %875 = vmatpush1.msra.mxu0 0.0
    %876 = vmatprep.subr.mxu0 0.0
    %877 = vmatpush1.msra.mxu0 0.0
    %878 = vmatprep.subr.mxu0 0.0
    %879 = vmatpush1.msra.mxu0 0.0
    %880 = vmatprep.subr.mxu0 0.0
    %881 = vmatpush1.msra.mxu0 0.0
    %882 = vmatprep.subr.mxu0 0.0
    %883 = vmatpush1.msra.mxu0 0.0
    %884 = vmatprep.subr.mxu0 0.0
    %885 = vmatpush1.msra.mxu0 0.0
    %886 = vmatprep.subr.mxu0 0.0
    %887 = vmatpush1.msra.mxu0 0.0
    %888 = vmatprep.subr.mxu0 0.0
    %889 = vmatpush1.msra.mxu0 0.0
    %890 = vmatprep.subr.mxu0 0.0
    %891 = vmatpush1.msra.mxu0 0.0
    %892 = vmatprep.subr.mxu0 0.0
    %893 = vmatpush1.msra.mxu0 0.0
    %894 = vmatprep.subr.mxu0 0.0
    %895 = vmatpush1.msra.mxu0 0.0
    %896 = vmatprep.subr.mxu0 0.0
    %897 = vmatpush1.msra.mxu0 0.0
    %898 = vmatprep.subr.mxu0 0.0
    %899 = vmatpush1.msra.mxu0 0.0
    %900 = vmatprep.subr.mxu0 0.0
    %901 = vmatpush1.msra.mxu0 0.0
    %902 = vmatprep.subr.mxu0 0.0
    %903 = vmatpush1.msra.mxu0 0.0
    %904 = vmatprep.subr.mxu0 0.0
    %905 = vmatpush1.msra.mxu0 0.0
    %906 = vmatprep.subr.mxu0 0.0
    %907 = vmatpush1.msra.mxu0 0.0
    %908 = vmatprep.subr.mxu0 0.0
    %909 = vmatpush1.msra.mxu0 0.0
    %910 = vmatprep.subr.mxu0 0.0
    %911 = vmatpush1.msra.mxu0 0.0
    %912 = vmatprep.subr.mxu0 0.0
    %913 = vmatpush1.msra.mxu0 0.0
    %914 = vmatprep.subr.mxu0 0.0
    %915 = vmatpush1.msra.mxu0 0.0
    %916 = vmatprep.subr.mxu0 0.0
    %917 = vmatpush1.msra.mxu0 0.0
    %918 = vmatprep.subr.mxu0 0.0
    %919 = vmatpush1.msra.mxu0 0.0
    %920 = vmatprep.subr.mxu0 0.0
    %921 = vmatpush1.msra.mxu0 0.0
    %922 = vmatprep.subr.mxu0 0.0
    %923 = vmatpush1.msra.mxu0 0.0
    %924 = vmatprep.subr.mxu0 0.0
    %925 = vmatpush1.msra.mxu0 0.0
    %926 = vmatprep.subr.mxu0 0.0
    %927 = vmatpush1.msra.mxu0 0.0
    %928 = vmatprep.subr.mxu0 0.0
    %929 = vmatpush1.msra.mxu0 0.0
    %930 = vmatprep.subr.mxu0 0.0
    %931 = vmatpush1.msra.mxu0 0.0
    %932 = vmatprep.subr.mxu0 0.0
    %933 = vmatpush1.msra.mxu0 0.0
    %934 = vmatprep.subr.mxu0 0.0
    %935 = vmatpush1.msra.mxu0 0.0
    %936 = vmatprep.mubr.f32.mxu0 0.0
    %937 = vmatmul.mubr.f32.gmra.mrb[0].mxu0 %v870
    %v938 = vpop.f32.mrb[0].mxu0
    %v939 = vadd.f32 0.0, %v938
    %v940 = vpop.f32.mrb[0].mxu0
    %941 = vdwg.mxu0
    %944 = vrot.lane.b32.xlu0 %v863, 16
    %v945 = vpop.permute.xlu0 %944
    %946 = vrot.lane.b32.xlu0 %v939, 16
    %v947 = vpop.permute.xlu0 %946
    %v950 = vsel %vm265, %v529, %v945
    %v951 = vsel %vm265, %v605, %v947
    %v952 = vld [vmem:[#allocation10] sm:$0xff]
    %v953 = vld [vmem:[#allocation10 + $0x8] sm:$0xff]
    %v954 = vld [vmem:[#allocation10 + $0x10] sm:$0xff]
    %v955 = vld [vmem:[#allocation10 + $0x18] sm:$0xff]
    %v956 = vld [vmem:[%s8] sm:$0x1]
    %v958 = vlaneseq
    %v959 = vshrl.u32 %v958, 7
    %v960 = vsub.s32 0, %v959
    %v961 = vrot.slane %v956, %v960
    %v964 = vsel %vm180, %v950, 0
    %v967 = vsel %vm180, %v951, 0
    %969 = vmatprep.subr.mxu0 0.0
    %970 = vmatpush1.msra.mxu0 %v952
    %971 = vmatprep.subr.mxu0 0.0
    %972 = vmatpush1.msra.mxu0 %v953
    %973 = vmatprep.subr.mxu0 0.0
    %974 = vmatpush1.msra.mxu0 %v954
    %975 = vmatprep.subr.mxu0 0.0
    %976 = vmatpush1.msra.mxu0 %v955
    %977 = vmatprep.subr.mxu0 0.0
    %978 = vmatpush1.msra.mxu0 0.0
    %979 = vmatprep.subr.mxu0 0.0
    %980 = vmatpush1.msra.mxu0 0.0
    %981 = vmatprep.subr.mxu0 0.0
    %982 = vmatpush1.msra.mxu0 0.0
    %983 = vmatprep.subr.mxu0 0.0
    %984 = vmatpush1.msra.mxu0 0.0
    %985 = vmatprep.subr.mxu0 0.0
    %986 = vmatpush1.msra.mxu0 0.0
    %987 = vmatprep.subr.mxu0 0.0
    %988 = vmatpush1.msra.mxu0 0.0
    %989 = vmatprep.subr.mxu0 0.0
    %990 = vmatpush1.msra.mxu0 0.0
    %991 = vmatprep.subr.mxu0 0.0
    %992 = vmatpush1.msra.mxu0 0.0
    %993 = vmatprep.subr.mxu0 0.0
    %994 = vmatpush1.msra.mxu0 0.0
    %995 = vmatprep.subr.mxu0 0.0
    %996 = vmatpush1.msra.mxu0 0.0
    %997 = vmatprep.subr.mxu0 0.0
    %998 = vmatpush1.msra.mxu0 0.0
    %999 = vmatprep.subr.mxu0 0.0
    %1000 = vmatpush1.msra.mxu0 0.0
    %1001 = vmatprep.subr.mxu0 0.0
    %1002 = vmatpush1.msra.mxu0 0.0
    %1003 = vmatprep.subr.mxu0 0.0
    %1004 = vmatpush1.msra.mxu0 0.0
    %1005 = vmatprep.subr.mxu0 0.0
    %1006 = vmatpush1.msra.mxu0 0.0
    %1007 = vmatprep.subr.mxu0 0.0
    %1008 = vmatpush1.msra.mxu0 0.0
    %1009 = vmatprep.subr.mxu0 0.0
    %1010 = vmatpush1.msra.mxu0 0.0
    %1011 = vmatprep.subr.mxu0 0.0
    %1012 = vmatpush1.msra.mxu0 0.0
    %1013 = vmatprep.subr.mxu0 0.0
    %1014 = vmatpush1.msra.mxu0 0.0
    %1015 = vmatprep.subr.mxu0 0.0
    %1016 = vmatpush1.msra.mxu0 0.0
    %1017 = vmatprep.subr.mxu0 0.0
    %1018 = vmatpush1.msra.mxu0 0.0
    %1019 = vmatprep.subr.mxu0 0.0
    %1020 = vmatpush1.msra.mxu0 0.0
    %1021 = vmatprep.subr.mxu0 0.0
    %1022 = vmatpush1.msra.mxu0 0.0
    %1023 = vmatprep.subr.mxu0 0.0
    %1024 = vmatpush1.msra.mxu0 0.0
    %1025 = vmatprep.subr.mxu0 0.0
    %1026 = vmatpush1.msra.mxu0 0.0
    %1027 = vmatprep.subr.mxu0 0.0
    %1028 = vmatpush1.msra.mxu0 0.0
    %1029 = vmatprep.subr.mxu0 0.0
    %1030 = vmatpush1.msra.mxu0 0.0
    %1031 = vmatprep.subr.mxu0 0.0
    %1032 = vmatpush1.msra.mxu0 0.0
    %1033 = vmatprep.mubr.f32.mxu0 0.0
    %1034 = vmatmul.mubr.f32.gmra.mrb[0].mxu0 %v964
    %v1035 = vpop.f32.mrb[0].mxu0
    %v1036 = vadd.f32 %v961, %v1035
    %v1037 = vpop.f32.mrb[0].mxu0
    %1038 = vmatprep.mubr.f32.mxu0 0.0
    %1039 = vmatmul.mubr.f32.gmra.mrb[0].mxu0 %v967
    %v1040 = vpop.f32.mrb[0].mxu0
    %v1041 = vadd.f32 %v961, %v1040
    %v1042 = vpop.f32.mrb[0].mxu0
    %1043 = vdwg.mxu0
    %v1044 = vadd.f32 %v165, %v1036
    %v1045 = vadd.f32 %v166, %v1041
    %v1046 = vld [vmem:[%s9] sm:$0x1]
    %v1047 = vld [vmem:[%s10] sm:$0x1]
    %v1048 = vsel %vm180, %v1044, 0.0
    %1049 = vadd.xlane.f32.xlu0 %v1048
    %v1050 = vpop.xlane.xlu0 %1049
    %v1051 = vsel %vm180, %v1045, 0.0
    %1052 = vadd.xlane.f32.xlu0 %v1051
    %v1053 = vpop.xlane.xlu0 %1052
    %v1054 = vrcp.pop 32.0
    %v1055 = vmul.f32 %v1050, %v1054
    %v1056 = vmul.f32 %v1053, %v1054
    %v1057 = vsub.f32 %v1044, %v1055
    %v1058 = vsub.f32 %v1045, %v1056
    %v1059 = vmul.f32 %v1057, %v1057
    %v1060 = vmul.f32 %v1058, %v1058
    %v1061 = vsel %vm180, %v1059, 0.0
    %1062 = vadd.xlane.f32.xlu0 %v1061
    %v1063 = vpop.xlane.xlu0 %1062
    %v1064 = vsel %vm180, %v1060, 0.0
    %1065 = vadd.xlane.f32.xlu0 %v1064
    %v1066 = vpop.xlane.xlu0 %1065
    %v1067 = vmul.f32 %v1063, %v1054
    %v1068 = vmul.f32 %v1066, %v1054
    %v1069 = vadd.f32 %v1067, 1e-12
    %v1070 = vadd.f32 %v1068, 1e-12
    %v1071 = vrsqrt.pop %v1069
    %v1072 = vrsqrt.pop %v1070
    %v1073 = vmul.f32 %v1057, %v1071
    %v1074 = vmul.f32 %v1058, %v1072
    %v1076 = vlaneseq
    %v1077 = vshrl.u32 %v1076, 7
    %v1078 = vsub.s32 0, %v1077
    %v1079 = vrot.slane %v1046, %v1078
    %v1081 = vmul.f32 %v1073, %v1079
    %v1082 = vmul.f32 %v1074, %v1079
    %v1084 = vlaneseq
    %v1085 = vshrl.u32 %v1084, 7
    %v1086 = vsub.s32 0, %v1085
    %v1087 = vrot.slane %v1047, %v1086
    %v1089 = vadd.f32 %v1081, %v1087
    %v1090 = vadd.f32 %v1082, %v1087
    %v1091 = vld [vmem:[#allocation12] sm:$0xff]
    %v1092 = vld [vmem:[#allocation12 + $0x8] sm:$0xff]
    %v1093 = vld [vmem:[#allocation12 + $0x10] sm:$0xff]
    %v1094 = vld [vmem:[#allocation12 + $0x18] sm:$0xff]
    %v1095 = vld [vmem:[%s12] sm:$0x1]
    %v1097 = vlaneseq
    %v1098 = vshrl.u32 %v1097, 7
    %v1099 = vsub.s32 0, %v1098
    %v1100 = vrot.slane %v1095, %v1099
    %v1103 = vsel %vm180, %v1089, 0
    %v1106 = vsel %vm180, %v1090, 0
    %1108 = vmatprep.subr.mxu0 0.0
    %1109 = vmatpush1.msra.mxu0 %v1091
    %1110 = vmatprep.subr.mxu0 0.0
    %1111 = vmatpush1.msra.mxu0 %v1092
    %1112 = vmatprep.subr.mxu0 0.0
    %1113 = vmatpush1.msra.mxu0 %v1093
    %1114 = vmatprep.subr.mxu0 0.0
    %1115 = vmatpush1.msra.mxu0 %v1094
    %1116 = vmatprep.subr.mxu0 0.0
    %1117 = vmatpush1.msra.mxu0 0.0
    %1118 = vmatprep.subr.mxu0 0.0
    %1119 = vmatpush1.msra.mxu0 0.0
    %1120 = vmatprep.subr.mxu0 0.0
    %1121 = vmatpush1.msra.mxu0 0.0
    %1122 = vmatprep.subr.mxu0 0.0
    %1123 = vmatpush1.msra.mxu0 0.0
    %1124 = vmatprep.subr.mxu0 0.0
    %1125 = vmatpush1.msra.mxu0 0.0
    %1126 = vmatprep.subr.mxu0 0.0
    %1127 = vmatpush1.msra.mxu0 0.0
    %1128 = vmatprep.subr.mxu0 0.0
    %1129 = vmatpush1.msra.mxu0 0.0
    %1130 = vmatprep.subr.mxu0 0.0
    %1131 = vmatpush1.msra.mxu0 0.0
    %1132 = vmatprep.subr.mxu0 0.0
    %1133 = vmatpush1.msra.mxu0 0.0
    %1134 = vmatprep.subr.mxu0 0.0
    %1135 = vmatpush1.msra.mxu0 0.0
    %1136 = vmatprep.subr.mxu0 0.0
    %1137 = vmatpush1.msra.mxu0 0.0
    %1138 = vmatprep.subr.mxu0 0.0
    %1139 = vmatpush1.msra.mxu0 0.0
    %1140 = vmatprep.subr.mxu0 0.0
    %1141 = vmatpush1.msra.mxu0 0.0
    %1142 = vmatprep.subr.mxu0 0.0
    %1143 = vmatpush1.msra.mxu0 0.0
    %1144 = vmatprep.subr.mxu0 0.0
    %1145 = vmatpush1.msra.mxu0 0.0
    %1146 = vmatprep.subr.mxu0 0.0
    %1147 = vmatpush1.msra.mxu0 0.0
    %1148 = vmatprep.subr.mxu0 0.0
    %1149 = vmatpush1.msra.mxu0 0.0
    %1150 = vmatprep.subr.mxu0 0.0
    %1151 = vmatpush1.msra.mxu0 0.0
    %1152 = vmatprep.subr.mxu0 0.0
    %1153 = vmatpush1.msra.mxu0 0.0
    %1154 = vmatprep.subr.mxu0 0.0
    %1155 = vmatpush1.msra.mxu0 0.0
    %1156 = vmatprep.subr.mxu0 0.0
    %1157 = vmatpush1.msra.mxu0 0.0
    %1158 = vmatprep.subr.mxu0 0.0
    %1159 = vmatpush1.msra.mxu0 0.0
    %1160 = vmatprep.subr.mxu0 0.0
    %1161 = vmatpush1.msra.mxu0 0.0
    %1162 = vmatprep.subr.mxu0 0.0
    %1163 = vmatpush1.msra.mxu0 0.0
    %1164 = vmatprep.subr.mxu0 0.0
    %1165 = vmatpush1.msra.mxu0 0.0
    %1166 = vmatprep.subr.mxu0 0.0
    %1167 = vmatpush1.msra.mxu0 0.0
    %1168 = vmatprep.subr.mxu0 0.0
    %1169 = vmatpush1.msra.mxu0 0.0
    %1170 = vmatprep.subr.mxu0 0.0
    %1171 = vmatpush1.msra.mxu0 0.0
    %1172 = vmatprep.mubr.f32.mxu0 0.0
    %1173 = vmatmul.mubr.f32.gmra.mrb[0].mxu0 %v1103
    %v1174 = vpop.f32.mrb[0].mxu0
    %v1175 = vadd.f32 %v1100, %v1174
    %v1176 = vpop.f32.mrb[0].mxu0
    %1177 = vmatprep.mubr.f32.mxu0 0.0
    %1178 = vmatmul.mubr.f32.gmra.mrb[0].mxu0 %v1106
    %v1179 = vpop.f32.mrb[0].mxu0
    %v1180 = vadd.f32 %v1100, %v1179
    %v1181 = vpop.f32.mrb[0].mxu0
    %1182 = vdwg.mxu0
    %v1183 = vmul.f32 %v1175, %v1175
    %v1184 = vmul.f32 %v1180, %v1180
    %v1185 = vmul.f32 %v1175, %v1183
    %v1186 = vmul.f32 %v1180, %v1184
    %v1187 = vmul.f32 %v1185, 0.044715
    %v1188 = vmul.f32 %v1186, 0.044715
    %v1189 = vadd.f32 %v1175, %v1187
    %v1190 = vadd.f32 %v1180, %v1188
    %v1191 = vmul.f32 %v1189, 0.7978846
    %v1192 = vmul.f32 %v1190, 0.7978846
    %v1193 = vtanh.pop %v1191
    %v1194 = vtanh.pop %v1192
    %v1195 = vadd.f32 %v1193, 1.0
    %v1196 = vadd.f32 %v1194, 1.0
    %v1197 = vmul.f32 %v1195, 0.5
    %v1198 = vmul.f32 %v1196, 0.5
    %v1199 = vmul.f32 %v1175, %v1197
    %v1200 = vmul.f32 %v1180, %v1198
    %v1201 = vld [vmem:[%s13] sm:$0xff]
    %v1202 = vld [vmem:[%s13 + $0x8] sm:$0xff]
    %v1203 = vld [vmem:[%s13 + $0x10] sm:$0xff]
    %v1204 = vld [vmem:[%s13 + $0x18] sm:$0xff]
    %v1205 = vld [vmem:[%s13 + $0x20] sm:$0xff]
    %v1206 = vld [vmem:[%s13 + $0x28] sm:$0xff]
    %v1207 = vld [vmem:[%s13 + $0x30] sm:$0xff]
    %v1208 = vld [vmem:[%s13 + $0x38] sm:$0xff]
    %v1209 = vld [vmem:[%s13 + $0x40] sm:$0xff]
    %v1210 = vld [vmem:[%s13 + $0x48] sm:$0xff]
    %v1211 = vld [vmem:[%s13 + $0x50] sm:$0xff]
    %v1212 = vld [vmem:[%s13 + $0x58] sm:$0xff]
    %v1213 = vld [vmem:[%s13 + $0x60] sm:$0xff]
    %v1214 = vld [vmem:[%s13 + $0x68] sm:$0xff]
    %v1215 = vld [vmem:[%s13 + $0x70] sm:$0xff]
    %v1216 = vld [vmem:[%s13 + $0x78] sm:$0xff]
    %v1217 = vld [vmem:[%s14] sm:$0x1]
    %v1219 = vlaneseq
    %v1220 = vshrl.u32 %v1219, 7
    %v1221 = vsub.s32 0, %v1220
    %v1222 = vrot.slane %v1217, %v1221
    %1224 = vmatprep.subr.mxu0 0.0
    %1225 = vmatpush1.msra.mxu0 %v1201
    %1226 = vmatprep.subr.mxu0 0.0
    %1227 = vmatpush1.msra.mxu0 %v1202
    %1228 = vmatprep.subr.mxu0 0.0
    %1229 = vmatpush1.msra.mxu0 %v1203
    %1230 = vmatprep.subr.mxu0 0.0
    %1231 = vmatpush1.msra.mxu0 %v1204
    %1232 = vmatprep.subr.mxu0 0.0
    %1233 = vmatpush1.msra.mxu0 %v1205
    %1234 = vmatprep.subr.mxu0 0.0
    %1235 = vmatpush1.msra.mxu0 %v1206
    %1236 = vmatprep.subr.mxu0 0.0
    %1237 = vmatpush1.msra.mxu0 %v1207
    %1238 = vmatprep.subr.mxu0 0.0
    %1239 = vmatpush1.msra.mxu0 %v1208
    %1240 = vmatprep.subr.mxu0 0.0
    %1241 = vmatpush1.msra.mxu0 %v1209
    %1242 = vmatprep.subr.mxu0 0.0
    %1243 = vmatpush1.msra.mxu0 %v1210
    %1244 = vmatprep.subr.mxu0 0.0
    %1245 = vmatpush1.msra.mxu0 %v1211
    %1246 = vmatprep.subr.mxu0 0.0
    %1247 = vmatpush1.msra.mxu0 %v1212
    %1248 = vmatprep.subr.mxu0 0.0
    %1249 = vmatpush1.msra.mxu0 %v1213
    %1250 = vmatprep.subr.mxu0 0.0
    %1251 = vmatpush1.msra.mxu0 %v1214
    %1252 = vmatprep.subr.mxu0 0.0
    %1253 = vmatpush1.msra.mxu0 %v1215
    %1254 = vmatprep.subr.mxu0 0.0
    %1255 = vmatpush1.msra.mxu0 %v1216
    %1256 = vmatprep.subr.mxu0 0.0
    %1257 = vmatpush1.msra.mxu0 0.0
    %1258 = vmatprep.subr.mxu0 0.0
    %1259 = vmatpush1.msra.mxu0 0.0
    %1260 = vmatprep.subr.mxu0 0.0
    %1261 = vmatpush1.msra.mxu0 0.0
    %1262 = vmatprep.subr.mxu0 0.0
    %1263 = vmatpush1.msra.mxu0 0.0
    %1264 = vmatprep.subr.mxu0 0.0
    %1265 = vmatpush1.msra.mxu0 0.0
    %1266 = vmatprep.subr.mxu0 0.0
    %1267 = vmatpush1.msra.mxu0 0.0
    %1268 = vmatprep.subr.mxu0 0.0
    %1269 = vmatpush1.msra.mxu0 0.0
    %1270 = vmatprep.subr.mxu0 0.0
    %1271 = vmatpush1.msra.mxu0 0.0
    %1272 = vmatprep.subr.mxu0 0.0
    %1273 = vmatpush1.msra.mxu0 0.0
    %1274 = vmatprep.subr.mxu0 0.0
    %1275 = vmatpush1.msra.mxu0 0.0
    %1276 = vmatprep.subr.mxu0 0.0
    %1277 = vmatpush1.msra.mxu0 0.0
    %1278 = vmatprep.subr.mxu0 0.0
    %1279 = vmatpush1.msra.mxu0 0.0
    %1280 = vmatprep.subr.mxu0 0.0
    %1281 = vmatpush1.msra.mxu0 0.0
    %1282 = vmatprep.subr.mxu0 0.0
    %1283 = vmatpush1.msra.mxu0 0.0
    %1284 = vmatprep.subr.mxu0 0.0
    %1285 = vmatpush1.msra.mxu0 0.0
    %1286 = vmatprep.subr.mxu0 0.0
    %1287 = vmatpush1.msra.mxu0 0.0
    %1288 = vmatprep.mubr.f32.mxu0 0.0
    %1289 = vmatmul.mubr.f32.gmra.mrb[0].mxu0 %v1199
    %v1290 = vpop.f32.mrb[0].mxu0
    %v1291 = vadd.f32 %v1222, %v1290
    %v1292 = vpop.f32.mrb[0].mxu0
    %1293 = vmatprep.mubr.f32.mxu0 0.0
    %1294 = vmatmul.mubr.f32.gmra.mrb[0].mxu0 %v1200
    %v1295 = vpop.f32.mrb[0].mxu0
    %v1296 = vadd.f32 %v1222, %v1295
    %v1297 = vpop.f32.mrb[0].mxu0
    %1298 = vdwg.mxu0
    %v1299 = vadd.f32 %v1089, %v1291
    %v1300 = vadd.f32 %v1090, %v1296
    %v1301 = vld [vmem:[%s15] sm:$0x1]
    %v1302 = vld [vmem:[%s16] sm:$0x1]
    %v1303 = vsel %vm180, %v1299, 0.0
    %1304 = vadd.xlane.f32.xlu0 %v1303
    %v1305 = vpop.xlane.xlu0 %1304
    %v1306 = vsel %vm180, %v1300, 0.0
    %1307 = vadd.xlane.f32.xlu0 %v1306
    %v1308 = vpop.xlane.xlu0 %1307
    %v1309 = vmul.f32 %v1305, %v1054
    %v1310 = vmul.f32 %v1308, %v1054
    %v1311 = vsub.f32 %v1299, %v1309
    %v1312 = vsub.f32 %v1300, %v1310
    %v1313 = vmul.f32 %v1311, %v1311
    %v1314 = vmul.f32 %v1312, %v1312
    %v1315 = vsel %vm180, %v1313, 0.0
    %1316 = vadd.xlane.f32.xlu0 %v1315
    %v1317 = vpop.xlane.xlu0 %1316
    %v1318 = vsel %vm180, %v1314, 0.0
    %1319 = vadd.xlane.f32.xlu0 %v1318
    %v1320 = vpop.xlane.xlu0 %1319
    %v1321 = vmul.f32 %v1317, %v1054
    %v1322 = vmul.f32 %v1320, %v1054
    %v1323 = vadd.f32 %v1321, 1e-12
    %v1324 = vadd.f32 %v1322, 1e-12
    %v1325 = vrsqrt.pop %v1323
    %v1326 = vrsqrt.pop %v1324
    %v1327 = vmul.f32 %v1311, %v1325
    %v1328 = vmul.f32 %v1312, %v1326
    %v1330 = vlaneseq
    %v1331 = vshrl.u32 %v1330, 7
    %v1332 = vsub.s32 0, %v1331
    %v1333 = vrot.slane %v1301, %v1332
    %v1335 = vmul.f32 %v1327, %v1333
    %v1336 = vmul.f32 %v1328, %v1333
    %v1338 = vlaneseq
    %v1339 = vshrl.u32 %v1338, 7
    %v1340 = vsub.s32 0, %v1339
    %v1341 = vrot.slane %v1302, %v1340
    %v1343 = vadd.f32 %v1335, %v1341
    %v1344 = vadd.f32 %v1336, %v1341
    %s1345 = scalar_lea.vmem [#allocation9], 32
    %v1346 = vld [vmem:[%s1345] sm:$0xff]
    %v1347 = vld [vmem:[%s1345 + $0x8] sm:$0xff]
    %v1348 = vld [vmem:[%s1345 + $0x10] sm:$0xff]
    %v1349 = vld [vmem:[%s1345 + $0x18] sm:$0xff]
    %s1350 = scalar_lea.vmem %s6, 1
    %v1351 = vld [vmem:[%s1350] sm:$0x1]
    %v1353 = vlaneseq
    %v1354 = vshrl.u32 %v1353, 7
    %v1355 = vsub.s32 0, %v1354
    %v1356 = vrot.slane %v1351, %v1355
    %v1359 = vsel %vm180, %v1343, 0
    %v1362 = vsel %vm180, %v1344, 0
    %1364 = vmatprep.subr.mxu0 0.0
    %1365 = vmatpush1.msra.mxu0 %v1346
    %1366 = vmatprep.subr.mxu0 0.0
    %1367 = vmatpush1.msra.mxu0 %v1347
    %1368 = vmatprep.subr.mxu0 0.0
    %1369 = vmatpush1.msra.mxu0 %v1348
    %1370 = vmatprep.subr.mxu0 0.0
    %1371 = vmatpush1.msra.mxu0 %v1349
    %1372 = vmatprep.subr.mxu0 0.0
    %1373 = vmatpush1.msra.mxu0 0.0
    %1374 = vmatprep.subr.mxu0 0.0
    %1375 = vmatpush1.msra.mxu0 0.0
    %1376 = vmatprep.subr.mxu0 0.0
    %1377 = vmatpush1.msra.mxu0 0.0
    %1378 = vmatprep.subr.mxu0 0.0
    %1379 = vmatpush1.msra.mxu0 0.0
    %1380 = vmatprep.subr.mxu0 0.0
    %1381 = vmatpush1.msra.mxu0 0.0
    %1382 = vmatprep.subr.mxu0 0.0
    %1383 = vmatpush1.msra.mxu0 0.0
    %1384 = vmatprep.subr.mxu0 0.0
    %1385 = vmatpush1.msra.mxu0 0.0
    %1386 = vmatprep.subr.mxu0 0.0
    %1387 = vmatpush1.msra.mxu0 0.0
    %1388 = vmatprep.subr.mxu0 0.0
    %1389 = vmatpush1.msra.mxu0 0.0
    %1390 = vmatprep.subr.mxu0 0.0
    %1391 = vmatpush1.msra.mxu0 0.0
    %1392 = vmatprep.subr.mxu0 0.0
    %1393 = vmatpush1.msra.mxu0 0.0
    %1394 = vmatprep.subr.mxu0 0.0
    %1395 = vmatpush1.msra.mxu0 0.0
    %1396 = vmatprep.subr.mxu0 0.0
    %1397 = vmatpush1.msra.mxu0 0.0
    %1398 = vmatprep.subr.mxu0 0.0
    %1399 = vmatpush1.msra.mxu0 0.0
    %1400 = vmatprep.subr.mxu0 0.0
    %1401 = vmatpush1.msra.mxu0 0.0
    %1402 = vmatprep.subr.mxu0 0.0
    %1403 = vmatpush1.msra.mxu0 0.0
    %1404 = vmatprep.subr.mxu0 0.0
    %1405 = vmatpush1.msra.mxu0 0.0
    %1406 = vmatprep.subr.mxu0 0.0
    %1407 = vmatpush1.msra.mxu0 0.0
    %1408 = vmatprep.subr.mxu0 0.0
    %1409 = vmatpush1.msra.mxu0 0.0
    %1410 = vmatprep.subr.mxu0 0.0
    %1411 = vmatpush1.msra.mxu0 0.0
    %1412 = vmatprep.subr.mxu0 0.0
    %1413 = vmatpush1.msra.mxu0 0.0
    %1414 = vmatprep.subr.mxu0 0.0
    %1415 = vmatpush1.msra.mxu0 0.0
    %1416 = vmatprep.subr.mxu0 0.0
    %1417 = vmatpush1.msra.mxu0 0.0
    %1418 = vmatprep.subr.mxu0 0.0
    %1419 = vmatpush1.msra.mxu0 0.0
    %1420 = vmatprep.subr.mxu0 0.0
    %1421 = vmatpush1.msra.mxu0 0.0
    %1422 = vmatprep.subr.mxu0 0.0
    %1423 = vmatpush1.msra.mxu0 0.0
    %1424 = vmatprep.subr.mxu0 0.0
    %1425 = vmatpush1.msra.mxu0 0.0
    %1426 = vmatprep.subr.mxu0 0.0
    %1427 = vmatpush1.msra.mxu0 0.0
    %1428 = vmatprep.mubr.f32.mxu0 0.0
    %1429 = vmatmul.mubr.f32.gmra.mrb[0].mxu0 %v1359
    %v1430 = vpop.f32.mrb[0].mxu0
    %v1431 = vadd.f32 %v1356, %v1430
    %v1432 = vpop.f32.mrb[0].mxu0
    %1433 = vmatprep.mubr.f32.mxu0 0.0
    %1434 = vmatmul.mubr.f32.gmra.mrb[0].mxu0 %v1362
    %v1435 = vpop.f32.mrb[0].mxu0
    %v1436 = vadd.f32 %v1356, %v1435
    %v1437 = vpop.f32.mrb[0].mxu0
    %1438 = vdwg.mxu0
    %1440 = vrot.lane.b32.xlu0 %v1431, 96
    %v1441 = vpop.permute.xlu0 %1440
    %v1442 = vsel %vm265, %v1431, 0
    %v1444 = vsel %vm265, %v1441, 0
    %1446 = vmatprep.subr.mxu0 0.0
    %1447 = vmatpush1.xpose.msra.mxu0 %v1444
    %1448 = vmatprep.subr.mxu0 0.0
    %1449 = vmatpush1.xpose.msra.mxu0 0.0
    %1450 = vmatprep.subr.mxu0 0.0
    %1451 = vmatpush1.xpose.msra.mxu0 0.0
    %1452 = vmatprep.subr.mxu0 0.0
    %1453 = vmatpush1.xpose.msra.mxu0 0.0
    %1454 = vmatprep.subr.mxu0 0.0
    %1455 = vmatpush1.xpose.msra.mxu0 0.0
    %1456 = vmatprep.subr.mxu0 0.0
    %1457 = vmatpush1.xpose.msra.mxu0 0.0
    %1458 = vmatprep.subr.mxu0 0.0
    %1459 = vmatpush1.xpose.msra.mxu0 0.0
    %1460 = vmatprep.subr.mxu0 0.0
    %1461 = vmatpush1.xpose.msra.mxu0 0.0
    %1462 = vmatprep.subr.mxu0 0.0
    %1463 = vmatpush1.xpose.msra.mxu0 0.0
    %1464 = vmatprep.subr.mxu0 0.0
    %1465 = vmatpush1.xpose.msra.mxu0 0.0
    %1466 = vmatprep.subr.mxu0 0.0
    %1467 = vmatpush1.xpose.msra.mxu0 0.0
    %1468 = vmatprep.subr.mxu0 0.0
    %1469 = vmatpush1.xpose.msra.mxu0 0.0
    %1470 = vmatprep.subr.mxu0 0.0
    %1471 = vmatpush1.xpose.msra.mxu0 0.0
    %1472 = vmatprep.subr.mxu0 0.0
    %1473 = vmatpush1.xpose.msra.mxu0 0.0
    %1474 = vmatprep.subr.mxu0 0.0
    %1475 = vmatpush1.xpose.msra.mxu0 0.0
    %1476 = vmatprep.subr.mxu0 0.0
    %1477 = vmatpush1.xpose.msra.mxu0 0.0
    %1478 = vmatprep.subr.mxu0 0.0
    %1479 = vmatpush1.xpose.msra.mxu0 0.0
    %1480 = vmatprep.subr.mxu0 0.0
    %1481 = vmatpush1.xpose.msra.mxu0 0.0
    %1482 = vmatprep.subr.mxu0 0.0
    %1483 = vmatpush1.xpose.msra.mxu0 0.0
    %1484 = vmatprep.subr.mxu0 0.0
    %1485 = vmatpush1.xpose.msra.mxu0 0.0
    %1486 = vmatprep.subr.mxu0 0.0
    %1487 = vmatpush1.xpose.msra.mxu0 0.0
    %1488 = vmatprep.subr.mxu0 0.0
    %1489 = vmatpush1.xpose.msra.mxu0 0.0
    %1490 = vmatprep.subr.mxu0 0.0
    %1491 = vmatpush1.xpose.msra.mxu0 0.0
    %1492 = vmatprep.subr.mxu0 0.0
    %1493 = vmatpush1.xpose.msra.mxu0 0.0
    %1494 = vmatprep.subr.mxu0 0.0
    %1495 = vmatpush1.xpose.msra.mxu0 0.0
    %1496 = vmatprep.subr.mxu0 0.0
    %1497 = vmatpush1.xpose.msra.mxu0 0.0
    %1498 = vmatprep.subr.mxu0 0.0
    %1499 = vmatpush1.xpose.msra.mxu0 0.0
    %1500 = vmatprep.subr.mxu0 0.0
    %1501 = vmatpush1.xpose.msra.mxu0 0.0
    %1502 = vmatprep.subr.mxu0 0.0
    %1503 = vmatpush1.xpose.msra.mxu0 0.0
    %1504 = vmatprep.subr.mxu0 0.0
    %1505 = vmatpush1.xpose.msra.mxu0 0.0
    %1506 = vmatprep.subr.mxu0 0.0
    %1507 = vmatpush1.xpose.msra.mxu0 0.0
    %1508 = vmatprep.subr.mxu0 0.0
    %1509 = vmatpush1.xpose.msra.mxu0 0.0
    %1510 = vmatprep.mubr.f32.mxu0 0.0
    %1511 = vmatmul.mubr.f32.gmra.mrb[0].mxu0 %v1442
    %v1512 = vpop.f32.mrb[0].mxu0
    %v1513 = vadd.f32 0.0, %v1512
    %v1514 = vpop.f32.mrb[0].mxu0
    %1515 = vdwg.mxu0
    %1517 = vrot.lane.b32.xlu0 %v1436, 96
    %v1518 = vpop.permute.xlu0 %1517
    %v1519 = vsel %vm265, %v1436, 0
    %v1521 = vsel %vm265, %v1518, 0
    %1523 = vmatprep.subr.mxu0 0.0
    %1524 = vmatpush1.xpose.msra.mxu0 %v1521
    %1525 = vmatprep.subr.mxu0 0.0
    %1526 = vmatpush1.xpose.msra.mxu0 0.0
    %1527 = vmatprep.subr.mxu0 0.0
    %1528 = vmatpush1.xpose.msra.mxu0 0.0
    %1529 = vmatprep.subr.mxu0 0.0
    %1530 = vmatpush1.xpose.msra.mxu0 0.0
    %1531 = vmatprep.subr.mxu0 0.0
    %1532 = vmatpush1.xpose.msra.mxu0 0.0
    %1533 = vmatprep.subr.mxu0 0.0
    %1534 = vmatpush1.xpose.msra.mxu0 0.0
    %1535 = vmatprep.subr.mxu0 0.0
    %1536 = vmatpush1.xpose.msra.mxu0 0.0
    %1537 = vmatprep.subr.mxu0 0.0
    %1538 = vmatpush1.xpose.msra.mxu0 0.0
    %1539 = vmatprep.subr.mxu0 0.0
    %1540 = vmatpush1.xpose.msra.mxu0 0.0
    %1541 = vmatprep.subr.mxu0 0.0
    %1542 = vmatpush1.xpose.msra.mxu0 0.0
    %1543 = vmatprep.subr.mxu0 0.0
    %1544 = vmatpush1.xpose.msra.mxu0 0.0
    %1545 = vmatprep.subr.mxu0 0.0
    %1546 = vmatpush1.xpose.msra.mxu0 0.0
    %1547 = vmatprep.subr.mxu0 0.0
    %1548 = vmatpush1.xpose.msra.mxu0 0.0
    %1549 = vmatprep.subr.mxu0 0.0
    %1550 = vmatpush1.xpose.msra.mxu0 0.0
    %1551 = vmatprep.subr.mxu0 0.0
    %1552 = vmatpush1.xpose.msra.mxu0 0.0
    %1553 = vmatprep.subr.mxu0 0.0
    %1554 = vmatpush1.xpose.msra.mxu0 0.0
    %1555 = vmatprep.subr.mxu0 0.0
    %1556 = vmatpush1.xpose.msra.mxu0 0.0
    %1557 = vmatprep.subr.mxu0 0.0
    %1558 = vmatpush1.xpose.msra.mxu0 0.0
    %1559 = vmatprep.subr.mxu0 0.0
    %1560 = vmatpush1.xpose.msra.mxu0 0.0
    %1561 = vmatprep.subr.mxu0 0.0
    %1562 = vmatpush1.xpose.msra.mxu0 0.0
    %1563 = vmatprep.subr.mxu0 0.0
    %1564 = vmatpush1.xpose.msra.mxu0 0.0
    %1565 = vmatprep.subr.mxu0 0.0
    %1566 = vmatpush1.xpose.msra.mxu0 0.0
    %1567 = vmatprep.subr.mxu0 0.0
    %1568 = vmatpush1.xpose.msra.mxu0 0.0
    %1569 = vmatprep.subr.mxu0 0.0
    %1570 = vmatpush1.xpose.msra.mxu0 0.0
    %1571 = vmatprep.subr.mxu0 0.0
    %1572 = vmatpush1.xpose.msra.mxu0 0.0
    %1573 = vmatprep.subr.mxu0 0.0
    %1574 = vmatpush1.xpose.msra.mxu0 0.0
    %1575 = vmatprep.subr.mxu0 0.0
    %1576 = vmatpush1.xpose.msra.mxu0 0.0
    %1577 = vmatprep.subr.mxu0 0.0
    %1578 = vmatpush1.xpose.msra.mxu0 0.0
    %1579 = vmatprep.subr.mxu0 0.0
    %1580 = vmatpush1.xpose.msra.mxu0 0.0
    %1581 = vmatprep.subr.mxu0 0.0
    %1582 = vmatpush1.xpose.msra.mxu0 0.0
    %1583 = vmatprep.subr.mxu0 0.0
    %1584 = vmatpush1.xpose.msra.mxu0 0.0
    %1585 = vmatprep.subr.mxu0 0.0
    %1586 = vmatpush1.xpose.msra.mxu0 0.0
    %1587 = vmatprep.mubr.f32.mxu0 0.0
    %1588 = vmatmul.mubr.f32.gmra.mrb[0].mxu0 %v1519
    %v1589 = vpop.f32.mrb[0].mxu0
    %v1590 = vadd.f32 0.0, %v1589
    %v1591 = vpop.f32.mrb[0].mxu0
    %1592 = vdwg.mxu0
    %v1593 = vmul.f32 %v1513, 0.25
    %v1594 = vmul.f32 %v1590, 0.25
    %v1595 = vadd.f32 %v1593, %v424
    %v1596 = vadd.f32 %v1594, %v428
    %v1597 = vsel %vm433, %v1595, -inf
    %1598 = vmax.xlane.f32.xlu0 %v1597
    %v1599 = vpop.xlane.xlu0 %1598
    %v1600 = vsel %vm433, %v1596, -inf
    %1601 = vmax.xlane.f32.xlu0 %v1600
    %v1602 = vpop.xlane.xlu0 %1601
    %v1603 = vsub.f32 %v1595, %v1599
    %v1604 = vsub.f32 %v1596, %v1602
    %v1605 = vmul.f32 %v1603, 1.442695
    %v1606 = vpow.pop %v1605
    %v1607 = vmul.f32 %v1604, 1.442695
    %v1608 = vpow.pop %v1607
    %v1609 = vsel %vm433, %v1606, 0.0
    %1610 = vadd.xlane.f32.xlu0 %v1609
    %v1611 = vpop.xlane.xlu0 %1610
    %v1612 = vsel %vm433, %v1608, 0.0
    %1613 = vadd.xlane.f32.xlu0 %v1612
    %v1614 = vpop.xlane.xlu0 %1613
    %v1615 = vrcp.pop %v1611
    %v1616 = vrcp.pop %v1614
    %v1617 = vmul.f32 %v1606, %v1615
    %v1618 = vmul.f32 %v1608, %v1616
    %1619 = vrot.lane.b32.xlu0 %v1431, 64
    %v1620 = vpop.permute.xlu0 %1619
    %v1623 = vsel %vm433, %v1617, 0
    %1625 = vmatprep.subr.mxu0 0.0
    %1626 = vmatpush1.msra.mxu0 %v1620
    %1627 = vmatprep.subr.mxu0 0.0
    %1628 = vmatpush1.msra.mxu0 0.0
    %1629 = vmatprep.subr.mxu0 0.0
    %1630 = vmatpush1.msra.mxu0 0.0
    %1631 = vmatprep.subr.mxu0 0.0
    %1632 = vmatpush1.msra.mxu0 0.0
    %1633 = vmatprep.subr.mxu0 0.0
    %1634 = vmatpush1.msra.mxu0 0.0
    %1635 = vmatprep.subr.mxu0 0.0
    %1636 = vmatpush1.msra.mxu0 0.0
    %1637 = vmatprep.subr.mxu0 0.0
    %1638 = vmatpush1.msra.mxu0 0.0
    %1639 = vmatprep.subr.mxu0 0.0
    %1640 = vmatpush1.msra.mxu0 0.0
    %1641 = vmatprep.subr.mxu0 0.0
    %1642 = vmatpush1.msra.mxu0 0.0
    %1643 = vmatprep.subr.mxu0 0.0
    %1644 = vmatpush1.msra.mxu0 0.0
    %1645 = vmatprep.subr.mxu0 0.0
    %1646 = vmatpush1.msra.mxu0 0.0
    %1647 = vmatprep.subr.mxu0 0.0
    %1648 = vmatpush1.msra.mxu0 0.0
    %1649 = vmatprep.subr.mxu0 0.0
    %1650 = vmatpush1.msra.mxu0 0.0
    %1651 = vmatprep.subr.mxu0 0.0
    %1652 = vmatpush1.msra.mxu0 0.0
    %1653 = vmatprep.subr.mxu0 0.0
    %1654 = vmatpush1.msra.mxu0 0.0
    %1655 = vmatprep.subr.mxu0 0.0
    %1656 = vmatpush1.msra.mxu0 0.0
    %1657 = vmatprep.subr.mxu0 0.0
    %1658 = vmatpush1.msra.mxu0 0.0
    %1659 = vmatprep.subr.mxu0 0.0
    %1660 = vmatpush1.msra.mxu0 0.0
    %1661 = vmatprep.subr.mxu0 0.0
    %1662 = vmatpush1.msra.mxu0 0.0
    %1663 = vmatprep.subr.mxu0 0.0
    %1664 = vmatpush1.msra.mxu0 0.0
    %1665 = vmatprep.subr.mxu0 0.0
    %1666 = vmatpush1.msra.mxu0 0.0
    %1667 = vmatprep.subr.mxu0 0.0
    %1668 = vmatpush1.msra.mxu0 0.0
    %1669 = vmatprep.subr.mxu0 0.0
    %1670 = vmatpush1.msra.mxu0 0.0
    %1671 = vmatprep.subr.mxu0 0.0
    %1672 = vmatpush1.msra.mxu0 0.0
    %1673 = vmatprep.subr.mxu0 0.0
    %1674 = vmatpush1.msra.mxu0 0.0
    %1675 = vmatprep.subr.mxu0 0.0
    %1676 = vmatpush1.msra.mxu0 0.0
    %1677 = vmatprep.subr.mxu0 0.0
    %1678 = vmatpush1.msra.mxu0 0.0
    %1679 = vmatprep.subr.mxu0 0.0
    %1680 = vmatpush1.msra.mxu0 0.0
    %1681 = vmatprep.subr.mxu0 0.0
    %1682 = vmatpush1.msra.mxu0 0.0
    %1683 = vmatprep.subr.mxu0 0.0
    %1684 = vmatpush1.msra.mxu0 0.0
    %1685 = vmatprep.subr.mxu0 0.0
    %1686 = vmatpush1.msra.mxu0 0.0
    %1687 = vmatprep.subr.mxu0 0.0
    %1688 = vmatpush1.msra.mxu0 0.0
    %1689 = vmatprep.mubr.f32.mxu0 0.0
    %1690 = vmatmul.mubr.f32.gmra.mrb[0].mxu0 %v1623
    %v1691 = vpop.f32.mrb[0].mxu0
    %v1692 = vadd.f32 0.0, %v1691
    %v1693 = vpop.f32.mrb[0].mxu0
    %1694 = vdwg.mxu0
    %1695 = vrot.lane.b32.xlu0 %v1436, 64
    %v1696 = vpop.permute.xlu0 %1695
    %v1699 = vsel %vm433, %v1618, 0
    %1701 = vmatprep.subr.mxu0 0.0
    %1702 = vmatpush1.msra.mxu0 %v1696
    %1703 = vmatprep.subr.mxu0 0.0
    %1704 = vmatpush1.msra.mxu0 0.0
    %1705 = vmatprep.subr.mxu0 0.0
    %1706 = vmatpush1.msra.mxu0 0.0
    %1707 = vmatprep.subr.mxu0 0.0
    %1708 = vmatpush1.msra.mxu0 0.0
    %1709 = vmatprep.subr.mxu0 0.0
    %1710 = vmatpush1.msra.mxu0 0.0
    %1711 = vmatprep.subr.mxu0 0.0
    %1712 = vmatpush1.msra.mxu0 0.0
    %1713 = vmatprep.subr.mxu0 0.0
    %1714 = vmatpush1.msra.mxu0 0.0
    %1715 = vmatprep.subr.mxu0 0.0
    %1716 = vmatpush1.msra.mxu0 0.0
    %1717 = vmatprep.subr.mxu0 0.0
    %1718 = vmatpush1.msra.mxu0 0.0
    %1719 = vmatprep.subr.mxu0 0.0
    %1720 = vmatpush1.msra.mxu0 0.0
    %1721 = vmatprep.subr.mxu0 0.0
    %1722 = vmatpush1.msra.mxu0 0.0
    %1723 = vmatprep.subr.mxu0 0.0
    %1724 = vmatpush1.msra.mxu0 0.0
    %1725 = vmatprep.subr.mxu0 0.0
    %1726 = vmatpush1.msra.mxu0 0.0
    %1727 = vmatprep.subr.mxu0 0.0
    %1728 = vmatpush1.msra.mxu0 0.0
    %1729 = vmatprep.subr.mxu0 0.0
    %1730 = vmatpush1.msra.mxu0 0.0
    %1731 = vmatprep.subr.mxu0 0.0
    %1732 = vmatpush1.msra.mxu0 0.0
    %1733 = vmatprep.subr.mxu0 0.0
    %1734 = vmatpush1.msra.mxu0 0.0
    %1735 = vmatprep.subr.mxu0 0.0
    %1736 = vmatpush1.msra.mxu0 0.0
    %1737 = vmatprep.subr.mxu0 0.0
    %1738 = vmatpush1.msra.mxu0 0.0
    %1739 = vmatprep.subr.mxu0 0.0
    %1740 = vmatpush1.msra.mxu0 0.0
    %1741 = vmatprep.subr.mxu0 0.0
    %1742 = vmatpush1.msra.mxu0 0.0
    %1743 = vmatprep.subr.mxu0 0.0
    %1744 = vmatpush1.msra.mxu0 0.0
    %1745 = vmatprep.subr.mxu0 0.0
    %1746 = vmatpush1.msra.mxu0 0.0
    %1747 = vmatprep.subr.mxu0 0.0
    %1748 = vmatpush1.msra.mxu0 0.0
    %1749 = vmatprep.subr.mxu0 0.0
    %1750 = vmatpush1.msra.mxu0 0.0
    %1751 = vmatprep.subr.mxu0 0.0
    %1752 = vmatpush1.msra.mxu0 0.0
    %1753 = vmatprep.subr.mxu0 0.0
    %1754 = vmatpush1.msra.mxu0 0.0
    %1755 = vmatprep.subr.mxu0 0.0
    %1756 = vmatpush1.msra.mxu0 0.0
    %1757 = vmatprep.subr.mxu0 0.0
    %1758 = vmatpush1.msra.mxu0 0.0
    %1759 = vmatprep.subr.mxu0 0.0
    %1760 = vmatpush1.msra.mxu0 0.0
    %1761 = vmatprep.subr.mxu0 0.0
    %1762 = vmatpush1.msra.mxu0 0.0
    %1763 = vmatprep.subr.mxu0 0.0
    %1764 = vmatpush1.msra.mxu0 0.0
    %1765 = vmatprep.mubr.f32.mxu0 0.0
    %1766 = vmatmul.mubr.f32.gmra.mrb[0].mxu0 %v1699
    %v1767 = vpop.f32.mrb[0].mxu0
    %v1768 = vadd.f32 0.0, %v1767
    %v1769 = vpop.f32.mrb[0].mxu0
    %1770 = vdwg.mxu0
    %1771 = vrot.lane.b32.xlu0 %v1431, 112
    %v1772 = vpop.permute.xlu0 %1771
    %1773 = vrot.lane.b32.xlu0 %v1431, 80
    %v1774 = vpop.permute.xlu0 %1773
    %v1775 = vsel %vm265, %v1772, 0
    %v1777 = vsel %vm265, %v1774, 0
    %1779 = vmatprep.subr.mxu0 0.0
    %1780 = vmatpush1.xpose.msra.mxu0 %v1777
    %1781 = vmatprep.subr.mxu0 0.0
    %1782 = vmatpush1.xpose.msra.mxu0 0.0
    %1783 = vmatprep.subr.mxu0 0.0
    %1784 = vmatpush1.xpose.msra.mxu0 0.0
    %1785 = vmatprep.subr.mxu0 0.0
    %1786 = vmatpush1.xpose.msra.mxu0 0.0
    %1787 = vmatprep.subr.mxu0 0.0
    %1788 = vmatpush1.xpose.msra.mxu0 0.0
    %1789 = vmatprep.subr.mxu0 0.0
    %1790 = vmatpush1.xpose.msra.mxu0 0.0
    %1791 = vmatprep.subr.mxu0 0.0
    %1792 = vmatpush1.xpose.msra.mxu0 0.0
    %1793 = vmatprep.subr.mxu0 0.0
    %1794 = vmatpush1.xpose.msra.mxu0 0.0
    %1795 = vmatprep.subr.mxu0 0.0
    %1796 = vmatpush1.xpose.msra.mxu0 0.0
    %1797 = vmatprep.subr.mxu0 0.0
    %1798 = vmatpush1.xpose.msra.mxu0 0.0
    %1799 = vmatprep.subr.mxu0 0.0
    %1800 = vmatpush1.xpose.msra.mxu0 0.0
    %1801 = vmatprep.subr.mxu0 0.0
    %1802 = vmatpush1.xpose.msra.mxu0 0.0
    %1803 = vmatprep.subr.mxu0 0.0
    %1804 = vmatpush1.xpose.msra.mxu0 0.0
    %1805 = vmatprep.subr.mxu0 0.0
    %1806 = vmatpush1.xpose.msra.mxu0 0.0
    %1807 = vmatprep.subr.mxu0 0.0
    %1808 = vmatpush1.xpose.msra.mxu0 0.0
    %1809 = vmatprep.subr.mxu0 0.0
    %1810 = vmatpush1.xpose.msra.mxu0 0.0
    %1811 = vmatprep.subr.mxu0 0.0
    %1812 = vmatpush1.xpose.msra.mxu0 0.0
    %1813 = vmatprep.subr.mxu0 0.0
    %1814 = vmatpush1.xpose.msra.mxu0 0.0
    %1815 = vmatprep.subr.mxu0 0.0
    %1816 = vmatpush1.xpose.msra.mxu0 0.0
    %1817 = vmatprep.subr.mxu0 0.0
    %1818 = vmatpush1.xpose.msra.mxu0 0.0
    %1819 = vmatprep.subr.mxu0 0.0
    %1820 = vmatpush1.xpose.msra.mxu0 0.0
    %1821 = vmatprep.subr.mxu0 0.0
    %1822 = vmatpush1.xpose.msra.mxu0 0.0
    %1823 = vmatprep.subr.mxu0 0.0
    %1824 = vmatpush1.xpose.msra.mxu0 0.0
    %1825 = vmatprep.subr.mxu0 0.0
    %1826 = vmatpush1.xpose.msra.mxu0 0.0
    %1827 = vmatprep.subr.mxu0 0.0
    %1828 = vmatpush1.xpose.msra.mxu0 0.0
    %1829 = vmatprep.subr.mxu0 0.0
    %1830 = vmatpush1.xpose.msra.mxu0 0.0
    %1831 = vmatprep.subr.mxu0 0.0
    %1832 = vmatpush1.xpose.msra.mxu0 0.0
    %1833 = vmatprep.subr.mxu0 0.0
    %1834 = vmatpush1.xpose.msra.mxu0 0.0
    %1835 = vmatprep.subr.mxu0 0.0
    %1836 = vmatpush1.xpose.msra.mxu0 0.0
    %1837 = vmatprep.subr.mxu0 0.0
    %1838 = vmatpush1.xpose.msra.mxu0 0.0
    %1839 = vmatprep.subr.mxu0 0.0
    %1840 = vmatpush1.xpose.msra.mxu0 0.0
    %1841 = vmatprep.subr.mxu0 0.0
    %1842 = vmatpush1.xpose.msra.mxu0 0.0
    %1843 = vmatprep.mubr.f32.mxu0 0.0
    %1844 = vmatmul.mubr.f32.gmra.mrb[0].mxu0 %v1775
    %v1845 = vpop.f32.mrb[0].mxu0
    %v1846 = vadd.f32 0.0, %v1845
    %v1847 = vpop.f32.mrb[0].mxu0
    %1848 = vdwg.mxu0
    %1849 = vrot.lane.b32.xlu0 %v1436, 112
    %v1850 = vpop.permute.xlu0 %1849
    %1851 = vrot.lane.b32.xlu0 %v1436, 80
    %v1852 = vpop.permute.xlu0 %1851
    %v1853 = vsel %vm265, %v1850, 0
    %v1855 = vsel %vm265, %v1852, 0
    %1857 = vmatprep.subr.mxu0 0.0
    %1858 = vmatpush1.xpose.msra.mxu0 %v1855
    %1859 = vmatprep.subr.mxu0 0.0
    %1860 = vmatpush1.xpose.msra.mxu0 0.0
    %1861 = vmatprep.subr.mxu0 0.0
    %1862 = vmatpush1.xpose.msra.mxu0 0.0
    %1863 = vmatprep.subr.mxu0 0.0
    %1864 = vmatpush1.xpose.msra.mxu0 0.0
    %1865 = vmatprep.subr.mxu0 0.0
    %1866 = vmatpush1.xpose.msra.mxu0 0.0
    %1867 = vmatprep.subr.mxu0 0.0
    %1868 = vmatpush1.xpose.msra.mxu0 0.0
    %1869 = vmatprep.subr.mxu0 0.0
    %1870 = vmatpush1.xpose.msra.mxu0 0.0
    %1871 = vmatprep.subr.mxu0 0.0
    %1872 = vmatpush1.xpose.msra.mxu0 0.0
    %1873 = vmatprep.subr.mxu0 0.0
    %1874 = vmatpush1.xpose.msra.mxu0 0.0
    %1875 = vmatprep.subr.mxu0 0.0
    %1876 = vmatpush1.xpose.msra.mxu0 0.0
    %1877 = vmatprep.subr.mxu0 0.0
    %1878 = vmatpush1.xpose.msra.mxu0 0.0
    %1879 = vmatprep.subr.mxu0 0.0
    %1880 = vmatpush1.xpose.msra.mxu0 0.0
    %1881 = vmatprep.subr.mxu0 0.0
    %1882 = vmatpush1.xpose.msra.mxu0 0.0
    %1883 = vmatprep.subr.mxu0 0.0
    %1884 = vmatpush1.xpose.msra.mxu0 0.0
    %1885 = vmatprep.subr.mxu0 0.0
    %1886 = vmatpush1.xpose.msra.mxu0 0.0
    %1887 = vmatprep.subr.mxu0 0.0
    %1888 = vmatpush1.xpose.msra.mxu0 0.0
    %1889 = vmatprep.subr.mxu0 0.0
    %1890 = vmatpush1.xpose.msra.mxu0 0.0
    %1891 = vmatprep.subr.mxu0 0.0
    %1892 = vmatpush1.xpose.msra.mxu0 0.0
    %1893 = vmatprep.subr.mxu0 0.0
    %1894 = vmatpush1.xpose.msra.mxu0 0.0
    %1895 = vmatprep.subr.mxu0 0.0
    %1896 = vmatpush1.xpose.msra.mxu0 0.0
    %1897 = vmatprep.subr.mxu0 0.0
    %1898 = vmatpush1.xpose.msra.mxu0 0.0
    %1899 = vmatprep.subr.mxu0 0.0
    %1900 = vmatpush1.xpose.msra.mxu0 0.0
    %1901 = vmatprep.subr.mxu0 0.0
    %1902 = vmatpush1.xpose.msra.mxu0 0.0
    %1903 = vmatprep.subr.mxu0 0.0
    %1904 = vmatpush1.xpose.msra.mxu0 0.0
    %1905 = vmatprep.subr.mxu0 0.0
    %1906 = vmatpush1.xpose.msra.mxu0 0.0
    %1907 = vmatprep.subr.mxu0 0.0
    %1908 = vmatpush1.xpose.msra.mxu0 0.0
    %1909 = vmatprep.subr.mxu0 0.0
    %1910 = vmatpush1.xpose.msra.mxu0 0.0
    %1911 = vmatprep.subr.mxu0 0.0
    %1912 = vmatpush1.xpose.msra.mxu0 0.0
    %1913 = vmatprep.subr.mxu0 0.0
    %1914 = vmatpush1.xpose.msra.mxu0 0.0
    %1915 = vmatprep.subr.mxu0 0.0
    %1916 = vmatpush1.xpose.msra.mxu0 0.0
    %1917 = vmatprep.subr.mxu0 0.0
    %1918 = vmatpush1.xpose.msra.mxu0 0.0
    %1919 = vmatprep.subr.mxu0 0.0
    %1920 = vmatpush1.xpose.msra.mxu0 0.0
    %1921 = vmatprep.mubr.f32.mxu0 0.0
    %1922 = vmatmul.mubr.f32.gmra.mrb[0].mxu0 %v1853
    %v1923 = vpop.f32.mrb[0].mxu0
    %v1924 = vadd.f32 0.0, %v1923
    %v1925 = vpop.f32.mrb[0].mxu0
    %1926 = vdwg.mxu0
    %v1927 = vmul.f32 %v1846, 0.25
    %v1928 = vmul.f32 %v1924, 0.25
    %v1929 = vadd.f32 %v1927, %v424
    %v1930 = vadd.f32 %v1928, %v428
    %v1931 = vsel %vm433, %v1929, -inf
    %1932 = vmax.xlane.f32.xlu0 %v1931
    %v1933 = vpop.xlane.xlu0 %1932
    %v1934 = vsel %vm433, %v1930, -inf
    %1935 = vmax.xlane.f32.xlu0 %v1934
    %v1936 = vpop.xlane.xlu0 %1935
    %v1937 = vsub.f32 %v1929, %v1933
    %v1938 = vsub.f32 %v1930, %v1936
    %v1939 = vmul.f32 %v1937, 1.442695
    %v1940 = vpow.pop %v1939
    %v1941 = vmul.f32 %v1938, 1.442695
    %v1942 = vpow.pop %v1941
    %v1943 = vsel %vm433, %v1940, 0.0
    %1944 = vadd.xlane.f32.xlu0 %v1943
    %v1945 = vpop.xlane.xlu0 %1944
    %v1946 = vsel %vm433, %v1942, 0.0
    %1947 = vadd.xlane.f32.xlu0 %v1946
    %v1948 = vpop.xlane.xlu0 %1947
    %v1949 = vrcp.pop %v1945
    %v1950 = vrcp.pop %v1948
    %v1951 = vmul.f32 %v1940, %v1949
    %v1952 = vmul.f32 %v1942, %v1950
    %1953 = vrot.lane.b32.xlu0 %v1431, 48
    %v1954 = vpop.permute.xlu0 %1953
    %v1957 = vsel %vm433, %v1951, 0
    %1959 = vmatprep.subr.mxu0 0.0
    %1960 = vmatpush1.msra.mxu0 %v1954
    %1961 = vmatprep.subr.mxu0 0.0
    %1962 = vmatpush1.msra.mxu0 0.0
    %1963 = vmatprep.subr.mxu0 0.0
    %1964 = vmatpush1.msra.mxu0 0.0
    %1965 = vmatprep.subr.mxu0 0.0
    %1966 = vmatpush1.msra.mxu0 0.0
    %1967 = vmatprep.subr.mxu0 0.0
    %1968 = vmatpush1.msra.mxu0 0.0
    %1969 = vmatprep.subr.mxu0 0.0
    %1970 = vmatpush1.msra.mxu0 0.0
    %1971 = vmatprep.subr.mxu0 0.0
    %1972 = vmatpush1.msra.mxu0 0.0
    %1973 = vmatprep.subr.mxu0 0.0
    %1974 = vmatpush1.msra.mxu0 0.0
    %1975 = vmatprep.subr.mxu0 0.0
    %1976 = vmatpush1.msra.mxu0 0.0
    %1977 = vmatprep.subr.mxu0 0.0
    %1978 = vmatpush1.msra.mxu0 0.0
    %1979 = vmatprep.subr.mxu0 0.0
    %1980 = vmatpush1.msra.mxu0 0.0
    %1981 = vmatprep.subr.mxu0 0.0
    %1982 = vmatpush1.msra.mxu0 0.0
    %1983 = vmatprep.subr.mxu0 0.0
    %1984 = vmatpush1.msra.mxu0 0.0
    %1985 = vmatprep.subr.mxu0 0.0
    %1986 = vmatpush1.msra.mxu0 0.0
    %1987 = vmatprep.subr.mxu0 0.0
    %1988 = vmatpush1.msra.mxu0 0.0
    %1989 = vmatprep.subr.mxu0 0.0
    %1990 = vmatpush1.msra.mxu0 0.0
    %1991 = vmatprep.subr.mxu0 0.0
    %1992 = vmatpush1.msra.mxu0 0.0
    %1993 = vmatprep.subr.mxu0 0.0
    %1994 = vmatpush1.msra.mxu0 0.0
    %1995 = vmatprep.subr.mxu0 0.0
    %1996 = vmatpush1.msra.mxu0 0.0
    %1997 = vmatprep.subr.mxu0 0.0
    %1998 = vmatpush1.msra.mxu0 0.0
    %1999 = vmatprep.subr.mxu0 0.0
    %2000 = vmatpush1.msra.mxu0 0.0
    %2001 = vmatprep.subr.mxu0 0.0
    %2002 = vmatpush1.msra.mxu0 0.0
    %2003 = vmatprep.subr.mxu0 0.0
    %2004 = vmatpush1.msra.mxu0 0.0
    %2005 = vmatprep.subr.mxu0 0.0
    %2006 = vmatpush1.msra.mxu0 0.0
    %2007 = vmatprep.subr.mxu0 0.0
    %2008 = vmatpush1.msra.mxu0 0.0
    %2009 = vmatprep.subr.mxu0 0.0
    %2010 = vmatpush1.msra.mxu0 0.0
    %2011 = vmatprep.subr.mxu0 0.0
    %2012 = vmatpush1.msra.mxu0 0.0
    %2013 = vmatprep.subr.mxu0 0.0
    %2014 = vmatpush1.msra.mxu0 0.0
    %2015 = vmatprep.subr.mxu0 0.0
    %2016 = vmatpush1.msra.mxu0 0.0
    %2017 = vmatprep.subr.mxu0 0.0
    %2018 = vmatpush1.msra.mxu0 0.0
    %2019 = vmatprep.subr.mxu0 0.0
    %2020 = vmatpush1.msra.mxu0 0.0
    %2021 = vmatprep.subr.mxu0 0.0
    %2022 = vmatpush1.msra.mxu0 0.0
    %2023 = vmatprep.mubr.f32.mxu0 0.0
    %2024 = vmatmul.mubr.f32.gmra.mrb[0].mxu0 %v1957
    %v2025 = vpop.f32.mrb[0].mxu0
    %v2026 = vadd.f32 0.0, %v2025
    %v2027 = vpop.f32.mrb[0].mxu0
    %2028 = vdwg.mxu0
    %2029 = vrot.lane.b32.xlu0 %v1436, 48
    %v2030 = vpop.permute.xlu0 %2029
    %v2033 = vsel %vm433, %v1952, 0
    %2035 = vmatprep.subr.mxu0 0.0
    %2036 = vmatpush1.msra.mxu0 %v2030
    %2037 = vmatprep.subr.mxu0 0.0
    %2038 = vmatpush1.msra.mxu0 0.0
    %2039 = vmatprep.subr.mxu0 0.0
    %2040 = vmatpush1.msra.mxu0 0.0
    %2041 = vmatprep.subr.mxu0 0.0
    %2042 = vmatpush1.msra.mxu0 0.0
    %2043 = vmatprep.subr.mxu0 0.0
    %2044 = vmatpush1.msra.mxu0 0.0
    %2045 = vmatprep.subr.mxu0 0.0
    %2046 = vmatpush1.msra.mxu0 0.0
    %2047 = vmatprep.subr.mxu0 0.0
    %2048 = vmatpush1.msra.mxu0 0.0
    %2049 = vmatprep.subr.mxu0 0.0
    %2050 = vmatpush1.msra.mxu0 0.0
    %2051 = vmatprep.subr.mxu0 0.0
    %2052 = vmatpush1.msra.mxu0 0.0
    %2053 = vmatprep.subr.mxu0 0.0
    %2054 = vmatpush1.msra.mxu0 0.0
    %2055 = vmatprep.subr.mxu0 0.0
    %2056 = vmatpush1.msra.mxu0 0.0
    %2057 = vmatprep.subr.mxu0 0.0
    %2058 = vmatpush1.msra.mxu0 0.0
    %2059 = vmatprep.subr.mxu0 0.0
    %2060 = vmatpush1.msra.mxu0 0.0
    %2061 = vmatprep.subr.mxu0 0.0
    %2062 = vmatpush1.msra.mxu0 0.0
    %2063 = vmatprep.subr.mxu0 0.0
    %2064 = vmatpush1.msra.mxu0 0.0
    %2065 = vmatprep.subr.mxu0 0.0
    %2066 = vmatpush1.msra.mxu0 0.0
    %2067 = vmatprep.subr.mxu0 0.0
    %2068 = vmatpush1.msra.mxu0 0.0
    %2069 = vmatprep.subr.mxu0 0.0
    %2070 = vmatpush1.msra.mxu0 0.0
    %2071 = vmatprep.subr.mxu0 0.0
    %2072 = vmatpush1.msra.mxu0 0.0
    %2073 = vmatprep.subr.mxu0 0.0
    %2074 = vmatpush1.msra.mxu0 0.0
    %2075 = vmatprep.subr.mxu0 0.0
    %2076 = vmatpush1.msra.mxu0 0.0
    %2077 = vmatprep.subr.mxu0 0.0
    %2078 = vmatpush1.msra.mxu0 0.0
    %2079 = vmatprep.subr.mxu0 0.0
    %2080 = vmatpush1.msra.mxu0 0.0
    %2081 = vmatprep.subr.mxu0 0.0
    %2082 = vmatpush1.msra.mxu0 0.0
    %2083 = vmatprep.subr.mxu0 0.0
    %2084 = vmatpush1.msra.mxu0 0.0
    %2085 = vmatprep.subr.mxu0 0.0
    %2086 = vmatpush1.msra.mxu0 0.0
    %2087 = vmatprep.subr.mxu0 0.0
    %2088 = vmatpush1.msra.mxu0 0.0
    %2089 = vmatprep.subr.mxu0 0.0
    %2090 = vmatpush1.msra.mxu0 0.0
    %2091 = vmatprep.subr.mxu0 0.0
    %2092 = vmatpush1.msra.mxu0 0.0
    %2093 = vmatprep.subr.mxu0 0.0
    %2094 = vmatpush1.msra.mxu0 0.0
    %2095 = vmatprep.subr.mxu0 0.0
    %2096 = vmatpush1.msra.mxu0 0.0
    %2097 = vmatprep.subr.mxu0 0.0
    %2098 = vmatpush1.msra.mxu0 0.0
    %2099 = vmatprep.mubr.f32.mxu0 0.0
    %2100 = vmatmul.mubr.f32.gmra.mrb[0].mxu0 %v2033
    %v2101 = vpop.f32.mrb[0].mxu0
    %v2102 = vadd.f32 0.0, %v2101
    %v2103 = vpop.f32.mrb[0].mxu0
    %2104 = vdwg.mxu0
    %2107 = vrot.lane.b32.xlu0 %v2026, 16
    %v2108 = vpop.permute.xlu0 %2107
    %2109 = vrot.lane.b32.xlu0 %v2102, 16
    %v2110 = vpop.permute.xlu0 %2109
    %v2113 = vsel %vm265, %v1692, %v2108
    %v2114 = vsel %vm265, %v1768, %v2110
    %s2115 = scalar_lea.vmem [#allocation10], 32
    %v2116 = vld [vmem:[%s2115] sm:$0xff]
    %v2117 = vld [vmem:[%s2115 + $0x8] sm:$0xff]
    %v2118 = vld [vmem:[%s2115 + $0x10] sm:$0xff]
    %v2119 = vld [vmem:[%s2115 + $0x18] sm:$0xff]
    %s2120 = scalar_lea.vmem %s8, 1
    %v2121 = vld [vmem:[%s2120] sm:$0x1]
    %v2123 = vlaneseq
    %v2124 = vshrl.u32 %v2123, 7
    %v2125 = vsub.s32 0, %v2124
    %v2126 = vrot.slane %v2121, %v2125
    %v2129 = vsel %vm180, %v2113, 0
    %v2132 = vsel %vm180, %v2114, 0
    %2134 = vmatprep.subr.mxu0 0.0
    %2135 = vmatpush1.msra.mxu0 %v2116
    %2136 = vmatprep.subr.mxu0 0.0
    %2137 = vmatpush1.msra.mxu0 %v2117
    %2138 = vmatprep.subr.mxu0 0.0
    %2139 = vmatpush1.msra.mxu0 %v2118
    %2140 = vmatprep.subr.mxu0 0.0
    %2141 = vmatpush1.msra.mxu0 %v2119
    %2142 = vmatprep.subr.mxu0 0.0
    %2143 = vmatpush1.msra.mxu0 0.0
    %2144 = vmatprep.subr.mxu0 0.0
    %2145 = vmatpush1.msra.mxu0 0.0
    %2146 = vmatprep.subr.mxu0 0.0
    %2147 = vmatpush1.msra.mxu0 0.0
    %2148 = vmatprep.subr.mxu0 0.0
    %2149 = vmatpush1.msra.mxu0 0.0
    %2150 = vmatprep.subr.mxu0 0.0
    %2151 = vmatpush1.msra.mxu0 0.0
    %2152 = vmatprep.subr.mxu0 0.0
    %2153 = vmatpush1.msra.mxu0 0.0
    %2154 = vmatprep.subr.mxu0 0.0
    %2155 = vmatpush1.msra.mxu0 0.0
    %2156 = vmatprep.subr.mxu0 0.0
    %2157 = vmatpush1.msra.mxu0 0.0
    %2158 = vmatprep.subr.mxu0 0.0
    %2159 = vmatpush1.msra.mxu0 0.0
    %2160 = vmatprep.subr.mxu0 0.0
    %2161 = vmatpush1.msra.mxu0 0.0
    %2162 = vmatprep.subr.mxu0 0.0
    %2163 = vmatpush1.msra.mxu0 0.0
    %2164 = vmatprep.subr.mxu0 0.0
    %2165 = vmatpush1.msra.mxu0 0.0
    %2166 = vmatprep.subr.mxu0 0.0
    %2167 = vmatpush1.msra.mxu0 0.0
    %2168 = vmatprep.subr.mxu0 0.0
    %2169 = vmatpush1.msra.mxu0 0.0
    %2170 = vmatprep.subr.mxu0 0.0
    %2171 = vmatpush1.msra.mxu0 0.0
    %2172 = vmatprep.subr.mxu0 0.0
    %2173 = vmatpush1.msra.mxu0 0.0
    %2174 = vmatprep.subr.mxu0 0.0
    %2175 = vmatpush1.msra.mxu0 0.0
    %2176 = vmatprep.subr.mxu0 0.0
    %2177 = vmatpush1.msra.mxu0 0.0
    %2178 = vmatprep.subr.mxu0 0.0
    %2179 = vmatpush1.msra.mxu0 0.0
    %2180 = vmatprep.subr.mxu0 0.0
    %2181 = vmatpush1.msra.mxu0 0.0
    %2182 = vmatprep.subr.mxu0 0.0
    %2183 = vmatpush1.msra.mxu0 0.0
    %2184 = vmatprep.subr.mxu0 0.0
    %2185 = vmatpush1.msra.mxu0 0.0
    %2186 = vmatprep.subr.mxu0 0.0
    %2187 = vmatpush1.msra.mxu0 0.0
    %2188 = vmatprep.subr.mxu0 0.0
    %2189 = vmatpush1.msra.mxu0 0.0
    %2190 = vmatprep.subr.mxu0 0.0
    %2191 = vmatpush1.msra.mxu0 0.0
    %2192 = vmatprep.subr.mxu0 0.0
    %2193 = vmatpush1.msra.mxu0 0.0
    %2194 = vmatprep.subr.mxu0 0.0
    %2195 = vmatpush1.msra.mxu0 0.0
    %2196 = vmatprep.subr.mxu0 0.0
    %2197 = vmatpush1.msra.mxu0 0.0
    %2198 = vmatprep.mubr.f32.mxu0 0.0
    %2199 = vmatmul.mubr.f32.gmra.mrb[0].mxu0 %v2129
    %v2200 = vpop.f32.mrb[0].mxu0
    %v2201 = vadd.f32 %v2126, %v2200
    %v2202 = vpop.f32.mrb[0].mxu0
    %2203 = vmatprep.mubr.f32.mxu0 0.0
    %2204 = vmatmul.mubr.f32.gmra.mrb[0].mxu0 %v2132
    %v2205 = vpop.f32.mrb[0].mxu0
    %v2206 = vadd.f32 %v2126, %v2205
    %v2207 = vpop.f32.mrb[0].mxu0
    %2208 = vdwg.mxu0
    %v2209 = vadd.f32 %v1343, %v2201
    %v2210 = vadd.f32 %v1344, %v2206
    %s2211 = scalar_lea.vmem %s9, 1
    %v2212 = vld [vmem:[%s2211] sm:$0x1]
    %s2213 = scalar_lea.vmem %s10, 1
    %v2214 = vld [vmem:[%s2213] sm:$0x1]
    %v2215 = vsel %vm180, %v2209, 0.0
    %2216 = vadd.xlane.f32.xlu0 %v2215
    %v2217 = vpop.xlane.xlu0 %2216
    %v2218 = vsel %vm180, %v2210, 0.0
    %2219 = vadd.xlane.f32.xlu0 %v2218
    %v2220 = vpop.xlane.xlu0 %2219
    %v2221 = vmul.f32 %v2217, %v1054
    %v2222 = vmul.f32 %v2220, %v1054
    %v2223 = vsub.f32 %v2209, %v2221
    %v2224 = vsub.f32 %v2210, %v2222
    %v2225 = vmul.f32 %v2223, %v2223
    %v2226 = vmul.f32 %v2224, %v2224
    %v2227 = vsel %vm180, %v2225, 0.0
    %2228 = vadd.xlane.f32.xlu0 %v2227
    %v2229 = vpop.xlane.xlu0 %2228
    %v2230 = vsel %vm180, %v2226, 0.0
    %2231 = vadd.xlane.f32.xlu0 %v2230
    %v2232 = vpop.xlane.xlu0 %2231
    %v2233 = vmul.f32 %v2229, %v1054
    %v2234 = vmul.f32 %v2232, %v1054
    %v2235 = vadd.f32 %v2233, 1e-12
    %v2236 = vadd.f32 %v2234, 1e-12
    %v2237 = vrsqrt.pop %v2235
    %v2238 = vrsqrt.pop %v2236
    %v2239 = vmul.f32 %v2223, %v2237
    %v2240 = vmul.f32 %v2224, %v2238
    %v2242 = vlaneseq
    %v2243 = vshrl.u32 %v2242, 7
    %v2244 = vsub.s32 0, %v2243
    %v2245 = vrot.slane %v2212, %v2244
    %v2247 = vmul.f32 %v2239, %v2245
    %v2248 = vmul.f32 %v2240, %v2245
    %v2250 = vlaneseq
    %v2251 = vshrl.u32 %v2250, 7
    %v2252 = vsub.s32 0, %v2251
    %v2253 = vrot.slane %v2214, %v2252
    %v2255 = vadd.f32 %v2247, %v2253
    %v2256 = vadd.f32 %v2248, %v2253
    %s2257 = scalar_lea.vmem [#allocation12], 32
    %v2258 = vld [vmem:[%s2257] sm:$0xff]
    %v2259 = vld [vmem:[%s2257 + $0x8] sm:$0xff]
    %v2260 = vld [vmem:[%s2257 + $0x10] sm:$0xff]
    %v2261 = vld [vmem:[%s2257 + $0x18] sm:$0xff]
    %s2262 = scalar_lea.vmem %s12, 1
    %v2263 = vld [vmem:[%s2262] sm:$0x1]
    %v2265 = vlaneseq
    %v2266 = vshrl.u32 %v2265, 7
    %v2267 = vsub.s32 0, %v2266
    %v2268 = vrot.slane %v2263, %v2267
    %v2271 = vsel %vm180, %v2255, 0
    %v2274 = vsel %vm180, %v2256, 0
    %2276 = vmatprep.subr.mxu0 0.0
    %2277 = vmatpush1.msra.mxu0 %v2258
    %2278 = vmatprep.subr.mxu0 0.0
    %2279 = vmatpush1.msra.mxu0 %v2259
    %2280 = vmatprep.subr.mxu0 0.0
    %2281 = vmatpush1.msra.mxu0 %v2260
    %2282 = vmatprep.subr.mxu0 0.0
    %2283 = vmatpush1.msra.mxu0 %v2261
    %2284 = vmatprep.subr.mxu0 0.0
    %2285 = vmatpush1.msra.mxu0 0.0
    %2286 = vmatprep.subr.mxu0 0.0
    %2287 = vmatpush1.msra.mxu0 0.0
    %2288 = vmatprep.subr.mxu0 0.0
    %2289 = vmatpush1.msra.mxu0 0.0
    %2290 = vmatprep.subr.mxu0 0.0
    %2291 = vmatpush1.msra.mxu0 0.0
    %2292 = vmatprep.subr.mxu0 0.0
    %2293 = vmatpush1.msra.mxu0 0.0
    %2294 = vmatprep.subr.mxu0 0.0
    %2295 = vmatpush1.msra.mxu0 0.0
    %2296 = vmatprep.subr.mxu0 0.0
    %2297 = vmatpush1.msra.mxu0 0.0
    %2298 = vmatprep.subr.mxu0 0.0
    %2299 = vmatpush1.msra.mxu0 0.0
    %2300 = vmatprep.subr.mxu0 0.0
    %2301 = vmatpush1.msra.mxu0 0.0
    %2302 = vmatprep.subr.mxu0 0.0
    %2303 = vmatpush1.msra.mxu0 0.0
    %2304 = vmatprep.subr.mxu0 0.0
    %2305 = vmatpush1.msra.mxu0 0.0
    %2306 = vmatprep.subr.mxu0 0.0
    %2307 = vmatpush1.msra.mxu0 0.0
    %2308 = vmatprep.subr.mxu0 0.0
    %2309 = vmatpush1.msra.mxu0 0.0
    %2310 = vmatprep.subr.mxu0 0.0
    %2311 = vmatpush1.msra.mxu0 0.0
    %2312 = vmatprep.subr.mxu0 0.0
    %2313 = vmatpush1.msra.mxu0 0.0
    %2314 = vmatprep.subr.mxu0 0.0
    %2315 = vmatpush1.msra.mxu0 0.0
    %2316 = vmatprep.subr.mxu0 0.0
    %2317 = vmatpush1.msra.mxu0 0.0
    %2318 = vmatprep.subr.mxu0 0.0
    %2319 = vmatpush1.msra.mxu0 0.0
    %2320 = vmatprep.subr.mxu0 0.0
    %2321 = vmatpush1.msra.mxu0 0.0
    %2322 = vmatprep.subr.mxu0 0.0
    %2323 = vmatpush1.msra.mxu0 0.0
    %2324 = vmatprep.subr.mxu0 0.0
    %2325 = vmatpush1.msra.mxu0 0.0
    %2326 = vmatprep.subr.mxu0 0.0
    %2327 = vmatpush1.msra.mxu0 0.0
    %2328 = vmatprep.subr.mxu0 0.0
    %2329 = vmatpush1.msra.mxu0 0.0
    %2330 = vmatprep.subr.mxu0 0.0
    %2331 = vmatpush1.msra.mxu0 0.0
    %2332 = vmatprep.subr.mxu0 0.0
    %2333 = vmatpush1.msra.mxu0 0.0
    %2334 = vmatprep.subr.mxu0 0.0
    %2335 = vmatpush1.msra.mxu0 0.0
    %2336 = vmatprep.subr.mxu0 0.0
    %2337 = vmatpush1.msra.mxu0 0.0
    %2338 = vmatprep.subr.mxu0 0.0
    %2339 = vmatpush1.msra.mxu0 0.0
    %2340 = vmatprep.mubr.f32.mxu0 0.0
    %2341 = vmatmul.mubr.f32.gmra.mrb[0].mxu0 %v2271
    %v2342 = vpop.f32.mrb[0].mxu0
    %v2343 = vadd.f32 %v2268, %v2342
    %v2344 = vpop.f32.mrb[0].mxu0
    %2345 = vmatprep.mubr.f32.mxu0 0.0
    %2346 = vmatmul.mubr.f32.gmra.mrb[0].mxu0 %v2274
    %v2347 = vpop.f32.mrb[0].mxu0
    %v2348 = vadd.f32 %v2268, %v2347
    %v2349 = vpop.f32.mrb[0].mxu0
    %2350 = vdwg.mxu0
    %v2351 = vmul.f32 %v2343, %v2343
    %v2352 = vmul.f32 %v2348, %v2348
    %v2353 = vmul.f32 %v2343, %v2351
    %v2354 = vmul.f32 %v2348, %v2352
    %v2355 = vmul.f32 %v2353, 0.044715
    %v2356 = vmul.f32 %v2354, 0.044715
    %v2357 = vadd.f32 %v2343, %v2355
    %v2358 = vadd.f32 %v2348, %v2356
    %v2359 = vmul.f32 %v2357, 0.7978846
    %v2360 = vmul.f32 %v2358, 0.7978846
    %v2361 = vtanh.pop %v2359
    %v2362 = vtanh.pop %v2360
    %v2363 = vadd.f32 %v2361, 1.0
    %v2364 = vadd.f32 %v2362, 1.0
    %v2365 = vmul.f32 %v2363, 0.5
    %v2366 = vmul.f32 %v2364, 0.5
    %v2367 = vmul.f32 %v2343, %v2365
    %v2368 = vmul.f32 %v2348, %v2366
    %s2369 = scalar_lea.vmem %s13, 128
    %v2370 = vld [vmem:[%s2369] sm:$0xff]
    %v2371 = vld [vmem:[%s2369 + $0x8] sm:$0xff]
    %v2372 = vld [vmem:[%s2369 + $0x10] sm:$0xff]
    %v2373 = vld [vmem:[%s2369 + $0x18] sm:$0xff]
    %v2374 = vld [vmem:[%s2369 + $0x20] sm:$0xff]
    %v2375 = vld [vmem:[%s2369 + $0x28] sm:$0xff]
    %v2376 = vld [vmem:[%s2369 + $0x30] sm:$0xff]
    %v2377 = vld [vmem:[%s2369 + $0x38] sm:$0xff]
    %v2378 = vld [vmem:[%s2369 + $0x40] sm:$0xff]
    %v2379 = vld [vmem:[%s2369 + $0x48] sm:$0xff]
    %v2380 = vld [vmem:[%s2369 + $0x50] sm:$0xff]
    %v2381 = vld [vmem:[%s2369 + $0x58] sm:$0xff]
    %v2382 = vld [vmem:[%s2369 + $0x60] sm:$0xff]
    %v2383 = vld [vmem:[%s2369 + $0x68] sm:$0xff]
    %v2384 = vld [vmem:[%s2369 + $0x70] sm:$0xff]
    %v2385 = vld [vmem:[%s2369 + $0x78] sm:$0xff]
    %s2386 = scalar_lea.vmem %s14, 1
    %v2387 = vld [vmem:[%s2386] sm:$0x1]
    %v2389 = vlaneseq
    %v2390 = vshrl.u32 %v2389, 7
    %v2391 = vsub.s32 0, %v2390
    %v2392 = vrot.slane %v2387, %v2391
    %2394 = vmatprep.subr.mxu0 0.0
    %2395 = vmatpush1.msra.mxu0 %v2370
    %2396 = vmatprep.subr.mxu0 0.0
    %2397 = vmatpush1.msra.mxu0 %v2371
    %2398 = vmatprep.subr.mxu0 0.0
    %2399 = vmatpush1.msra.mxu0 %v2372
    %2400 = vmatprep.subr.mxu0 0.0
    %2401 = vmatpush1.msra.mxu0 %v2373
    %2402 = vmatprep.subr.mxu0 0.0
    %2403 = vmatpush1.msra.mxu0 %v2374
    %2404 = vmatprep.subr.mxu0 0.0
    %2405 = vmatpush1.msra.mxu0 %v2375
    %2406 = vmatprep.subr.mxu0 0.0
    %2407 = vmatpush1.msra.mxu0 %v2376
    %2408 = vmatprep.subr.mxu0 0.0
    %2409 = vmatpush1.msra.mxu0 %v2377
    %2410 = vmatprep.subr.mxu0 0.0
    %2411 = vmatpush1.msra.mxu0 %v2378
    %2412 = vmatprep.subr.mxu0 0.0
    %2413 = vmatpush1.msra.mxu0 %v2379
    %2414 = vmatprep.subr.mxu0 0.0
    %2415 = vmatpush1.msra.mxu0 %v2380
    %2416 = vmatprep.subr.mxu0 0.0
    %2417 = vmatpush1.msra.mxu0 %v2381
    %2418 = vmatprep.subr.mxu0 0.0
    %2419 = vmatpush1.msra.mxu0 %v2382
    %2420 = vmatprep.subr.mxu0 0.0
    %2421 = vmatpush1.msra.mxu0 %v2383
    %2422 = vmatprep.subr.mxu0 0.0
    %2423 = vmatpush1.msra.mxu0 %v2384
    %2424 = vmatprep.subr.mxu0 0.0
    %2425 = vmatpush1.msra.mxu0 %v2385
    %2426 = vmatprep.subr.mxu0 0.0
    %2427 = vmatpush1.msra.mxu0 0.0
    %2428 = vmatprep.subr.mxu0 0.0
    %2429 = vmatpush1.msra.mxu0 0.0
    %2430 = vmatprep.subr.mxu0 0.0
    %2431 = vmatpush1.msra.mxu0 0.0
    %2432 = vmatprep.subr.mxu0 0.0
    %2433 = vmatpush1.msra.mxu0 0.0
    %2434 = vmatprep.subr.mxu0 0.0
    %2435 = vmatpush1.msra.mxu0 0.0
    %2436 = vmatprep.subr.mxu0 0.0
    %2437 = vmatpush1.msra.mxu0 0.0
    %2438 = vmatprep.subr.mxu0 0.0
    %2439 = vmatpush1.msra.mxu0 0.0
    %2440 = vmatprep.subr.mxu0 0.0
    %2441 = vmatpush1.msra.mxu0 0.0
    %2442 = vmatprep.subr.mxu0 0.0
    %2443 = vmatpush1.msra.mxu0 0.0
    %2444 = vmatprep.subr.mxu0 0.0
    %2445 = vmatpush1.msra.mxu0 0.0
    %2446 = vmatprep.subr.mxu0 0.0
    %2447 = vmatpush1.msra.mxu0 0.0
    %2448 = vmatprep.subr.mxu0 0.0
    %2449 = vmatpush1.msra.mxu0 0.0
    %2450 = vmatprep.subr.mxu0 0.0
    %2451 = vmatpush1.msra.mxu0 0.0
    %2452 = vmatprep.subr.mxu0 0.0
    %2453 = vmatpush1.msra.mxu0 0.0
    %2454 = vmatprep.subr.mxu0 0.0
    %2455 = vmatpush1.msra.mxu0 0.0
    %2456 = vmatprep.subr.mxu0 0.0
    %2457 = vmatpush1.msra.mxu0 0.0
    %2458 = vmatprep.mubr.f32.mxu0 0.0
    %2459 = vmatmul.mubr.f32.gmra.mrb[0].mxu0 %v2367
    %v2460 = vpop.f32.mrb[0].mxu0
    %v2461 = vadd.f32 %v2392, %v2460
    %v2462 = vpop.f32.mrb[0].mxu0
    %2463 = vmatprep.mubr.f32.mxu0 0.0
    %2464 = vmatmul.mubr.f32.gmra.mrb[0].mxu0 %v2368
    %v2465 = vpop.f32.mrb[0].mxu0
    %v2466 = vadd.f32 %v2392, %v2465
    %v2467 = vpop.f32.mrb[0].mxu0
    %2468 = vdwg.mxu0
    %v2469 = vadd.f32 %v2255, %v2461
    %v2470 = vadd.f32 %v2256, %v2466
    %s2471 = scalar_lea.vmem %s15, 1
    %v2472 = vld [vmem:[%s2471] sm:$0x1]
    %s2473 = scalar_lea.vmem %s16, 1
    %v2474 = vld [vmem:[%s2473] sm:$0x1]
    %v2475 = vsel %vm180, %v2469, 0.0
    %2476 = vadd.xlane.f32.xlu0 %v2475
    %v2477 = vpop.xlane.xlu0 %2476
    %v2478 = vsel %vm180, %v2470, 0.0
    %2479 = vadd.xlane.f32.xlu0 %v2478
    %v2480 = vpop.xlane.xlu0 %2479
    %v2481 = vmul.f32 %v2477, %v1054
    %v2482 = vmul.f32 %v2480, %v1054
    %v2483 = vsub.f32 %v2469, %v2481
    %v2484 = vsub.f32 %v2470, %v2482
    %v2485 = vmul.f32 %v2483, %v2483
    %v2486 = vmul.f32 %v2484, %v2484
    %v2487 = vsel %vm180, %v2485, 0.0
    %2488 = vadd.xlane.f32.xlu0 %v2487
    %v2489 = vpop.xlane.xlu0 %2488
    %v2490 = vsel %vm180, %v2486, 0.0
    %2491 = vadd.xlane.f32.xlu0 %v2490
    %v2492 = vpop.xlane.xlu0 %2491
    %v2493 = vmul.f32 %v2489, %v1054
    %v2494 = vmul.f32 %v2492, %v1054
    %v2495 = vadd.f32 %v2493, 1e-12
    %v2496 = vadd.f32 %v2494, 1e-12
    %v2497 = vrsqrt.pop %v2495
    %v2498 = vrsqrt.pop %v2496
    %v2499 = vmul.f32 %v2483, %v2497
    %v2500 = vmul.f32 %v2484, %v2498
    %v2502 = vlaneseq
    %v2503 = vshrl.u32 %v2502, 7
    %v2504 = vsub.s32 0, %v2503
    %v2505 = vrot.slane %v2472, %v2504
    %v2507 = vmul.f32 %v2499, %v2505
    %v2508 = vmul.f32 %v2500, %v2505
    %v2510 = vlaneseq
    %v2511 = vshrl.u32 %v2510, 7
    %v2512 = vsub.s32 0, %v2511
    %v2513 = vrot.slane %v2474, %v2512
    %v2515 = vadd.f32 %v2507, %v2513
    %v2516 = vadd.f32 %v2508, %v2513
    %2517 = vst.msk [vmem:[#allocation2] sm:$0xff] %vm180, %v2515
    %2518 = vst.msk [vmem:[#allocation2 + $0x8] sm:$0xff] %vm180, %v2516
    %s2519 = sld [smem:[#allocation3]]
    %s2520 = sld [smem:[#allocation7]]
    %s2521 = scalar_lea.vmem [#allocation2], %s2519
    %v2522 = vld [vmem:[%s2521] sm:$0x1]
    %s2523 = scalar_lea.vmem [#allocation2], %s2520
    %v2524 = vld [vmem:[%s2523] sm:$0x1]
    %2526 = vrot.lane.b32.xlu0 %v2524, 32
    %v2527 = vpop.permute.xlu0 %2526
    %v2529 = vsel %vm180, %v2522, %v2527
    %s2530 = sld [smem:[#allocation3 + $0x1]]
    %s2531 = sadd.s32 %s2530, 8
    %s2532 = sld [smem:[#allocation7 + $0x1]]
    %s2533 = sadd.s32 %s2532, 8
    %s2534 = scalar_lea.vmem [#allocation2], %s2531
    %v2535 = vld [vmem:[%s2534] sm:$0x1]
    %s2536 = scalar_lea.vmem [#allocation2], %s2533
    %v2537 = vld [vmem:[%s2536] sm:$0x1]
    %2539 = vrot.lane.b32.xlu0 %v2537, 32
    %v2540 = vpop.permute.xlu0 %2539
    %v2542 = vsel %vm180, %v2535, %v2540
    %v2544 = vrot.slane %v2542, 7
    %vm2546 = vcmask 1040384
    %v2547 = vsel %vm2546, %v2529, %v2544
    %v2548 = vld [vmem:[#allocation13] sm:$0xff]
    %v2549 = vld [vmem:[#allocation13 + $0x8] sm:$0xff]
    %v2550 = vld [vmem:[#allocation13 + $0x10] sm:$0xff]
    %v2551 = vld [vmem:[#allocation13 + $0x18] sm:$0xff]
    %v2552 = vld [vmem:[#allocation13 + $0x20] sm:$0xff]
    %v2553 = vld [vmem:[#allocation13 + $0x28] sm:$0xff]
    %v2554 = vld [vmem:[#allocation13 + $0x30] sm:$0xff]
    %v2555 = vld [vmem:[#allocation13 + $0x38] sm:$0xff]
    %v2556 = vld [vmem:[%s18] sm:$0x1]
    %v2558 = vlaneseq
    %v2559 = vshrl.u32 %v2558, 7
    %v2560 = vsub.s32 0, %v2559
    %v2561 = vrot.slane %v2556, %v2560
    %vm2563 = vcmask 523264
    %v2565 = vsel %vm2563, %v2547, 0
    %2567 = vmatprep.subr.mxu0 0.0
    %2568 = vmatpush1.msra.mxu0 %v2548
    %2569 = vmatprep.subr.mxu0 0.0
    %2570 = vmatpush1.msra.mxu0 %v2549
    %2571 = vmatprep.subr.mxu0 0.0
    %2572 = vmatpush1.msra.mxu0 %v2550
    %2573 = vmatprep.subr.mxu0 0.0
    %2574 = vmatpush1.msra.mxu0 %v2551
    %2575 = vmatprep.subr.mxu0 0.0
    %2576 = vmatpush1.msra.mxu0 %v2552
    %2577 = vmatprep.subr.mxu0 0.0
    %2578 = vmatpush1.msra.mxu0 %v2553
    %2579 = vmatprep.subr.mxu0 0.0
    %2580 = vmatpush1.msra.mxu0 %v2554
    %2581 = vmatprep.subr.mxu0 0.0
    %2582 = vmatpush1.msra.mxu0 %v2555
    %2583 = vmatprep.subr.mxu0 0.0
    %2584 = vmatpush1.msra.mxu0 0.0
    %2585 = vmatprep.subr.mxu0 0.0
    %2586 = vmatpush1.msra.mxu0 0.0
    %2587 = vmatprep.subr.mxu0 0.0
    %2588 = vmatpush1.msra.mxu0 0.0
    %2589 = vmatprep.subr.mxu0 0.0
    %2590 = vmatpush1.msra.mxu0 0.0
    %2591 = vmatprep.subr.mxu0 0.0
    %2592 = vmatpush1.msra.mxu0 0.0
    %2593 = vmatprep.subr.mxu0 0.0
    %2594 = vmatpush1.msra.mxu0 0.0
    %2595 = vmatprep.subr.mxu0 0.0
    %2596 = vmatpush1.msra.mxu0 0.0
    %2597 = vmatprep.subr.mxu0 0.0
    %2598 = vmatpush1.msra.mxu0 0.0
    %2599 = vmatprep.subr.mxu0 0.0
    %2600 = vmatpush1.msra.mxu0 0.0
    %2601 = vmatprep.subr.mxu0 0.0
    %2602 = vmatpush1.msra.mxu0 0.0
    %2603 = vmatprep.subr.mxu0 0.0
    %2604 = vmatpush1.msra.mxu0 0.0
    %2605 = vmatprep.subr.mxu0 0.0
    %2606 = vmatpush1.msra.mxu0 0.0
    %2607 = vmatprep.subr.mxu0 0.0
    %2608 = vmatpush1.msra.mxu0 0.0
    %2609 = vmatprep.subr.mxu0 0.0
    %2610 = vmatpush1.msra.mxu0 0.0
    %2611 = vmatprep.subr.mxu0 0.0
    %2612 = vmatpush1.msra.mxu0 0.0
    %2613 = vmatprep.subr.mxu0 0.0
    %2614 = vmatpush1.msra.mxu0 0.0
    %2615 = vmatprep.subr.mxu0 0.0
    %2616 = vmatpush1.msra.mxu0 0.0
    %2617 = vmatprep.subr.mxu0 0.0
    %2618 = vmatpush1.msra.mxu0 0.0
    %2619 = vmatprep.subr.mxu0 0.0
    %2620 = vmatpush1.msra.mxu0 0.0
    %2621 = vmatprep.subr.mxu0 0.0
    %2622 = vmatpush1.msra.mxu0 0.0
    %2623 = vmatprep.subr.mxu0 0.0
    %2624 = vmatpush1.msra.mxu0 0.0
    %2625 = vmatprep.subr.mxu0 0.0
    %2626 = vmatpush1.msra.mxu0 0.0
    %2627 = vmatprep.subr.mxu0 0.0
    %2628 = vmatpush1.msra.mxu0 0.0
    %2629 = vmatprep.subr.mxu0 0.0
    %2630 = vmatpush1.msra.mxu0 0.0
    %2631 = vmatprep.mubr.f32.mxu0 0.0
    %2632 = vmatmul.mubr.f32.gmra.mrb[0].mxu0 %v2565
    %v2633 = vpop.f32.mrb[0].mxu0
    %v2634 = vadd.f32 %v2561, %v2633
    %v2635 = vpop.f32.mrb[0].mxu0
    %2636 = vdwg.mxu0
    %v2637 = vmax.f32 %v2634, 0.0
    %v2638 = vld [vmem:[#allocation15] sm:$0xff]
    %v2639 = vld [vmem:[#allocation15 + $0x8] sm:$0xff]
    %v2640 = vld [vmem:[#allocation15 + $0x10] sm:$0xff]
    %v2641 = vld [vmem:[#allocation15 + $0x18] sm:$0xff]
    %v2642 = vld [vmem:[%s20] sm:$0x1]
    %v2644 = vlaneseq
    %v2645 = vshrl.u32 %v2644, 7
    %v2646 = vsub.s32 0, %v2645
    %v2647 = vrot.slane %v2642, %v2646
    %v2650 = vsel %vm180, %v2637, 0
    %2652 = vmatprep.subr.mxu0 0.0
    %2653 = vmatpush1.msra.mxu0 %v2638
    %2654 = vmatprep.subr.mxu0 0.0
    %2655 = vmatpush1.msra.mxu0 %v2639
    %2656 = vmatprep.subr.mxu0 0.0
    %2657 = vmatpush1.msra.mxu0 %v2640
    %2658 = vmatprep.subr.mxu0 0.0
    %2659 = vmatpush1.msra.mxu0 %v2641
    %2660 = vmatprep.subr.mxu0 0.0
    %2661 = vmatpush1.msra.mxu0 0.0
    %2662 = vmatprep.subr.mxu0 0.0
    %2663 = vmatpush1.msra.mxu0 0.0
    %2664 = vmatprep.subr.mxu0 0.0
    %2665 = vmatpush1.msra.mxu0 0.0
    %2666 = vmatprep.subr.mxu0 0.0
    %2667 = vmatpush1.msra.mxu0 0.0
    %2668 = vmatprep.subr.mxu0 0.0
    %2669 = vmatpush1.msra.mxu0 0.0
    %2670 = vmatprep.subr.mxu0 0.0
    %2671 = vmatpush1.msra.mxu0 0.0
    %2672 = vmatprep.subr.mxu0 0.0
    %2673 = vmatpush1.msra.mxu0 0.0
    %2674 = vmatprep.subr.mxu0 0.0
    %2675 = vmatpush1.msra.mxu0 0.0
    %2676 = vmatprep.subr.mxu0 0.0
    %2677 = vmatpush1.msra.mxu0 0.0
    %2678 = vmatprep.subr.mxu0 0.0
    %2679 = vmatpush1.msra.mxu0 0.0
    %2680 = vmatprep.subr.mxu0 0.0
    %2681 = vmatpush1.msra.mxu0 0.0
    %2682 = vmatprep.subr.mxu0 0.0
    %2683 = vmatpush1.msra.mxu0 0.0
    %2684 = vmatprep.subr.mxu0 0.0
    %2685 = vmatpush1.msra.mxu0 0.0
    %2686 = vmatprep.subr.mxu0 0.0
    %2687 = vmatpush1.msra.mxu0 0.0
    %2688 = vmatprep.subr.mxu0 0.0
    %2689 = vmatpush1.msra.mxu0 0.0
    %2690 = vmatprep.subr.mxu0 0.0
    %2691 = vmatpush1.msra.mxu0 0.0
    %2692 = vmatprep.subr.mxu0 0.0
    %2693 = vmatpush1.msra.mxu0 0.0
    %2694 = vmatprep.subr.mxu0 0.0
    %2695 = vmatpush1.msra.mxu0 0.0
    %2696 = vmatprep.subr.mxu0 0.0
    %2697 = vmatpush1.msra.mxu0 0.0
    %2698 = vmatprep.subr.mxu0 0.0
    %2699 = vmatpush1.msra.mxu0 0.0
    %2700 = vmatprep.subr.mxu0 0.0
    %2701 = vmatpush1.msra.mxu0 0.0
    %2702 = vmatprep.subr.mxu0 0.0
    %2703 = vmatpush1.msra.mxu0 0.0
    %2704 = vmatprep.subr.mxu0 0.0
    %2705 = vmatpush1.msra.mxu0 0.0
    %2706 = vmatprep.subr.mxu0 0.0
    %2707 = vmatpush1.msra.mxu0 0.0
    %2708 = vmatprep.subr.mxu0 0.0
    %2709 = vmatpush1.msra.mxu0 0.0
    %2710 = vmatprep.subr.mxu0 0.0
    %2711 = vmatpush1.msra.mxu0 0.0
    %2712 = vmatprep.subr.mxu0 0.0
    %2713 = vmatpush1.msra.mxu0 0.0
    %2714 = vmatprep.subr.mxu0 0.0
    %2715 = vmatpush1.msra.mxu0 0.0
    %2716 = vmatprep.mubr.f32.mxu0 0.0
    %2717 = vmatmul.mubr.f32.gmra.mrb[0].mxu0 %v2650
    %v2718 = vpop.f32.mrb[0].mxu0
    %v2719 = vadd.f32 %v2647, %v2718
    %v2720 = vpop.f32.mrb[0].mxu0
    %2721 = vdwg.mxu0
    %vm2722 = vcmask 9216
    %2723 = vst.msk [vmem:[#allocation16] sm:$0x3] %vm2722, %v2719
    %v2724 = vsel %vm2722, %v2719, -inf
    %2725 = vmax.xlane.f32.xlu0 %v2724
    %v2726 = vpop.xlane.xlu0 %2725
    %v2727 = vsub.f32 %v2719, %v2726
    %v2728 = vmul.f32 %v2727, 1.442695
    %v2729 = vpow.pop %v2728
    %v2730 = vsel %vm2722, %v2729, 0.0
    %2731 = vadd.xlane.f32.xlu0 %v2730
    %v2732 = vpop.xlane.xlu0 %2731
    %v2733 = vlog2.pop %v2732
    %v2734 = vmul.f32 %v2733, 0.6931472
    %v2735 = vadd.f32 %v2726, %v2734
    %v2736 = vsub.f32 %v2719, %v2735
    %v2737 = vlaneseq
    %v2738 = vand.u32 %v2737, 127
    %v2739 = vld [vmem:[%s4] sm:$0x3]
    %2740 = vset.pattern.permute.xlu0 0
    %2741 = vperm.xlu0 %2740, %v2739
    %v2742 = vpop.permute.xlu0 %2741
    %vm2743 = vcmp.eq.s32.totalorder %v2738, %v2742
    %v2744 = vsel %vm2743, 1, 0
    %v2745 = vcvt.s32.f32 %v2744
    %v2746 = vmul.f32 %v2745, %v2736
    %v2747 = vsel %vm2722, %v2746, 0.0
    %2748 = vadd.xlane.f32.xlu0 %v2747
    %v2749 = vpop.xlane.xlu0 %2748
    %v2750 = vsub.f32 0.0, %v2749
    %vm2751 = vcmask 1041408
    %v2752 = vsel %vm2751, %v2750, 0.0
    %v2753 = vrot.slane %v2752, 4
    %v2754 = vadd.f32 %v2752, %v2753
    %v2755 = vrot.slane %v2754, 2
    %v2756 = vadd.f32 %v2754, %v2755
    %v2757 = vrot.slane %v2756, 1
    %v2758 = vadd.f32 %v2756, %v2757
    %v2759 = vrcp.pop 2.0
    %v2760 = vmul.f32 %v2758, %v2759
    %vm2761 = vcmask 0
    %2762 = vst.msk [vmem:[#allocation17] sm:$0x1] %vm2761, %v2760
    // Predicated region
    $region114: #{base_transformer_forward.1} parent=1 // pred_check
      _
    $region115: #{base_transformer_forward.1} parent=1 // pred_check_branch
      %2764 = sbr.rel (0) target = $region117
    $region116: #{base_transformer_forward.1} parent=1 // pred_region
      %s2766 = ssub.s32 32, 32
      %2767 = vsyncadd [#allocation5], %s2766
      %s2769 = sshll.u32 [#allocation16], 4
      %s2770 = int_to_ptr.vmem [resolvable:$true] %s2769
      %2772 = dma.vmem_to_hbm [thread:$0]  %s2770, 32, %s21, [#allocation5]
    $region117: #{base_transformer_forward.1} parent=1 // pred_fallthru
      _
    // Predicated region
    $region118: #{base_transformer_forward.1} parent=1 // pred_check
      _
    $region119: #{base_transformer_forward.1} parent=1 // pred_check_branch
      %2774 = sbr.rel (0) target = $region121
    $region120: #{base_transformer_forward.1} parent=1 // pred_region
      %s2776 = ssub.s32 16, 16
      %2777 = vsyncadd [#allocation18], %s2776
      %s2779 = sshll.u32 [#allocation17], 4
      %s2780 = int_to_ptr.vmem [resolvable:$true] %s2779
      %2782 = dma.vmem_to_hbm [thread:$0]  %s2780, 16, %s22, [#allocation18]
    $region121: #{base_transformer_forward.1} parent=1 // pred_fallthru
      _
    // Predicated region
    $region122: #{base_transformer_forward.1} parent=1 // pred_check
      _
    $region123: #{base_transformer_forward.1} parent=1 // pred_check_branch
      %2784 = sbr.rel (0) target = $region125
    $region124: #{base_transformer_forward.1} parent=1 // pred_region
      %2785 = dma.done [#allocation5], 32
    $region125: #{base_transformer_forward.1} parent=1 // pred_fallthru
      _
    // Predicated region
    $region126: #{base_transformer_forward.1} parent=1 // pred_check
      _
    $region127: #{base_transformer_forward.1} parent=1 // pred_check_branch
      %2787 = sbr.rel (0) target = $region129
    $region128: #{base_transformer_forward.1} parent=1 // pred_region
      %2788 = dma.done [#allocation18], 16
    $region129: #{base_transformer_forward.1} parent=1 // pred_fallthru
      _
    %2789 = vsyncpa [#allocation4], 1
    %2790 = vsyncpa [#allocation11], 1
    %2791 = vsyncpa [#allocation14], 1
    %2792 = vsyncpa [#allocation5], 1
    %2793 = vsyncpa [#allocation18], 1
    %2794 = vsyncpa [#allocation6], 1
    %2795 = vsyncpa [#allocation8], 1

</llo_original>
